<compile_context>
chip_gen: v6e
topology: v6e:2x2x1
jax: 0.10.0
libtpu: 0.0.40
codegen_flags: <defaults>
</compile_context>

<pallas_src>
import functools

import jax
import jax.numpy as jnp
from jax import lax
from jax.experimental import pallas as pl
from jax.experimental.pallas import tpu as pltpu


def _round_up(x, m):
    return ((x + m - 1) // m) * m


def _cast(x, dt):
    return x if x.dtype == dt else x.astype(dt)


# -----------------------------------------------------------------------------
# Kernel
# -----------------------------------------------------------------------------
def _head_kernel(*refs, inner_dim, input_dim, inner_pad, d_pad, num_classes,
                 matmul_dtype, gather_in_kernel):
    f32 = jnp.float32
    md = matmul_dtype

    if gather_in_kernel:
        (rel_ids_ref, heads_ref, tails_ref, rel_emb_ref,
         wt_ref, bt_ref, w_th_ref, w_tt_ref, w_rl_ref, b_res_ref,
         wd_h_ref, wd_t_ref, bd_ref, out_ref) = refs
    else:
        (rel_e_ref, heads_ref, tails_ref,
         wt_ref, bt_ref, w_th_ref, w_tt_ref, w_rl_ref, b_res_ref,
         wd_h_ref, wd_t_ref, bd_ref, out_ref) = refs

    heads_in = heads_ref[...]                      # [T, D] native stream dtype
    tails_in = tails_ref[...]
    heads = _cast(heads_in, f32)
    tails = _cast(tails_in, f32)
    t = heads_in.shape[0]

    # ---- relation embedding rows ----
    if gather_in_kernel:
        # Small vocab only: one-hot matmul in matmul_dtype (exact row selection
        # when matmul_dtype is f32). Large vocabularies use the streamed
        # wrapper-side gather instead, so no [T, C] one-hot ever lands in VMEM.
        rel_ids = rel_ids_ref[...]                                  # [T, 1] i32
        iota = lax.broadcasted_iota(jnp.int32, (t, num_classes), 1)
        one_hot = (iota == rel_ids).astype(md)
        rel_e = jnp.dot(one_hot, _cast(rel_emb_ref[...], md),
                        preferred_element_type=f32)                 # [T, inner]
    else:
        rel_e = _cast(rel_e_ref[...], f32)                          # [T, inner]

    # ---- transMatrix on heads and tails: two dots, shared RHS, no concat ----
    wt = wt_ref[...]
    bt = bt_ref[...]
    th = jnp.dot(_cast(heads_in, md), wt, preferred_element_type=f32) + bt
    tt = jnp.dot(_cast(tails_in, md), wt, preferred_element_type=f32) + bt

    # ---- fused res_linear_{rel,head,tail}: K-split over (th | tt | rel_e),
    #      outputs fused along a 128-lane-aligned N axis [inner_pad|d_pad|d_pad]
    deltas = (jnp.dot(_cast(th, md), w_th_ref[...], preferred_element_type=f32)
              + jnp.dot(_cast(tt, md), w_tt_ref[...], preferred_element_type=f32)
              + jnp.dot(_cast(rel_e, md), w_rl_ref[...], preferred_element_type=f32)
              + b_res_ref[...])
    deltas = jnp.tanh(deltas)                                       # [T, n_fused]
    delta_rel = deltas[:, 0:inner_dim]
    delta_h = deltas[:, inner_pad:inner_pad + input_dim]
    delta_t = deltas[:, inner_pad + d_pad:inner_pad + d_pad + input_dim]

    rels_new = rel_e + delta_rel
    heads_new = heads + delta_h
    tails_new = tails + delta_t

    # ---- dense(cat([heads_new, tails_new], -1)) as a K-split matmul ----
    x = (jnp.dot(_cast(heads_new, md), wd_h_ref[...], preferred_element_type=f32)
         + jnp.dot(_cast(tails_new, md), wd_t_ref[...], preferred_element_type=f32)
         + bd_ref[...])
    x = jnp.tanh(x)                                                 # [T, inner]

    # Per-row dot product, stored lane-dense as a (1, b_tile) row.
    out_ref[...] = jnp.sum(rels_new * x, axis=-1)[None, :]


# -----------------------------------------------------------------------------
# Generation-aware sizing
# -----------------------------------------------------------------------------
def _vmem_limit_bytes():
    cap = 128 * 1024 * 1024
    try:
        cap = int(pltpu.get_tpu_info().vmem_capacity_bytes)
    except Exception:
        pass
    if cap >= 100 * 1024 * 1024:           # v5e / v6e class (128 MiB physical)
        return 96 * 1024 * 1024
    # v7x class (64 MiB physical): leave compiler-scratch headroom.
    return max(32 * 1024 * 1024, min(cap - 12 * 1024 * 1024, 52 * 1024 * 1024))


def _pick_b_tile(batch, *, per_row_bytes, weight_bytes, vmem_limit):
    b8 = _round_up(batch, 8)
    if b8 <= 128:
        return b8                          # single small tile
    budget = int(0.6 * vmem_limit) - weight_bytes
    max_rows = max(128, budget // max(per_row_bytes, 1))
    cap_tile = max(128, min(1024, (max_rows // 128) * 128))
    # >= 2 grid steps so the "parallel" batch axis can feed both v7x TensorCores.
    want = max(128, _round_up(pl.cdiv(batch, 2), 128))
    return min(cap_tile, want, _round_up(batch, 128))


# -----------------------------------------------------------------------------
# Wrapper
# -----------------------------------------------------------------------------
def binary_class_feat_integration_head(heads, tails, rels, params, *,
                                       matmul_dtype=None, b_tile=None,
                                       onehot_max_classes=128):
    """heads/tails: [B, input_dim] float; rels: [B] or [B, 1] int class ids.
    Returns scores [B, 1, 1] f32 (== torch.matmul(rels, x.unsqueeze(-1)))."""
    f32 = jnp.float32
    B, input_dim = heads.shape
    num_classes, inner_dim = params["rel_emb"].shape

    # Guard the fused-weight construction against silent param-shape drift.
    assert params["wt"].shape == (input_dim, inner_dim)
    assert params["wr"].shape == (3 * inner_dim, inner_dim)
    assert params["wh"].shape == (3 * inner_dim, input_dim)
    assert params["wtl"].shape == (3 * inner_dim, input_dim)
    assert params["wd"].shape == (2 * input_dim, inner_dim)

    if matmul_dtype is None:
        # bf16 operands only pay off once the contraction dims fill the MXU;
        # for small dims the casts are pure VALU overhead (worst on v5e).
        matmul_dtype = jnp.bfloat16 if max(input_dim, inner_dim) >= 256 else f32
    md = jnp.dtype(matmul_dtype)

    inner_pad = _round_up(inner_dim, 128)
    d_pad = _round_up(input_dim, 128)
    n_fused = inner_pad + 2 * d_pad

    # --- kernel-ready parameters (built from named params in one place) ------
    def _pad_cols(w, n):
        return jnp.pad(w, ((0, 0), (0, n - w.shape[1])))

    # Fused res_linear output columns: [rel | pad | head | pad | tail | pad],
    # K pre-split into the three pieces matching cat([th, tt, rel_e]).
    w_res_pieces = []
    for k in range(3):
        rows = slice(k * inner_dim, (k + 1) * inner_dim)
        w_res_pieces.append(jnp.concatenate(
            [_pad_cols(params["wr"][rows], inner_pad),
             _pad_cols(params["wh"][rows], d_pad),
             _pad_cols(params["wtl"][rows], d_pad)], axis=1).astype(md))
    b_res = jnp.concatenate(
        [_pad_cols(params["br"], inner_pad),
         _pad_cols(params["bh"], d_pad),
         _pad_cols(params["btl"], d_pad)], axis=1).astype(f32)

    wt = params["wt"].astype(md)
    bt = params["bt"].astype(f32)
    wd_h = params["wd"][:input_dim].astype(md)
    wd_t = params["wd"][input_dim:].astype(md)
    bd = params["bd"].astype(f32)

    gather_in_kernel = num_classes <= onehot_max_classes
    rel_ids = rels.reshape(B).astype(jnp.int32)
    if gather_in_kernel:
        rel_stream = rel_ids.reshape(B, 1)                       # [B, 1] i32
        rel_emb = params["rel_emb"].astype(md)                   # VMEM-resident
        rel_row_bytes = 4
    else:
        # Large vocab: gather the rows once in the wrapper and stream [B, inner]
        # instead of keeping a [C, inner] table + [T, C] one-hot in VMEM.
        rel_stream = params["rel_emb"].astype(f32)[rel_ids]      # [B, inner] f32
        rel_emb = None
        rel_row_bytes = inner_dim * 4

    # --- VMEM budget -> tile size --------------------------------------------
    stream_itemsize = jnp.dtype(heads.dtype).itemsize
    weight_bytes = int(
        (wt.size + wd_h.size + wd_t.size + sum(w.size for w in w_res_pieces))
        * md.itemsize
        + (bt.size + b_res.size + bd.size) * 4
        + (rel_emb.size * md.itemsize if gather_in_kernel else 0))
    inter_bytes = 4 * (4 * inner_dim + n_fused + 2 * input_dim)  # th,tt,deltas,x,...
    if gather_in_kernel:
        inter_bytes += num_classes * md.itemsize                 # one-hot row
    per_row_bytes = (2 * (2 * input_dim * stream_itemsize + rel_row_bytes + 4)
                     + int(1.5 * inter_bytes))
    vmem_limit = _vmem_limit_bytes()

    if b_tile is None:
        b_tile = _pick_b_tile(B, per_row_bytes=per_row_bytes,
                              weight_bytes=weight_bytes, vmem_limit=vmem_limit)
    num_tiles = pl.cdiv(B, b_tile)
    assert b_tile % 8 == 0
    assert num_tiles == 1 or b_tile % 128 == 0, \
        "multi-tile runs need a 128-multiple b_tile (lane-dense output blocks)"

    # No wrapper-side pad: ragged last tile's OOB rows are masked by Pallas,
    # compute is strictly per-row, and the garbage rows are sliced off below.
    tile_map = lambda i: (i, 0)
    out_map = lambda i: (0, i)
    const_map = lambda i: (0, 0)

    kernel = functools.partial(
        _head_kernel, inner_dim=inner_dim, input_dim=input_dim,
        inner_pad=inner_pad, d_pad=d_pad, num_classes=num_classes,
        matmul_dtype=md, gather_in_kernel=gather_in_kernel)

    flops_row = (2 * 2 * input_dim * inner_dim        # transMatrix (h & t)
                 + 2 * 3 * inner_dim * n_fused        # fused residual linears
                 + 2 * 2 * input_dim * inner_dim      # dense
                 + 2 * inner_dim)                     # score row-dot
    if gather_in_kernel:
        flops_row += 2 * num_classes * inner_dim
    cost = pl.CostEstimate(
        flops=int(B * flops_row),
        transcendentals=int(B * (n_fused + inner_dim)),
        bytes_accessed=int(B * (2 * input_dim * stream_itemsize
                                + rel_row_bytes + 4) + weight_bytes))

    def build_call(resident_mode):
        def res_spec(shape):
            if resident_mode is None:
                return pl.BlockSpec(shape, const_map)
            return pl.BlockSpec(shape, const_map, pipeline_mode=resident_mode)

        in_specs = [
            pl.BlockSpec((b_tile, 1 if gather_in_kernel else inner_dim), tile_map),
            pl.BlockSpec((b_tile, input_dim), tile_map),          # heads
            pl.BlockSpec((b_tile, input_dim), tile_map),          # tails
        ]
        if gather_in_kernel:
            in_specs.append(res_spec((num_classes, inner_dim)))   # rel_emb
        in_specs += [
            res_spec((input_dim, inner_dim)),                     # wt
            res_spec((1, inner_dim)),                             # bt
            res_spec((inner_dim, n_fused)),                       # w_res (th)
            res_spec((inner_dim, n_fused)),                       # w_res (tt)
            res_spec((inner_dim, n_fused)),                       # w_res (rel)
            res_spec((1, n_fused)),                               # b_res
            res_spec((input_dim, inner_dim)),                     # wd (head half)
            res_spec((input_dim, inner_dim)),                     # wd (tail half)
            res_spec((1, inner_dim)),                             # bd
        ]

        return pl.pallas_call(
            kernel,
            out_shape=jax.ShapeDtypeStruct((1, num_tiles * b_tile), jnp.float32),
            grid_spec=pltpu.PrefetchScalarGridSpec(
                num_scalar_prefetch=0,
                grid=(num_tiles,),
                in_specs=in_specs,
                out_specs=pl.BlockSpec((1, b_tile), out_map),
            ),
            compiler_params=pltpu.CompilerParams(
                dimension_semantics=("parallel",),
                vmem_limit_bytes=int(vmem_limit),
            ),
            cost_estimate=cost,
        )

    operands = [rel_stream, heads, tails]
    if gather_in_kernel:
        operands.append(rel_emb)
    operands += [wt, bt, *w_res_pieces, b_res, wd_h, wd_t, bd]

    try:
        # Constant-index weights single-buffered: their block never changes, so
        # the second pipeline buffer is pure VMEM waste (matters most on v7x).
        out = build_call(pl.Buffered(1))(*operands)
    except Exception:
        # Fallback if this build rejects pipeline_mode / buffer_count=1.
        out = build_call(None)(*operands)

    return out[0, :B].reshape(B, 1, 1)


# -----------------------------------------------------------------------------
# Params / reference
# -----------------------------------------------------------------------------
def _xavier_uniform(key, fan_in, fan_out):
    limit = jnp.sqrt(6.0 / (fan_in + fan_out))
    return jax.random.uniform(key, (fan_in, fan_out), jnp.float32, -limit, limit)


def init_params(key, input_dim, inner_dim, num_classes):
    ks = jax.random.split(key, 12)
    # Weights stored pre-transposed: [in_features, out_features]; biases [1, out].
    return {
        "rel_emb": _xavier_uniform(ks[0], num_classes, inner_dim),
        "wt": _xavier_uniform(ks[1], input_dim, inner_dim),
        "bt": jax.random.normal(ks[2], (1, inner_dim), jnp.float32) * 0.01,
        "wr": _xavier_uniform(ks[3], inner_dim * 3, inner_dim),
        "br": jax.random.normal(ks[4], (1, inner_dim), jnp.float32) * 0.01,
        "wh": _xavier_uniform(ks[5], inner_dim * 3, input_dim),
        "bh": jax.random.normal(ks[6], (1, input_dim), jnp.float32) * 0.01,
        "wtl": _xavier_uniform(ks[7], inner_dim * 3, input_dim),
        "btl": jax.random.normal(ks[8], (1, input_dim), jnp.float32) * 0.01,
        "wd": _xavier_uniform(ks[9], input_dim * 2, inner_dim),
        "bd": jax.random.normal(ks[10], (1, inner_dim), jnp.float32) * 0.01,
    }


def reference_forward(heads, tails, rels, p):
    """Pure-JAX reference mirroring the PyTorch forward (eval mode)."""
    rel_e = p["rel_emb"][rels[:, 0]]
    th = heads @ p["wt"] + p["bt"]
    tt = tails @ p["wt"] + p["bt"]
    inp = jnp.concatenate([th, tt, rel_e], axis=-1)
    delta_rel = jnp.tanh(inp @ p["wr"] + p["br"])
    delta_h = jnp.tanh(inp @ p["wh"] + p["bh"])
    delta_t = jnp.tanh(inp @ p["wtl"] + p["btl"])
    rels_new = rel_e + delta_rel
    xcat = jnp.concatenate([heads + delta_h, tails + delta_t], axis=-1)
    x = jnp.tanh(xcat @ p["wd"] + p["bd"])
    return jnp.sum(rels_new * x, axis=-1).reshape(-1, 1, 1)


if __name__ == "__main__":
    INPUT_DIM, INNER_DIM, NUM_CLASSES = 32, 32, 4
    key = jax.random.PRNGKey(0)
    k_p = jax.random.fold_in(key, 1234)
    params = init_params(k_p, INPUT_DIM, INNER_DIM, NUM_CLASSES)

    def run_case(batch, **kw):
        kh, kt, kr = jax.random.split(jax.random.fold_in(key, batch), 3)
        heads = jax.random.normal(kh, (batch, INPUT_DIM), jnp.float32)
        tails = jax.random.normal(kt, (batch, INPUT_DIM), jnp.float32)
        rels = jax.random.randint(kr, (batch, 1), 0, NUM_CLASSES, jnp.int32)
        ref = reference_forward(heads, tails, rels, params)
        out = binary_class_feat_integration_head(heads, tails, rels, params, **kw)
        out = jax.block_until_ready(out)
        assert out.shape == (batch, 1, 1)
        return out, ref

    # Exact semantics: f32 MXU operands, single ragged tile (B=20 -> b_tile=24).
    out, ref = run_case(20, matmul_dtype=jnp.float32)
    assert jnp.allclose(out, ref, atol=2e-4, rtol=2e-4)

    # Exact semantics: multi-tile grid with ragged last tile (B=300 -> 2 x 256).
    out, ref = run_case(300, matmul_dtype=jnp.float32)
    assert jnp.allclose(out, ref, atol=2e-4, rtol=2e-4)

    # Large-vocab code path (wrapper-side embedding gather), forced via threshold.
    out, ref = run_case(300, matmul_dtype=jnp.float32, onehot_max_classes=0)
    assert jnp.allclose(out, ref, atol=2e-4, rtol=2e-4)

    # Fast path smoke test: bf16 MXU operands, f32 accumulation (loose tolerance).
    out, ref = run_case(300, matmul_dtype=jnp.bfloat16)
    assert jnp.allclose(out, ref, atol=3e-1, rtol=2e-1)

    print("KERNEL_OK")
</pallas_src>

<mosaic_0001>
module attributes {stable_mosaic.version = 11 : i64} {
  func.func @_head_kernel(%arg0: i32, %arg1: memref<24x1xi32, #tpu.memory_space<vmem>>, %arg2: memref<24x32xf32, #tpu.memory_space<vmem>>, %arg3: memref<24x32xf32, #tpu.memory_space<vmem>>, %arg4: memref<4x32xf32, #tpu.memory_space<vmem>>, %arg5: memref<32x32xf32, #tpu.memory_space<vmem>>, %arg6: memref<1x32xf32, #tpu.memory_space<vmem>>, %arg7: memref<32x384xf32, #tpu.memory_space<vmem>>, %arg8: memref<32x384xf32, #tpu.memory_space<vmem>>, %arg9: memref<32x384xf32, #tpu.memory_space<vmem>>, %arg10: memref<1x384xf32, #tpu.memory_space<vmem>>, %arg11: memref<32x32xf32, #tpu.memory_space<vmem>>, %arg12: memref<32x32xf32, #tpu.memory_space<vmem>>, %arg13: memref<1x32xf32, #tpu.memory_space<vmem>>, %arg14: memref<1x24xf32, #tpu.memory_space<vmem>>) attributes {dimension_semantics = [#tpu.dimension_semantics<parallel>], iteration_bounds = array<i64: 1>, scalar_prefetch = 0 : i64, scratch_operands = 0 : i64, tpu.core_type = #tpu.core_type<tc>, window_params = [{transform_indices = @transform_0, window_bounds = array<i64: 24, 1>}, {transform_indices = @transform_1, window_bounds = array<i64: 24, 32>}, {transform_indices = @transform_2, window_bounds = array<i64: 24, 32>}, {pipeline_mode = #tpu.pipeline_mode<synchronous>, transform_indices = @transform_3, window_bounds = array<i64: 4, 32>}, {pipeline_mode = #tpu.pipeline_mode<synchronous>, transform_indices = @transform_4, window_bounds = array<i64: 32, 32>}, {pipeline_mode = #tpu.pipeline_mode<synchronous>, transform_indices = @transform_5, window_bounds = array<i64: 1, 32>}, {pipeline_mode = #tpu.pipeline_mode<synchronous>, transform_indices = @transform_6, window_bounds = array<i64: 32, 384>}, {pipeline_mode = #tpu.pipeline_mode<synchronous>, transform_indices = @transform_7, window_bounds = array<i64: 32, 384>}, {pipeline_mode = #tpu.pipeline_mode<synchronous>, transform_indices = @transform_8, window_bounds = array<i64: 32, 384>}, {pipeline_mode = #tpu.pipeline_mode<synchronous>, transform_indices = @transform_9, window_bounds = array<i64: 1, 384>}, {pipeline_mode = #tpu.pipeline_mode<synchronous>, transform_indices = @transform_10, window_bounds = array<i64: 32, 32>}, {pipeline_mode = #tpu.pipeline_mode<synchronous>, transform_indices = @transform_11, window_bounds = array<i64: 32, 32>}, {pipeline_mode = #tpu.pipeline_mode<synchronous>, transform_indices = @transform_12, window_bounds = array<i64: 1, 32>}, {transform_indices = @transform_13, window_bounds = array<i64: 1, 24>}]} {
    %c0 = arith.constant 0 : index
    %c0_0 = arith.constant 0 : index
    %0 = vector.load %arg2[%c0, %c0_0] : memref<24x32xf32, #tpu.memory_space<vmem>>, vector<24x32xf32>
    %c0_1 = arith.constant 0 : index
    %c0_2 = arith.constant 0 : index
    %1 = vector.load %arg3[%c0_1, %c0_2] : memref<24x32xf32, #tpu.memory_space<vmem>>, vector<24x32xf32>
    %c0_3 = arith.constant 0 : index
    %c0_4 = arith.constant 0 : index
    %2 = vector.load %arg1[%c0_3, %c0_4] : memref<24x1xi32, #tpu.memory_space<vmem>>, vector<24x1xi32>
    %3 = tpu.iota {dimensions = array<i32: 1>} : vector<24x4xi32>
    %4 = vector.broadcast %2 : vector<24x1xi32> to vector<24x4xi32>
    %5 = arith.cmpi eq, %3, %4 : vector<24x4xi32>
    %6 = arith.extui %5 : vector<24x4xi1> to vector<24x4xi32>
    %7 = arith.sitofp %6 : vector<24x4xi32> to vector<24x4xf32>
    %c0_5 = arith.constant 0 : index
    %c0_6 = arith.constant 0 : index
    %8 = vector.load %arg4[%c0_5, %c0_6] : memref<4x32xf32, #tpu.memory_space<vmem>>, vector<4x32xf32>
    %cst = arith.constant dense<0.000000e+00> : vector<24x32xf32>
    %9 = tpu.matmul %7, %8, %cst {dimension_numbers = #tpu.dot_dimension_numbers<[1], [0], [0], [1], [0, 0, 1, 1], [], []>} : vector<24x4xf32>, vector<4x32xf32>, vector<24x32xf32> -> vector<24x32xf32>
    %c0_7 = arith.constant 0 : index
    %c0_8 = arith.constant 0 : index
    %10 = vector.load %arg5[%c0_7, %c0_8] : memref<32x32xf32, #tpu.memory_space<vmem>>, vector<32x32xf32>
    %c0_9 = arith.constant 0 : index
    %c0_10 = arith.constant 0 : index
    %11 = vector.load %arg6[%c0_9, %c0_10] : memref<1x32xf32, #tpu.memory_space<vmem>>, vector<1x32xf32>
    %cst_11 = arith.constant dense<0.000000e+00> : vector<24x32xf32>
    %12 = tpu.matmul %0, %10, %cst_11 {dimension_numbers = #tpu.dot_dimension_numbers<[1], [0], [0], [1], [0, 0, 1, 1], [], []>} : vector<24x32xf32>, vector<32x32xf32>, vector<24x32xf32> -> vector<24x32xf32>
    %13 = vector.broadcast %11 : vector<1x32xf32> to vector<24x32xf32>
    %14 = arith.addf %12, %13 : vector<24x32xf32>
    %cst_12 = arith.constant dense<0.000000e+00> : vector<24x32xf32>
    %15 = tpu.matmul %1, %10, %cst_12 {dimension_numbers = #tpu.dot_dimension_numbers<[1], [0], [0], [1], [0, 0, 1, 1], [], []>} : vector<24x32xf32>, vector<32x32xf32>, vector<24x32xf32> -> vector<24x32xf32>
    %16 = vector.broadcast %11 : vector<1x32xf32> to vector<24x32xf32>
    %17 = arith.addf %15, %16 : vector<24x32xf32>
    %c0_13 = arith.constant 0 : index
    %c0_14 = arith.constant 0 : index
    %18 = vector.load %arg7[%c0_13, %c0_14] : memref<32x384xf32, #tpu.memory_space<vmem>>, vector<32x384xf32>
    %cst_15 = arith.constant dense<0.000000e+00> : vector<24x384xf32>
    %19 = tpu.matmul %14, %18, %cst_15 {dimension_numbers = #tpu.dot_dimension_numbers<[1], [0], [0], [1], [0, 0, 1, 1], [], []>} : vector<24x32xf32>, vector<32x384xf32>, vector<24x384xf32> -> vector<24x384xf32>
    %c0_16 = arith.constant 0 : index
    %c0_17 = arith.constant 0 : index
    %20 = vector.load %arg8[%c0_16, %c0_17] : memref<32x384xf32, #tpu.memory_space<vmem>>, vector<32x384xf32>
    %cst_18 = arith.constant dense<0.000000e+00> : vector<24x384xf32>
    %21 = tpu.matmul %17, %20, %cst_18 {dimension_numbers = #tpu.dot_dimension_numbers<[1], [0], [0], [1], [0, 0, 1, 1], [], []>} : vector<24x32xf32>, vector<32x384xf32>, vector<24x384xf32> -> vector<24x384xf32>
    %22 = arith.addf %19, %21 : vector<24x384xf32>
    %c0_19 = arith.constant 0 : index
    %c0_20 = arith.constant 0 : index
    %23 = vector.load %arg9[%c0_19, %c0_20] : memref<32x384xf32, #tpu.memory_space<vmem>>, vector<32x384xf32>
    %cst_21 = arith.constant dense<0.000000e+00> : vector<24x384xf32>
    %24 = tpu.matmul %9, %23, %cst_21 {dimension_numbers = #tpu.dot_dimension_numbers<[1], [0], [0], [1], [0, 0, 1, 1], [], []>} : vector<24x32xf32>, vector<32x384xf32>, vector<24x384xf32> -> vector<24x384xf32>
    %25 = arith.addf %22, %24 : vector<24x384xf32>
    %c0_22 = arith.constant 0 : index
    %c0_23 = arith.constant 0 : index
    %26 = vector.load %arg10[%c0_22, %c0_23] : memref<1x384xf32, #tpu.memory_space<vmem>>, vector<1x384xf32>
    %27 = vector.broadcast %26 : vector<1x384xf32> to vector<24x384xf32>
    %28 = arith.addf %25, %27 : vector<24x384xf32>
    %29 = math.tanh %28 : vector<24x384xf32>
    %30 = vector.extract_strided_slice %29 {offsets = [0, 0], sizes = [24, 32], strides = [1, 1]} : vector<24x384xf32> to vector<24x32xf32>
    %31 = vector.extract_strided_slice %29 {offsets = [0, 128], sizes = [24, 32], strides = [1, 1]} : vector<24x384xf32> to vector<24x32xf32>
    %32 = vector.extract_strided_slice %29 {offsets = [0, 256], sizes = [24, 32], strides = [1, 1]} : vector<24x384xf32> to vector<24x32xf32>
    %33 = arith.addf %9, %30 : vector<24x32xf32>
    %34 = arith.addf %0, %31 : vector<24x32xf32>
    %35 = arith.addf %1, %32 : vector<24x32xf32>
    %c0_24 = arith.constant 0 : index
    %c0_25 = arith.constant 0 : index
    %36 = vector.load %arg11[%c0_24, %c0_25] : memref<32x32xf32, #tpu.memory_space<vmem>>, vector<32x32xf32>
    %cst_26 = arith.constant dense<0.000000e+00> : vector<24x32xf32>
    %37 = tpu.matmul %34, %36, %cst_26 {dimension_numbers = #tpu.dot_dimension_numbers<[1], [0], [0], [1], [0, 0, 1, 1], [], []>} : vector<24x32xf32>, vector<32x32xf32>, vector<24x32xf32> -> vector<24x32xf32>
    %c0_27 = arith.constant 0 : index
    %c0_28 = arith.constant 0 : index
    %38 = vector.load %arg12[%c0_27, %c0_28] : memref<32x32xf32, #tpu.memory_space<vmem>>, vector<32x32xf32>
    %cst_29 = arith.constant dense<0.000000e+00> : vector<24x32xf32>
    %39 = tpu.matmul %35, %38, %cst_29 {dimension_numbers = #tpu.dot_dimension_numbers<[1], [0], [0], [1], [0, 0, 1, 1], [], []>} : vector<24x32xf32>, vector<32x32xf32>, vector<24x32xf32> -> vector<24x32xf32>
    %40 = arith.addf %37, %39 : vector<24x32xf32>
    %c0_30 = arith.constant 0 : index
    %c0_31 = arith.constant 0 : index
    %41 = vector.load %arg13[%c0_30, %c0_31] : memref<1x32xf32, #tpu.memory_space<vmem>>, vector<1x32xf32>
    %42 = vector.broadcast %41 : vector<1x32xf32> to vector<24x32xf32>
    %43 = arith.addf %40, %42 : vector<24x32xf32>
    %44 = math.tanh %43 : vector<24x32xf32>
    %45 = arith.mulf %33, %44 : vector<24x32xf32>
    %cst_32 = arith.constant dense<0.000000e+00> : vector<24xf32>
    %46 = vector.multi_reduction <add>, %45, %cst_32 [1] : vector<24x32xf32> to vector<24xf32>
    %47 = vector.shape_cast %46 : vector<24xf32> to vector<1x24xf32>
    %c0_33 = arith.constant 0 : index
    %c0_34 = arith.constant 0 : index
    %48 = vector.load %arg14[%c0_33, %c0_34] : memref<1x24xf32, #tpu.memory_space<vmem>>, vector<1x24xf32>
    tpu.vector_store %arg14[%c0_33, %c0_34], %47 {strides = array<i32>} : memref<1x24xf32, #tpu.memory_space<vmem>>, vector<1x24xf32>,
    return
  }
  func.func @transform_0(%arg0: i32) -> (i32, i32) {
    %c0_i32 = arith.constant 0 : i32
    %c0_i32_0 = arith.constant 0 : i32
    return %arg0, %c0_i32 : i32, i32
  }
  func.func @transform_1(%arg0: i32) -> (i32, i32) {
    %c0_i32 = arith.constant 0 : i32
    %c0_i32_0 = arith.constant 0 : i32
    return %arg0, %c0_i32 : i32, i32
  }
  func.func @transform_2(%arg0: i32) -> (i32, i32) {
    %c0_i32 = arith.constant 0 : i32
    %c0_i32_0 = arith.constant 0 : i32
    return %arg0, %c0_i32 : i32, i32
  }
  func.func @transform_3(%arg0: i32) -> (i32, i32) {
    %c0_i32 = arith.constant 0 : i32
    %c0_i32_0 = arith.constant 0 : i32
    %c0_i32_1 = arith.constant 0 : i32
    return %c0_i32, %c0_i32_0 : i32, i32
  }
  func.func @transform_4(%arg0: i32) -> (i32, i32) {
    %c0_i32 = arith.constant 0 : i32
    %c0_i32_0 = arith.constant 0 : i32
    %c0_i32_1 = arith.constant 0 : i32
    return %c0_i32, %c0_i32_0 : i32, i32
  }
  func.func @transform_5(%arg0: i32) -> (i32, i32) {
    %c0_i32 = arith.constant 0 : i32
    %c0_i32_0 = arith.constant 0 : i32
    %c0_i32_1 = arith.constant 0 : i32
    return %c0_i32, %c0_i32_0 : i32, i32
  }
  func.func @transform_6(%arg0: i32) -> (i32, i32) {
    %c0_i32 = arith.constant 0 : i32
    %c0_i32_0 = arith.constant 0 : i32
    %c0_i32_1 = arith.constant 0 : i32
    return %c0_i32, %c0_i32_0 : i32, i32
  }
  func.func @transform_7(%arg0: i32) -> (i32, i32) {
    %c0_i32 = arith.constant 0 : i32
    %c0_i32_0 = arith.constant 0 : i32
    %c0_i32_1 = arith.constant 0 : i32
    return %c0_i32, %c0_i32_0 : i32, i32
  }
  func.func @transform_8(%arg0: i32) -> (i32, i32) {
    %c0_i32 = arith.constant 0 : i32
    %c0_i32_0 = arith.constant 0 : i32
    %c0_i32_1 = arith.constant 0 : i32
    return %c0_i32, %c0_i32_0 : i32, i32
  }
  func.func @transform_9(%arg0: i32) -> (i32, i32) {
    %c0_i32 = arith.constant 0 : i32
    %c0_i32_0 = arith.constant 0 : i32
    %c0_i32_1 = arith.constant 0 : i32
    return %c0_i32, %c0_i32_0 : i32, i32
  }
  func.func @transform_10(%arg0: i32) -> (i32, i32) {
    %c0_i32 = arith.constant 0 : i32
    %c0_i32_0 = arith.constant 0 : i32
    %c0_i32_1 = arith.constant 0 : i32
    return %c0_i32, %c0_i32_0 : i32, i32
  }
  func.func @transform_11(%arg0: i32) -> (i32, i32) {
    %c0_i32 = arith.constant 0 : i32
    %c0_i32_0 = arith.constant 0 : i32
    %c0_i32_1 = arith.constant 0 : i32
    return %c0_i32, %c0_i32_0 : i32, i32
  }
  func.func @transform_12(%arg0: i32) -> (i32, i32) {
    %c0_i32 = arith.constant 0 : i32
    %c0_i32_0 = arith.constant 0 : i32
    %c0_i32_1 = arith.constant 0 : i32
    return %c0_i32, %c0_i32_0 : i32, i32
  }
  func.func @transform_13(%arg0: i32) -> (i32, i32) {
    %c0_i32 = arith.constant 0 : i32
    %c0_i32_0 = arith.constant 0 : i32
    return %c0_i32, %arg0 : i32, i32
  }
}

module attributes {stable_mosaic.version = 11 : i64} {
  func.func @_head_kernel(%arg0: i32, %arg1: memref<24x1xi32, #tpu.memory_space<vmem>>, %arg2: memref<24x32xf32, #tpu.memory_space<vmem>>, %arg3: memref<24x32xf32, #tpu.memory_space<vmem>>, %arg4: memref<4x32xf32, #tpu.memory_space<vmem>>, %arg5: memref<32x32xf32, #tpu.memory_space<vmem>>, %arg6: memref<1x32xf32, #tpu.memory_space<vmem>>, %arg7: memref<32x384xf32, #tpu.memory_space<vmem>>, %arg8: memref<32x384xf32, #tpu.memory_space<vmem>>, %arg9: memref<32x384xf32, #tpu.memory_space<vmem>>, %arg10: memref<1x384xf32, #tpu.memory_space<vmem>>, %arg11: memref<32x32xf32, #tpu.memory_space<vmem>>, %arg12: memref<32x32xf32, #tpu.memory_space<vmem>>, %arg13: memref<1x32xf32, #tpu.memory_space<vmem>>, %arg14: memref<1x24xf32, #tpu.memory_space<vmem>>) attributes {dimension_semantics = [#tpu.dimension_semantics<parallel>], iteration_bounds = array<i64: 1>, scalar_prefetch = 0 : i64, scratch_operands = 0 : i64, tpu.core_type = #tpu.core_type<tc>, window_params = [{transform_indices = @transform_0, window_bounds = array<i64: 24, 1>}, {transform_indices = @transform_1, window_bounds = array<i64: 24, 32>}, {transform_indices = @transform_2, window_bounds = array<i64: 24, 32>}, {pipeline_mode = #tpu.pipeline_mode<synchronous>, transform_indices = @transform_3, window_bounds = array<i64: 4, 32>}, {pipeline_mode = #tpu.pipeline_mode<synchronous>, transform_indices = @transform_4, window_bounds = array<i64: 32, 32>}, {pipeline_mode = #tpu.pipeline_mode<synchronous>, transform_indices = @transform_5, window_bounds = array<i64: 1, 32>}, {pipeline_mode = #tpu.pipeline_mode<synchronous>, transform_indices = @transform_6, window_bounds = array<i64: 32, 384>}, {pipeline_mode = #tpu.pipeline_mode<synchronous>, transform_indices = @transform_7, window_bounds = array<i64: 32, 384>}, {pipeline_mode = #tpu.pipeline_mode<synchronous>, transform_indices = @transform_8, window_bounds = array<i64: 32, 384>}, {pipeline_mode = #tpu.pipeline_mode<synchronous>, transform_indices = @transform_9, window_bounds = array<i64: 1, 384>}, {pipeline_mode = #tpu.pipeline_mode<synchronous>, transform_indices = @transform_10, window_bounds = array<i64: 32, 32>}, {pipeline_mode = #tpu.pipeline_mode<synchronous>, transform_indices = @transform_11, window_bounds = array<i64: 32, 32>}, {pipeline_mode = #tpu.pipeline_mode<synchronous>, transform_indices = @transform_12, window_bounds = array<i64: 1, 32>}, {transform_indices = @transform_13, window_bounds = array<i64: 1, 24>}]} {
    %c0 = arith.constant 0 : index
    %c0_0 = arith.constant 0 : index
    %0 = vector.load %arg2[%c0, %c0_0] : memref<24x32xf32, #tpu.memory_space<vmem>>, vector<24x32xf32>
    %c0_1 = arith.constant 0 : index
    %c0_2 = arith.constant 0 : index
    %1 = vector.load %arg3[%c0_1, %c0_2] : memref<24x32xf32, #tpu.memory_space<vmem>>, vector<24x32xf32>
    %c0_3 = arith.constant 0 : index
    %c0_4 = arith.constant 0 : index
    %2 = vector.load %arg1[%c0_3, %c0_4] : memref<24x1xi32, #tpu.memory_space<vmem>>, vector<24x1xi32>
    %3 = tpu.iota {dimensions = array<i32: 1>} : vector<24x4xi32>
    %4 = vector.broadcast %2 : vector<24x1xi32> to vector<24x4xi32>
    %5 = arith.cmpi eq, %3, %4 : vector<24x4xi32>
    %6 = arith.extui %5 : vector<24x4xi1> to vector<24x4xi32>
    %7 = arith.sitofp %6 : vector<24x4xi32> to vector<24x4xf32>
    %c0_5 = arith.constant 0 : index
    %c0_6 = arith.constant 0 : index
    %8 = vector.load %arg4[%c0_5, %c0_6] : memref<4x32xf32, #tpu.memory_space<vmem>>, vector<4x32xf32>
    %cst = arith.constant dense<0.000000e+00> : vector<24x32xf32>
    %9 = tpu.matmul %7, %8, %cst {dimension_numbers = #tpu.dot_dimension_numbers<[1], [0], [0], [1], [0, 0, 1, 1], [], []>} : vector<24x4xf32>, vector<4x32xf32>, vector<24x32xf32> -> vector<24x32xf32>
    %c0_7 = arith.constant 0 : index
    %c0_8 = arith.constant 0 : index
    %10 = vector.load %arg5[%c0_7, %c0_8] : memref<32x32xf32, #tpu.memory_space<vmem>>, vector<32x32xf32>
    %c0_9 = arith.constant 0 : index
    %c0_10 = arith.constant 0 : index
    %11 = vector.load %arg6[%c0_9, %c0_10] : memref<1x32xf32, #tpu.memory_space<vmem>>, vector<1x32xf32>
    %cst_11 = arith.constant dense<0.000000e+00> : vector<24x32xf32>
    %12 = tpu.matmul %0, %10, %cst_11 {dimension_numbers = #tpu.dot_dimension_numbers<[1], [0], [0], [1], [0, 0, 1, 1], [], []>} : vector<24x32xf32>, vector<32x32xf32>, vector<24x32xf32> -> vector<24x32xf32>
    %13 = vector.broadcast %11 : vector<1x32xf32> to vector<24x32xf32>
    %14 = arith.addf %12, %13 : vector<24x32xf32>
    %cst_12 = arith.constant dense<0.000000e+00> : vector<24x32xf32>
    %15 = tpu.matmul %1, %10, %cst_12 {dimension_numbers = #tpu.dot_dimension_numbers<[1], [0], [0], [1], [0, 0, 1, 1], [], []>} : vector<24x32xf32>, vector<32x32xf32>, vector<24x32xf32> -> vector<24x32xf32>
    %16 = vector.broadcast %11 : vector<1x32xf32> to vector<24x32xf32>
    %17 = arith.addf %15, %16 : vector<24x32xf32>
    %c0_13 = arith.constant 0 : index
    %c0_14 = arith.constant 0 : index
    %18 = vector.load %arg7[%c0_13, %c0_14] : memref<32x384xf32, #tpu.memory_space<vmem>>, vector<32x384xf32>
    %cst_15 = arith.constant dense<0.000000e+00> : vector<24x384xf32>
    %19 = tpu.matmul %14, %18, %cst_15 {dimension_numbers = #tpu.dot_dimension_numbers<[1], [0], [0], [1], [0, 0, 1, 1], [], []>} : vector<24x32xf32>, vector<32x384xf32>, vector<24x384xf32> -> vector<24x384xf32>
    %c0_16 = arith.constant 0 : index
    %c0_17 = arith.constant 0 : index
    %20 = vector.load %arg8[%c0_16, %c0_17] : memref<32x384xf32, #tpu.memory_space<vmem>>, vector<32x384xf32>
    %cst_18 = arith.constant dense<0.000000e+00> : vector<24x384xf32>
    %21 = tpu.matmul %17, %20, %cst_18 {dimension_numbers = #tpu.dot_dimension_numbers<[1], [0], [0], [1], [0, 0, 1, 1], [], []>} : vector<24x32xf32>, vector<32x384xf32>, vector<24x384xf32> -> vector<24x384xf32>
    %22 = arith.addf %19, %21 : vector<24x384xf32>
    %c0_19 = arith.constant 0 : index
    %c0_20 = arith.constant 0 : index
    %23 = vector.load %arg9[%c0_19, %c0_20] : memref<32x384xf32, #tpu.memory_space<vmem>>, vector<32x384xf32>
    %cst_21 = arith.constant dense<0.000000e+00> : vector<24x384xf32>
    %24 = tpu.matmul %9, %23, %cst_21 {dimension_numbers = #tpu.dot_dimension_numbers<[1], [0], [0], [1], [0, 0, 1, 1], [], []>} : vector<24x32xf32>, vector<32x384xf32>, vector<24x384xf32> -> vector<24x384xf32>
    %25 = arith.addf %22, %24 : vector<24x384xf32>
    %c0_22 = arith.constant 0 : index
    %c0_23 = arith.constant 0 : index
    %26 = vector.load %arg10[%c0_22, %c0_23] : memref<1x384xf32, #tpu.memory_space<vmem>>, vector<1x384xf32>
    %27 = vector.broadcast %26 : vector<1x384xf32> to vector<24x384xf32>
    %28 = arith.addf %25, %27 : vector<24x384xf32>
    %29 = math.tanh %28 : vector<24x384xf32>
    %30 = vector.extract_strided_slice %29 {offsets = [0, 0], sizes = [24, 32], strides = [1, 1]} : vector<24x384xf32> to vector<24x32xf32>
    %31 = vector.extract_strided_slice %29 {offsets = [0, 128], sizes = [24, 32], strides = [1, 1]} : vector<24x384xf32> to vector<24x32xf32>
    %32 = vector.extract_strided_slice %29 {offsets = [0, 256], sizes = [24, 32], strides = [1, 1]} : vector<24x384xf32> to vector<24x32xf32>
    %33 = arith.addf %9, %30 : vector<24x32xf32>
    %34 = arith.addf %0, %31 : vector<24x32xf32>
    %35 = arith.addf %1, %32 : vector<24x32xf32>
    %c0_24 = arith.constant 0 : index
    %c0_25 = arith.constant 0 : index
    %36 = vector.load %arg11[%c0_24, %c0_25] : memref<32x32xf32, #tpu.memory_space<vmem>>, vector<32x32xf32>
    %cst_26 = arith.constant dense<0.000000e+00> : vector<24x32xf32>
    %37 = tpu.matmul %34, %36, %cst_26 {dimension_numbers = #tpu.dot_dimension_numbers<[1], [0], [0], [1], [0, 0, 1, 1], [], []>} : vector<24x32xf32>, vector<32x32xf32>, vector<24x32xf32> -> vector<24x32xf32>
    %c0_27 = arith.constant 0 : index
    %c0_28 = arith.constant 0 : index
    %38 = vector.load %arg12[%c0_27, %c0_28] : memref<32x32xf32, #tpu.memory_space<vmem>>, vector<32x32xf32>
    %cst_29 = arith.constant dense<0.000000e+00> : vector<24x32xf32>
    %39 = tpu.matmul %35, %38, %cst_29 {dimension_numbers = #tpu.dot_dimension_numbers<[1], [0], [0], [1], [0, 0, 1, 1], [], []>} : vector<24x32xf32>, vector<32x32xf32>, vector<24x32xf32> -> vector<24x32xf32>
    %40 = arith.addf %37, %39 : vector<24x32xf32>
    %c0_30 = arith.constant 0 : index
    %c0_31 = arith.constant 0 : index
    %41 = vector.load %arg13[%c0_30, %c0_31] : memref<1x32xf32, #tpu.memory_space<vmem>>, vector<1x32xf32>
    %42 = vector.broadcast %41 : vector<1x32xf32> to vector<24x32xf32>
    %43 = arith.addf %40, %42 : vector<24x32xf32>
    %44 = math.tanh %43 : vector<24x32xf32>
    %45 = arith.mulf %33, %44 : vector<24x32xf32>
    %cst_32 = arith.constant dense<0.000000e+00> : vector<24xf32>
    %46 = vector.multi_reduction <add>, %45, %cst_32 [1] : vector<24x32xf32> to vector<24xf32>
    %47 = vector.shape_cast %46 : vector<24xf32> to vector<1x24xf32>
    %c0_33 = arith.constant 0 : index
    %c0_34 = arith.constant 0 : index
    %48 = vector.load %arg14[%c0_33, %c0_34] : memref<1x24xf32, #tpu.memory_space<vmem>>, vector<1x24xf32>
    tpu.vector_store %arg14[%c0_33, %c0_34], %47 {strides = array<i32>} : memref<1x24xf32, #tpu.memory_space<vmem>>, vector<1x24xf32>,
    return
  }
  func.func @transform_0(%arg0: i32) -> (i32, i32) {
    %c0_i32 = arith.constant 0 : i32
    %c0_i32_0 = arith.constant 0 : i32
    return %arg0, %c0_i32 : i32, i32
  }
  func.func @transform_1(%arg0: i32) -> (i32, i32) {
    %c0_i32 = arith.constant 0 : i32
    %c0_i32_0 = arith.constant 0 : i32
    return %arg0, %c0_i32 : i32, i32
  }
  func.func @transform_2(%arg0: i32) -> (i32, i32) {
    %c0_i32 = arith.constant 0 : i32
    %c0_i32_0 = arith.constant 0 : i32
    return %arg0, %c0_i32 : i32, i32
  }
  func.func @transform_3(%arg0: i32) -> (i32, i32) {
    %c0_i32 = arith.constant 0 : i32
    %c0_i32_0 = arith.constant 0 : i32
    %c0_i32_1 = arith.constant 0 : i32
    return %c0_i32, %c0_i32_0 : i32, i32
  }
  func.func @transform_4(%arg0: i32) -> (i32, i32) {
    %c0_i32 = arith.constant 0 : i32
    %c0_i32_0 = arith.constant 0 : i32
    %c0_i32_1 = arith.constant 0 : i32
    return %c0_i32, %c0_i32_0 : i32, i32
  }
  func.func @transform_5(%arg0: i32) -> (i32, i32) {
    %c0_i32 = arith.constant 0 : i32
    %c0_i32_0 = arith.constant 0 : i32
    %c0_i32_1 = arith.constant 0 : i32
    return %c0_i32, %c0_i32_0 : i32, i32
  }
  func.func @transform_6(%arg0: i32) -> (i32, i32) {
    %c0_i32 = arith.constant 0 : i32
    %c0_i32_0 = arith.constant 0 : i32
    %c0_i32_1 = arith.constant 0 : i32
    return %c0_i32, %c0_i32_0 : i32, i32
  }
  func.func @transform_7(%arg0: i32) -> (i32, i32) {
    %c0_i32 = arith.constant 0 : i32
    %c0_i32_0 = arith.constant 0 : i32
    %c0_i32_1 = arith.constant 0 : i32
    return %c0_i32, %c0_i32_0 : i32, i32
  }
  func.func @transform_8(%arg0: i32) -> (i32, i32) {
    %c0_i32 = arith.constant 0 : i32
    %c0_i32_0 = arith.constant 0 : i32
    %c0_i32_1 = arith.constant 0 : i32
    return %c0_i32, %c0_i32_0 : i32, i32
  }
  func.func @transform_9(%arg0: i32) -> (i32, i32) {
    %c0_i32 = arith.constant 0 : i32
    %c0_i32_0 = arith.constant 0 : i32
    %c0_i32_1 = arith.constant 0 : i32
    return %c0_i32, %c0_i32_0 : i32, i32
  }
  func.func @transform_10(%arg0: i32) -> (i32, i32) {
    %c0_i32 = arith.constant 0 : i32
    %c0_i32_0 = arith.constant 0 : i32
    %c0_i32_1 = arith.constant 0 : i32
    return %c0_i32, %c0_i32_0 : i32, i32
  }
  func.func @transform_11(%arg0: i32) -> (i32, i32) {
    %c0_i32 = arith.constant 0 : i32
    %c0_i32_0 = arith.constant 0 : i32
    %c0_i32_1 = arith.constant 0 : i32
    return %c0_i32, %c0_i32_0 : i32, i32
  }
  func.func @transform_12(%arg0: i32) -> (i32, i32) {
    %c0_i32 = arith.constant 0 : i32
    %c0_i32_0 = arith.constant 0 : i32
    %c0_i32_1 = arith.constant 0 : i32
    return %c0_i32, %c0_i32_0 : i32, i32
  }
  func.func @transform_13(%arg0: i32) -> (i32, i32) {
    %c0_i32 = arith.constant 0 : i32
    %c0_i32_0 = arith.constant 0 : i32
    return %c0_i32, %arg0 : i32, i32
  }
}

</mosaic_0001>

<llo_original>
// kernel: tpu_custom_call.1
$region0: #{tpu_custom_call.1}
  #allocation0 [shape = 'u32[]', space=smem, size = 0x4, offset = 0x4, fixed_abs, tag = 'smem constant byte address 0x4 - core index']
  #allocation1 [shape = 'u32[144,128]{1,0:T(1,128)}', space=vmem, size = 0x12000, scoped, tag = 'internal scratch']
  %s0 = inlined_call_operand.vmem [shape: s32[20,1], index: 0, kind: input, shape index: {}]
  %s1 = inlined_call_operand.hbm [shape: f32[20,32], index: 1, kind: input, shape index: {}]
  %s2 = inlined_call_operand.hbm [shape: f32[20,32], index: 2, kind: input, shape index: {}]
  %s3 = inlined_call_operand.hbm [shape: f32[4,32], index: 3, kind: input, shape index: {}]
  %s4 = inlined_call_operand.vmem [shape: f32[32,32], index: 4, kind: input, shape index: {}]
  %s5 = inlined_call_operand.hbm [shape: f32[1,32], index: 5, kind: input, shape index: {}]
  %s6 = inlined_call_operand.hbm [shape: f32[32,384], index: 6, kind: input, shape index: {}]
  %s7 = inlined_call_operand.hbm [shape: f32[32,384], index: 7, kind: input, shape index: {}]
  %s8 = inlined_call_operand.hbm [shape: f32[32,384], index: 8, kind: input, shape index: {}]
  %s9 = inlined_call_operand.vmem [shape: f32[1,384], index: 9, kind: input, shape index: {}]
  %s10 = inlined_call_operand.hbm [shape: f32[32,32], index: 10, kind: input, shape index: {}]
  %s11 = inlined_call_operand.hbm [shape: f32[32,32], index: 11, kind: input, shape index: {}]
  %s12 = inlined_call_operand.vmem [shape: f32[1,32], index: 12, kind: input, shape index: {}]
  %s13 = inlined_call_operand.hbm [shape: f32[1,24], index: 13, kind: output, shape index: {}]
  %s14 = sld [smem:[#allocation0]]
  $region98: #{tpu_custom_call.1} parent=0
    _
  %s16 = ssub.s32 1, %s14
  %s17 = scalar_select 0, %s16, %s14
  $region1: #{tpu_custom_call.1} parent=0
    #allocation2 [shape = 'u8[12288]{0}', space=vmem, size = 0x3000, scoped, tag = 'input window, operand 1, single buffered']
    #allocation3 [shape = 's32[1]{0}', space=sflag, size = 0x4, scoped, tag = 'scoped memory for tpu_custom_call.1']
    #allocation4 [shape = 's32[1]{0}', space=sflag, size = 0x4, scoped, tag = 'scoped memory for tpu_custom_call.1']
    #allocation5 [shape = 'u8[12288]{0}', space=vmem, size = 0x3000, scoped, tag = 'input window, operand 2, single buffered']
    #allocation6 [shape = 's32[1]{0}', space=sflag, size = 0x4, scoped, tag = 'scoped memory for tpu_custom_call.1']
    #allocation7 [shape = 'u8[2048]{0}', space=vmem, size = 0x800, scoped, tag = 'input window, operand 3, single buffered']
    #allocation8 [shape = 'u8[512]{0}', space=vmem, size = 0x400, scoped, tag = 'input window, operand 5, single buffered']
    #allocation9 [shape = 's32[1]{0}', space=sflag, size = 0x4, scoped, tag = 'scoped memory for tpu_custom_call.1']
    #allocation10 [shape = 'u8[49152]{0}', space=vmem, size = 0xc000, scoped, tag = 'input window, operand 6, single buffered']
    #allocation11 [shape = 'u8[49152]{0}', space=vmem, size = 0xc000, scoped, tag = 'input window, operand 7, single buffered']
    #allocation12 [shape = 's32[1]{0}', space=sflag, size = 0x4, scoped, tag = 'scoped memory for tpu_custom_call.1']
    #allocation13 [shape = 'u8[49152]{0}', space=vmem, size = 0xc000, scoped, tag = 'input window, operand 8, single buffered']
    #allocation14 [shape = 'u8[16384]{0}', space=vmem, size = 0x4000, scoped, tag = 'input window, operand 10, single buffered']
    #allocation15 [shape = 's32[1]{0}', space=sflag, size = 0x4, scoped, tag = 'scoped memory for tpu_custom_call.1']
    #allocation16 [shape = 'u8[16384]{0}', space=vmem, size = 0x4000, scoped, tag = 'input window, operand 11, single buffered']
    #allocation17 [shape = 'u8[512]{0}', space=vmem, size = 0x400, scoped, tag = 'output window, operand 0, single buffered']
    %18 = vsyncpa [#allocation3], 0
    %19 = vsyncpa [#allocation6], 0
    %20 = vsyncpa [#allocation9], 0
    %21 = vsyncpa [#allocation12], 0
    %22 = vsyncpa [#allocation15], 0
    %23 = vsyncpa [#allocation4], 0
    // Predicated region
    $region2: #{tpu_custom_call.1} parent=1 // pred_check
      _
    $region3: #{tpu_custom_call.1} parent=1 // pred_check_branch
      %25 = sbr.rel (0) target = $region5
    $region4: #{tpu_custom_call.1} parent=1 // pred_region
      _
    $region5: #{tpu_custom_call.1} parent=1 // pred_fallthru
      _
    // Predicated region
    $region6: #{tpu_custom_call.1} parent=1 // pred_check
      _
    $region7: #{tpu_custom_call.1} parent=1 // pred_check_branch
      %27 = sbr.rel (0) target = $region9
    $region8: #{tpu_custom_call.1} parent=1 // pred_region
      %s29 = ssub.s32 384, 384
      %30 = vsyncadd [#allocation3], %s29
      %s31 = sshll.u32 [#allocation2], 4
      %s32 = int_to_ptr.vmem [resolvable:$true] %s31
      %37 = dma.hbm_to_vmem [thread:$0]  %s1, 384, %s32, [#allocation3], 128, 128, 8
    $region9: #{tpu_custom_call.1} parent=1 // pred_fallthru
      _
    // Predicated region
    $region10: #{tpu_custom_call.1} parent=1 // pred_check
      _
    $region11: #{tpu_custom_call.1} parent=1 // pred_check_branch
      %39 = sbr.rel (0) target = $region13
    $region12: #{tpu_custom_call.1} parent=1 // pred_region
      %s41 = ssub.s32 384, 384
      %42 = vsyncadd [#allocation6], %s41
      %s43 = sshll.u32 [#allocation5], 4
      %s44 = int_to_ptr.vmem [resolvable:$true] %s43
      %49 = dma.hbm_to_vmem [thread:$0]  %s2, 384, %s44, [#allocation6], 128, 128, 8
    $region13: #{tpu_custom_call.1} parent=1 // pred_fallthru
      _
    // Predicated region
    $region14: #{tpu_custom_call.1} parent=1 // pred_check
      _
    $region15: #{tpu_custom_call.1} parent=1 // pred_check_branch
      %51 = sbr.rel (0) target = $region17
    $region16: #{tpu_custom_call.1} parent=1 // pred_region
      %s53 = ssub.s32 64, 64
      %54 = vsyncadd [#allocation6], %s53
      %s56 = sshll.u32 [#allocation7], 4
      %s57 = int_to_ptr.vmem [resolvable:$true] %s56
      %59 = dma.hbm_to_vmem [thread:$0]  %s3, 64, %s57, [#allocation6]
    $region17: #{tpu_custom_call.1} parent=1 // pred_fallthru
      _
    // Predicated region
    $region18: #{tpu_custom_call.1} parent=1 // pred_check
      _
    $region19: #{tpu_custom_call.1} parent=1 // pred_check_branch
      %61 = sbr.rel (0) target = $region21
    $region20: #{tpu_custom_call.1} parent=1 // pred_region
      _
    $region21: #{tpu_custom_call.1} parent=1 // pred_fallthru
      _
    // Predicated region
    $region22: #{tpu_custom_call.1} parent=1 // pred_check
      _
    $region23: #{tpu_custom_call.1} parent=1 // pred_check_branch
      %63 = sbr.rel (0) target = $region25
    $region24: #{tpu_custom_call.1} parent=1 // pred_region
      %s65 = ssub.s32 16, 16
      %66 = vsyncadd [#allocation9], %s65
      %s68 = sshll.u32 [#allocation8], 4
      %s69 = int_to_ptr.vmem [resolvable:$true] %s68
      %71 = dma.hbm_to_vmem [thread:$0]  %s5, 16, %s69, [#allocation9]
    $region25: #{tpu_custom_call.1} parent=1 // pred_fallthru
      _
    // Predicated region
    $region26: #{tpu_custom_call.1} parent=1 // pred_check
      _
    $region27: #{tpu_custom_call.1} parent=1 // pred_check_branch
      %73 = sbr.rel (0) target = $region29
    $region28: #{tpu_custom_call.1} parent=1 // pred_region
      %s75 = ssub.s32 1536, 1536
      %76 = vsyncadd [#allocation9], %s75
      %s77 = sshll.u32 [#allocation10], 4
      %s78 = int_to_ptr.vmem [resolvable:$true] %s77
      %83 = dma.hbm_to_vmem [thread:$0]  %s6, 1536, %s78, [#allocation9], 384, 384, 24
    $region29: #{tpu_custom_call.1} parent=1 // pred_fallthru
      _
    // Predicated region
    $region30: #{tpu_custom_call.1} parent=1 // pred_check
      _
    $region31: #{tpu_custom_call.1} parent=1 // pred_check_branch
      %85 = sbr.rel (0) target = $region33
    $region32: #{tpu_custom_call.1} parent=1 // pred_region
      %s87 = ssub.s32 1536, 1536
      %88 = vsyncadd [#allocation12], %s87
      %s89 = sshll.u32 [#allocation11], 4
      %s90 = int_to_ptr.vmem [resolvable:$true] %s89
      %95 = dma.hbm_to_vmem [thread:$0]  %s7, 1536, %s90, [#allocation12], 384, 384, 24
    $region33: #{tpu_custom_call.1} parent=1 // pred_fallthru
      _
    // Predicated region
    $region34: #{tpu_custom_call.1} parent=1 // pred_check
      _
    $region35: #{tpu_custom_call.1} parent=1 // pred_check_branch
      %97 = sbr.rel (0) target = $region37
    $region36: #{tpu_custom_call.1} parent=1 // pred_region
      %s99 = ssub.s32 1536, 1536
      %100 = vsyncadd [#allocation12], %s99
      %s101 = sshll.u32 [#allocation13], 4
      %s102 = int_to_ptr.vmem [resolvable:$true] %s101
      %107 = dma.hbm_to_vmem [thread:$0]  %s8, 1536, %s102, [#allocation12], 384, 384, 24
    $region37: #{tpu_custom_call.1} parent=1 // pred_fallthru
      _
    // Predicated region
    $region38: #{tpu_custom_call.1} parent=1 // pred_check
      _
    $region39: #{tpu_custom_call.1} parent=1 // pred_check_branch
      %109 = sbr.rel (0) target = $region41
    $region40: #{tpu_custom_call.1} parent=1 // pred_region
      _
    $region41: #{tpu_custom_call.1} parent=1 // pred_fallthru
      _
    // Predicated region
    $region42: #{tpu_custom_call.1} parent=1 // pred_check
      _
    $region43: #{tpu_custom_call.1} parent=1 // pred_check_branch
      %111 = sbr.rel (0) target = $region45
    $region44: #{tpu_custom_call.1} parent=1 // pred_region
      %s113 = ssub.s32 512, 512
      %114 = vsyncadd [#allocation15], %s113
      %s115 = sshll.u32 [#allocation14], 4
      %s116 = int_to_ptr.vmem [resolvable:$true] %s115
      %121 = dma.hbm_to_vmem [thread:$0]  %s10, 512, %s116, [#allocation15], 128, 128, 8
    $region45: #{tpu_custom_call.1} parent=1 // pred_fallthru
      _
    // Predicated region
    $region46: #{tpu_custom_call.1} parent=1 // pred_check
      _
    $region47: #{tpu_custom_call.1} parent=1 // pred_check_branch
      %123 = sbr.rel (0) target = $region49
    $region48: #{tpu_custom_call.1} parent=1 // pred_region
      %s125 = ssub.s32 512, 512
      %126 = vsyncadd [#allocation15], %s125
      %s127 = sshll.u32 [#allocation16], 4
      %s128 = int_to_ptr.vmem [resolvable:$true] %s127
      %133 = dma.hbm_to_vmem [thread:$0]  %s11, 512, %s128, [#allocation15], 128, 128, 8
    $region49: #{tpu_custom_call.1} parent=1 // pred_fallthru
      _
    // Predicated region
    $region50: #{tpu_custom_call.1} parent=1 // pred_check
      _
    $region51: #{tpu_custom_call.1} parent=1 // pred_check_branch
      %135 = sbr.rel (0) target = $region53
    $region52: #{tpu_custom_call.1} parent=1 // pred_region
      _
    $region53: #{tpu_custom_call.1} parent=1 // pred_fallthru
      _
    // Predicated region
    $region54: #{tpu_custom_call.1} parent=1 // pred_check
      _
    $region55: #{tpu_custom_call.1} parent=1 // pred_check_branch
      %137 = sbr.rel (0) target = $region57
    $region56: #{tpu_custom_call.1} parent=1 // pred_region
      %138 = dma.done [#allocation3], 384
    $region57: #{tpu_custom_call.1} parent=1 // pred_fallthru
      _
    // Predicated region
    $region58: #{tpu_custom_call.1} parent=1 // pred_check
      _
    $region59: #{tpu_custom_call.1} parent=1 // pred_check_branch
      %140 = sbr.rel (0) target = $region61
    $region60: #{tpu_custom_call.1} parent=1 // pred_region
      %141 = dma.done [#allocation6], 384
    $region61: #{tpu_custom_call.1} parent=1 // pred_fallthru
      _
    // Predicated region
    $region62: #{tpu_custom_call.1} parent=1 // pred_check
      _
    $region63: #{tpu_custom_call.1} parent=1 // pred_check_branch
      %143 = sbr.rel (0) target = $region65
    $region64: #{tpu_custom_call.1} parent=1 // pred_region
      %144 = dma.done [#allocation6], 64
    $region65: #{tpu_custom_call.1} parent=1 // pred_fallthru
      _
    // Predicated region
    $region66: #{tpu_custom_call.1} parent=1 // pred_check
      _
    $region67: #{tpu_custom_call.1} parent=1 // pred_check_branch
      %146 = sbr.rel (0) target = $region69
    $region68: #{tpu_custom_call.1} parent=1 // pred_region
      %147 = dma.done [#allocation9], 16
    $region69: #{tpu_custom_call.1} parent=1 // pred_fallthru
      _
    // Predicated region
    $region70: #{tpu_custom_call.1} parent=1 // pred_check
      _
    $region71: #{tpu_custom_call.1} parent=1 // pred_check_branch
      %149 = sbr.rel (0) target = $region73
    $region72: #{tpu_custom_call.1} parent=1 // pred_region
      %150 = dma.done [#allocation9], 1536
    $region73: #{tpu_custom_call.1} parent=1 // pred_fallthru
      _
    // Predicated region
    $region74: #{tpu_custom_call.1} parent=1 // pred_check
      _
    $region75: #{tpu_custom_call.1} parent=1 // pred_check_branch
      %152 = sbr.rel (0) target = $region77
    $region76: #{tpu_custom_call.1} parent=1 // pred_region
      %153 = dma.done [#allocation12], 1536
    $region77: #{tpu_custom_call.1} parent=1 // pred_fallthru
      _
    // Predicated region
    $region78: #{tpu_custom_call.1} parent=1 // pred_check
      _
    $region79: #{tpu_custom_call.1} parent=1 // pred_check_branch
      %155 = sbr.rel (0) target = $region81
    $region80: #{tpu_custom_call.1} parent=1 // pred_region
      %156 = dma.done [#allocation12], 1536
    $region81: #{tpu_custom_call.1} parent=1 // pred_fallthru
      _
    // Predicated region
    $region82: #{tpu_custom_call.1} parent=1 // pred_check
      _
    $region83: #{tpu_custom_call.1} parent=1 // pred_check_branch
      %158 = sbr.rel (0) target = $region85
    $region84: #{tpu_custom_call.1} parent=1 // pred_region
      %159 = dma.done [#allocation15], 512
    $region85: #{tpu_custom_call.1} parent=1 // pred_fallthru
      _
    // Predicated region
    $region86: #{tpu_custom_call.1} parent=1 // pred_check
      _
    $region87: #{tpu_custom_call.1} parent=1 // pred_check_branch
      %161 = sbr.rel (0) target = $region89
    $region88: #{tpu_custom_call.1} parent=1 // pred_region
      %162 = dma.done [#allocation15], 512
    $region89: #{tpu_custom_call.1} parent=1 // pred_fallthru
      _
    %v163 = vld [vmem:[#allocation2] sm:$0xff]
    %v164 = vld [vmem:[#allocation2 + $0x8] sm:$0xff]
    %v165 = vld [vmem:[#allocation2 + $0x10] sm:$0xff]
    %v166 = vld [vmem:[#allocation5] sm:$0xff]
    %v167 = vld [vmem:[#allocation5 + $0x8] sm:$0xff]
    %v168 = vld [vmem:[#allocation5 + $0x10] sm:$0xff]
    %v169 = vld [vmem:[%s0] sm:$0xff]
    %v170 = vld [vmem:[%s0 + $0x8] sm:$0xff]
    %v171 = vld [vmem:[%s0 + $0x10] sm:$0xff]
    %v172 = vlaneseq
    %v173 = vand.u32 %v172, 127
    %174 = vset.pattern.permute.xlu0 0
    %175 = vperm.xlu0 %174, %v169
    %v176 = vpop.permute.xlu0 %175
    %177 = vset.pattern.permute.xlu0 0
    %178 = vperm.xlu0 %177, %v170
    %v179 = vpop.permute.xlu0 %178
    %180 = vset.pattern.permute.xlu0 0
    %181 = vperm.xlu0 %180, %v171
    %v182 = vpop.permute.xlu0 %181
    %vm183 = vcmp.eq.s32.totalorder %v173, %v176
    %vm184 = vcmp.eq.s32.totalorder %v173, %v179
    %vm185 = vcmp.eq.s32.totalorder %v173, %v182
    %v186 = vsel %vm183, 1, 0
    %v187 = vsel %vm184, 1, 0
    %v188 = vsel %vm185, 1, 0
    %v189 = vcvt.s32.f32 %v186
    %v190 = vcvt.s32.f32 %v187
    %v191 = vcvt.s32.f32 %v188
    %v192 = vld [vmem:[#allocation7] sm:$0xf]
    %vm193 = vcmask 31744
    %v195 = vsel %vm193, %v189, 0
    %v198 = vsel %vm193, %v190, 0
    %v201 = vsel %vm193, %v191, 0
    %vm203 = vcmask 1043456
    %v205 = vsel %vm203, %v192, 0
    %207 = vmatprep.subr.mxu0 0.0
    %208 = vmatpush1.msra.mxu0 0.0
    %209 = vmatprep.subr.mxu0 0.0
    %210 = vmatpush1.msra.mxu0 0.0
    %211 = vmatprep.subr.mxu0 0.0
    %212 = vmatpush1.msra.mxu0 0.0
    %213 = vmatprep.subr.mxu0 0.0
    %214 = vmatpush1.msra.mxu0 0.0
    %215 = vmatprep.subr.mxu0 0.0
    %216 = vmatpush1.msra.mxu0 0.0
    %217 = vmatprep.subr.mxu0 0.0
    %218 = vmatpush1.msra.mxu0 0.0
    %219 = vmatprep.subr.mxu0 0.0
    %220 = vmatpush1.msra.mxu0 0.0
    %221 = vmatprep.subr.mxu0 0.0
    %222 = vmatpush1.msra.mxu0 0.0
    %223 = vmatprep.subr.mxu0 0.0
    %224 = vmatpush1.msra.mxu0 0.0
    %225 = vmatprep.subr.mxu0 0.0
    %226 = vmatpush1.msra.mxu0 0.0
    %227 = vmatprep.subr.mxu0 0.0
    %228 = vmatpush1.msra.mxu0 0.0
    %229 = vmatprep.subr.mxu0 0.0
    %230 = vmatpush1.msra.mxu0 0.0
    %231 = vmatprep.subr.mxu0 0.0
    %232 = vmatpush1.msra.mxu0 0.0
    %233 = vmatprep.subr.mxu0 0.0
    %234 = vmatpush1.msra.mxu0 0.0
    %235 = vmatprep.subr.mxu0 0.0
    %236 = vmatpush1.msra.mxu0 0.0
    %237 = vmatprep.subr.mxu0 0.0
    %238 = vmatpush1.msra.mxu0 %v205
    %239 = vmatprep.subr.mxu0 0.0
    %240 = vmatpush2.msra.mxu0 0.0
    %241 = vmatprep.subr.mxu0 0.0
    %242 = vmatpush2.msra.mxu0 0.0
    %243 = vmatprep.subr.mxu0 0.0
    %244 = vmatpush2.msra.mxu0 0.0
    %245 = vmatprep.subr.mxu0 0.0
    %246 = vmatpush2.msra.mxu0 0.0
    %247 = vmatprep.subr.mxu0 0.0
    %248 = vmatpush2.msra.mxu0 0.0
    %249 = vmatprep.subr.mxu0 0.0
    %250 = vmatpush2.msra.mxu0 0.0
    %251 = vmatprep.subr.mxu0 0.0
    %252 = vmatpush2.msra.mxu0 0.0
    %253 = vmatprep.subr.mxu0 0.0
    %254 = vmatpush2.msra.mxu0 0.0
    %255 = vmatprep.subr.mxu0 0.0
    %256 = vmatpush2.msra.mxu0 0.0
    %257 = vmatprep.subr.mxu0 0.0
    %258 = vmatpush2.msra.mxu0 0.0
    %259 = vmatprep.subr.mxu0 0.0
    %260 = vmatpush2.msra.mxu0 0.0
    %261 = vmatprep.subr.mxu0 0.0
    %262 = vmatpush2.msra.mxu0 0.0
    %263 = vmatprep.subr.mxu0 0.0
    %264 = vmatpush2.msra.mxu0 0.0
    %265 = vmatprep.subr.mxu0 0.0
    %266 = vmatpush2.msra.mxu0 0.0
    %267 = vmatprep.subr.mxu0 0.0
    %268 = vmatpush2.msra.mxu0 0.0
    %269 = vmatprep.subr.mxu0 0.0
    %270 = vmatpush2.msra.mxu0 0.0
    %271 = vmatprep.mubr.f32.mxu0 0.0
    %272 = vmatmul.mubr.f32.gmra.mxu0 %v195
    %v273 = vpop.f32.mrf.mxu0
    %v274 = vadd.f32 0.0, %v273
    %v275 = vpop.f32.mrf.mxu0
    %276 = vmatprep.mubr.f32.mxu0 0.0
    %277 = vmatmul.mubr.f32.gmra.mxu0 %v198
    %v278 = vpop.f32.mrf.mxu0
    %v279 = vadd.f32 0.0, %v278
    %v280 = vpop.f32.mrf.mxu0
    %281 = vmatprep.mubr.f32.mxu0 0.0
    %282 = vmatmul.mubr.f32.gmra.mxu0 %v201
    %v283 = vpop.f32.mrf.mxu0
    %v284 = vadd.f32 0.0, %v283
    %v285 = vpop.f32.mrf.mxu0
    %286 = vdwg.mxu0
    %v287 = vld [vmem:[%s4] sm:$0xff]
    %v288 = vld [vmem:[%s4 + $0x8] sm:$0xff]
    %v289 = vld [vmem:[%s4 + $0x10] sm:$0xff]
    %v290 = vld [vmem:[%s4 + $0x18] sm:$0xff]
    %v291 = vld [vmem:[#allocation8] sm:$0x1]
    %v293 = vlaneseq
    %v294 = vshrl.u32 %v293, 7
    %v295 = vsub.s32 0, %v294
    %v296 = vrot.slane %v291, %v295
    %vm298 = vcmask 261120
    %v300 = vsel %vm298, %v163, 0
    %v303 = vsel %vm298, %v164, 0
    %v306 = vsel %vm298, %v165, 0
    %308 = vmatprep.subr.mxu0 0.0
    %309 = vmatpush1.msra.mxu0 0.0
    %310 = vmatprep.subr.mxu0 0.0
    %311 = vmatpush1.msra.mxu0 0.0
    %312 = vmatprep.subr.mxu0 0.0
    %313 = vmatpush1.msra.mxu0 0.0
    %314 = vmatprep.subr.mxu0 0.0
    %315 = vmatpush1.msra.mxu0 0.0
    %316 = vmatprep.subr.mxu0 0.0
    %317 = vmatpush1.msra.mxu0 0.0
    %318 = vmatprep.subr.mxu0 0.0
    %319 = vmatpush1.msra.mxu0 0.0
    %320 = vmatprep.subr.mxu0 0.0
    %321 = vmatpush1.msra.mxu0 0.0
    %322 = vmatprep.subr.mxu0 0.0
    %323 = vmatpush1.msra.mxu0 0.0
    %324 = vmatprep.subr.mxu0 0.0
    %325 = vmatpush1.msra.mxu0 0.0
    %326 = vmatprep.subr.mxu0 0.0
    %327 = vmatpush1.msra.mxu0 0.0
    %328 = vmatprep.subr.mxu0 0.0
    %329 = vmatpush1.msra.mxu0 0.0
    %330 = vmatprep.subr.mxu0 0.0
    %331 = vmatpush1.msra.mxu0 0.0
    %332 = vmatprep.subr.mxu0 0.0
    %333 = vmatpush1.msra.mxu0 %v290
    %334 = vmatprep.subr.mxu0 0.0
    %335 = vmatpush1.msra.mxu0 %v289
    %336 = vmatprep.subr.mxu0 0.0
    %337 = vmatpush1.msra.mxu0 %v288
    %338 = vmatprep.subr.mxu0 0.0
    %339 = vmatpush1.msra.mxu0 %v287
    %340 = vmatprep.subr.mxu0 0.0
    %341 = vmatpush2.msra.mxu0 0.0
    %342 = vmatprep.subr.mxu0 0.0
    %343 = vmatpush2.msra.mxu0 0.0
    %344 = vmatprep.subr.mxu0 0.0
    %345 = vmatpush2.msra.mxu0 0.0
    %346 = vmatprep.subr.mxu0 0.0
    %347 = vmatpush2.msra.mxu0 0.0
    %348 = vmatprep.subr.mxu0 0.0
    %349 = vmatpush2.msra.mxu0 0.0
    %350 = vmatprep.subr.mxu0 0.0
    %351 = vmatpush2.msra.mxu0 0.0
    %352 = vmatprep.subr.mxu0 0.0
    %353 = vmatpush2.msra.mxu0 0.0
    %354 = vmatprep.subr.mxu0 0.0
    %355 = vmatpush2.msra.mxu0 0.0
    %356 = vmatprep.subr.mxu0 0.0
    %357 = vmatpush2.msra.mxu0 0.0
    %358 = vmatprep.subr.mxu0 0.0
    %359 = vmatpush2.msra.mxu0 0.0
    %360 = vmatprep.subr.mxu0 0.0
    %361 = vmatpush2.msra.mxu0 0.0
    %362 = vmatprep.subr.mxu0 0.0
    %363 = vmatpush2.msra.mxu0 0.0
    %364 = vmatprep.subr.mxu0 0.0
    %365 = vmatpush2.msra.mxu0 0.0
    %366 = vmatprep.subr.mxu0 0.0
    %367 = vmatpush2.msra.mxu0 0.0
    %368 = vmatprep.subr.mxu0 0.0
    %369 = vmatpush2.msra.mxu0 0.0
    %370 = vmatprep.subr.mxu0 0.0
    %371 = vmatpush2.msra.mxu0 0.0
    %372 = vmatprep.mubr.f32.mxu0 0.0
    %373 = vmatmul.mubr.f32.gmra.mxu0 %v300
    %v374 = vpop.f32.mrf.mxu0
    %v375 = vadd.f32 %v296, %v374
    %v376 = vpop.f32.mrf.mxu0
    %377 = vmatprep.mubr.f32.mxu0 0.0
    %378 = vmatmul.mubr.f32.gmra.mxu0 %v303
    %v379 = vpop.f32.mrf.mxu0
    %v380 = vadd.f32 %v296, %v379
    %v381 = vpop.f32.mrf.mxu0
    %382 = vmatprep.mubr.f32.mxu0 0.0
    %383 = vmatmul.mubr.f32.gmra.mxu0 %v306
    %v384 = vpop.f32.mrf.mxu0
    %v385 = vadd.f32 %v296, %v384
    %v386 = vpop.f32.mrf.mxu0
    %387 = vdwg.mxu0
    %v389 = vsel %vm298, %v166, 0
    %v392 = vsel %vm298, %v167, 0
    %v395 = vsel %vm298, %v168, 0
    %397 = vmatprep.subr.mxu0 0.0
    %398 = vmatpush1.msra.mxu0 0.0
    %399 = vmatprep.subr.mxu0 0.0
    %400 = vmatpush1.msra.mxu0 0.0
    %401 = vmatprep.subr.mxu0 0.0
    %402 = vmatpush1.msra.mxu0 0.0
    %403 = vmatprep.subr.mxu0 0.0
    %404 = vmatpush1.msra.mxu0 0.0
    %405 = vmatprep.subr.mxu0 0.0
    %406 = vmatpush1.msra.mxu0 0.0
    %407 = vmatprep.subr.mxu0 0.0
    %408 = vmatpush1.msra.mxu0 0.0
    %409 = vmatprep.subr.mxu0 0.0
    %410 = vmatpush1.msra.mxu0 0.0
    %411 = vmatprep.subr.mxu0 0.0
    %412 = vmatpush1.msra.mxu0 0.0
    %413 = vmatprep.subr.mxu0 0.0
    %414 = vmatpush1.msra.mxu0 0.0
    %415 = vmatprep.subr.mxu0 0.0
    %416 = vmatpush1.msra.mxu0 0.0
    %417 = vmatprep.subr.mxu0 0.0
    %418 = vmatpush1.msra.mxu0 0.0
    %419 = vmatprep.subr.mxu0 0.0
    %420 = vmatpush1.msra.mxu0 0.0
    %421 = vmatprep.subr.mxu0 0.0
    %422 = vmatpush1.msra.mxu0 %v290
    %423 = vmatprep.subr.mxu0 0.0
    %424 = vmatpush1.msra.mxu0 %v289
    %425 = vmatprep.subr.mxu0 0.0
    %426 = vmatpush1.msra.mxu0 %v288
    %427 = vmatprep.subr.mxu0 0.0
    %428 = vmatpush1.msra.mxu0 %v287
    %429 = vmatprep.subr.mxu0 0.0
    %430 = vmatpush2.msra.mxu0 0.0
    %431 = vmatprep.subr.mxu0 0.0
    %432 = vmatpush2.msra.mxu0 0.0
    %433 = vmatprep.subr.mxu0 0.0
    %434 = vmatpush2.msra.mxu0 0.0
    %435 = vmatprep.subr.mxu0 0.0
    %436 = vmatpush2.msra.mxu0 0.0
    %437 = vmatprep.subr.mxu0 0.0
    %438 = vmatpush2.msra.mxu0 0.0
    %439 = vmatprep.subr.mxu0 0.0
    %440 = vmatpush2.msra.mxu0 0.0
    %441 = vmatprep.subr.mxu0 0.0
    %442 = vmatpush2.msra.mxu0 0.0
    %443 = vmatprep.subr.mxu0 0.0
    %444 = vmatpush2.msra.mxu0 0.0
    %445 = vmatprep.subr.mxu0 0.0
    %446 = vmatpush2.msra.mxu0 0.0
    %447 = vmatprep.subr.mxu0 0.0
    %448 = vmatpush2.msra.mxu0 0.0
    %449 = vmatprep.subr.mxu0 0.0
    %450 = vmatpush2.msra.mxu0 0.0
    %451 = vmatprep.subr.mxu0 0.0
    %452 = vmatpush2.msra.mxu0 0.0
    %453 = vmatprep.subr.mxu0 0.0
    %454 = vmatpush2.msra.mxu0 0.0
    %455 = vmatprep.subr.mxu0 0.0
    %456 = vmatpush2.msra.mxu0 0.0
    %457 = vmatprep.subr.mxu0 0.0
    %458 = vmatpush2.msra.mxu0 0.0
    %459 = vmatprep.subr.mxu0 0.0
    %460 = vmatpush2.msra.mxu0 0.0
    %461 = vmatprep.mubr.f32.mxu0 0.0
    %462 = vmatmul.mubr.f32.gmra.mxu0 %v389
    %v463 = vpop.f32.mrf.mxu0
    %v464 = vadd.f32 %v296, %v463
    %v465 = vpop.f32.mrf.mxu0
    %466 = vmatprep.mubr.f32.mxu0 0.0
    %467 = vmatmul.mubr.f32.gmra.mxu0 %v392
    %v468 = vpop.f32.mrf.mxu0
    %v469 = vadd.f32 %v296, %v468
    %v470 = vpop.f32.mrf.mxu0
    %471 = vmatprep.mubr.f32.mxu0 0.0
    %472 = vmatmul.mubr.f32.gmra.mxu0 %v395
    %v473 = vpop.f32.mrf.mxu0
    %v474 = vadd.f32 %v296, %v473
    %v475 = vpop.f32.mrf.mxu0
    %476 = vdwg.mxu0
    %v477 = vld [vmem:[#allocation10] sm:$0xff]
    %v478 = vld [vmem:[#allocation10 + $0x8] sm:$0xff]
    %v479 = vld [vmem:[#allocation10 + $0x10] sm:$0xff]
    %v480 = vld [vmem:[#allocation10 + $0x18] sm:$0xff]
    %v481 = vld [vmem:[#allocation10 + $0x20] sm:$0xff]
    %v482 = vld [vmem:[#allocation10 + $0x28] sm:$0xff]
    %v483 = vld [vmem:[#allocation10 + $0x30] sm:$0xff]
    %v484 = vld [vmem:[#allocation10 + $0x38] sm:$0xff]
    %v485 = vld [vmem:[#allocation10 + $0x40] sm:$0xff]
    %v486 = vld [vmem:[#allocation10 + $0x48] sm:$0xff]
    %v487 = vld [vmem:[#allocation10 + $0x50] sm:$0xff]
    %v488 = vld [vmem:[#allocation10 + $0x58] sm:$0xff]
    %v489 = vld [vmem:[#allocation11] sm:$0xff]
    %v490 = vld [vmem:[#allocation11 + $0x8] sm:$0xff]
    %v491 = vld [vmem:[#allocation11 + $0x10] sm:$0xff]
    %v492 = vld [vmem:[#allocation11 + $0x18] sm:$0xff]
    %v493 = vld [vmem:[#allocation11 + $0x20] sm:$0xff]
    %v494 = vld [vmem:[#allocation11 + $0x28] sm:$0xff]
    %v495 = vld [vmem:[#allocation11 + $0x30] sm:$0xff]
    %v496 = vld [vmem:[#allocation11 + $0x38] sm:$0xff]
    %v497 = vld [vmem:[#allocation11 + $0x40] sm:$0xff]
    %v498 = vld [vmem:[#allocation11 + $0x48] sm:$0xff]
    %v499 = vld [vmem:[#allocation11 + $0x50] sm:$0xff]
    %v500 = vld [vmem:[#allocation11 + $0x58] sm:$0xff]
    %v502 = vsel %vm298, %v464, 0
    %v505 = vsel %vm298, %v469, 0
    %v508 = vsel %vm298, %v474, 0
    %510 = vmatprep.subr.mxu0 0.0
    %511 = vmatpush1.msra.mxu0 0.0
    %512 = vmatprep.subr.mxu0 0.0
    %513 = vmatpush1.msra.mxu0 0.0
    %514 = vmatprep.subr.mxu0 0.0
    %515 = vmatpush1.msra.mxu0 0.0
    %516 = vmatprep.subr.mxu0 0.0
    %517 = vmatpush1.msra.mxu0 0.0
    %518 = vmatprep.subr.mxu0 0.0
    %519 = vmatpush1.msra.mxu0 0.0
    %520 = vmatprep.subr.mxu0 0.0
    %521 = vmatpush1.msra.mxu0 0.0
    %522 = vmatprep.subr.mxu0 0.0
    %523 = vmatpush1.msra.mxu0 0.0
    %524 = vmatprep.subr.mxu0 0.0
    %525 = vmatpush1.msra.mxu0 0.0
    %526 = vmatprep.subr.mxu0 0.0
    %527 = vmatpush1.msra.mxu0 0.0
    %528 = vmatprep.subr.mxu0 0.0
    %529 = vmatpush1.msra.mxu0 0.0
    %530 = vmatprep.subr.mxu0 0.0
    %531 = vmatpush1.msra.mxu0 0.0
    %532 = vmatprep.subr.mxu0 0.0
    %533 = vmatpush1.msra.mxu0 0.0
    %534 = vmatprep.subr.mxu0 %v499
    %535 = vmatpush1.msra.mxu0 %v498
    %536 = vmatprep.subr.mxu0 %v496
    %537 = vmatpush1.msra.mxu0 %v495
    %538 = vmatprep.subr.mxu0 %v493
    %539 = vmatpush1.msra.mxu0 %v492
    %540 = vmatprep.subr.mxu0 %v490
    %541 = vmatpush1.msra.mxu0 %v489
    %542 = vmatprep.subr.mxu0 0.0
    %543 = vmatpush2.msra.mxu0 0.0
    %544 = vmatprep.subr.mxu0 0.0
    %545 = vmatpush2.msra.mxu0 0.0
    %546 = vmatprep.subr.mxu0 0.0
    %547 = vmatpush2.msra.mxu0 0.0
    %548 = vmatprep.subr.mxu0 0.0
    %549 = vmatpush2.msra.mxu0 0.0
    %550 = vmatprep.subr.mxu0 0.0
    %551 = vmatpush2.msra.mxu0 0.0
    %552 = vmatprep.subr.mxu0 0.0
    %553 = vmatpush2.msra.mxu0 0.0
    %554 = vmatprep.subr.mxu0 0.0
    %555 = vmatpush2.msra.mxu0 0.0
    %556 = vmatprep.subr.mxu0 0.0
    %557 = vmatpush2.msra.mxu0 0.0
    %558 = vmatprep.subr.mxu0 0.0
    %559 = vmatpush2.msra.mxu0 0.0
    %560 = vmatprep.subr.mxu0 0.0
    %561 = vmatpush2.msra.mxu0 0.0
    %562 = vmatprep.subr.mxu0 0.0
    %563 = vmatpush2.msra.mxu0 0.0
    %564 = vmatprep.subr.mxu0 0.0
    %565 = vmatpush2.msra.mxu0 0.0
    %566 = vmatprep.subr.mxu0 0.0
    %567 = vmatpush2.msra.mxu0 0.0
    %568 = vmatprep.subr.mxu0 0.0
    %569 = vmatpush2.msra.mxu0 0.0
    %570 = vmatprep.subr.mxu0 0.0
    %571 = vmatpush2.msra.mxu0 0.0
    %572 = vmatprep.subr.mxu0 0.0
    %573 = vmatpush2.msra.mxu0 0.0
    %574 = vmatprep.mubr.f32.mxu0 0.0
    %575 = vmatmul.mubr.f32.gmra.mxu0 %v502
    %v576 = vpop.f32.mrf.mxu0
    %v577 = vadd.f32 0.0, %v576
    %v578 = vpop.f32.mrf.mxu0
    %v579 = vadd.f32 0.0, %v578
    %580 = vmatprep.mubr.f32.mxu0 0.0
    %581 = vmatmul.mubr.f32.gmra.mxu0 %v505
    %v582 = vpop.f32.mrf.mxu0
    %v583 = vadd.f32 0.0, %v582
    %v584 = vpop.f32.mrf.mxu0
    %v585 = vadd.f32 0.0, %v584
    %586 = vmatprep.mubr.f32.mxu0 0.0
    %587 = vmatmul.mubr.f32.gmra.mxu0 %v508
    %v588 = vpop.f32.mrf.mxu0
    %v589 = vadd.f32 0.0, %v588
    %v590 = vpop.f32.mrf.mxu0
    %v591 = vadd.f32 0.0, %v590
    %592 = vdwg.mxu0
    %593 = vmatprep.subr.mxu0 0.0
    %594 = vmatpush1.msra.mxu0 0.0
    %595 = vmatprep.subr.mxu0 0.0
    %596 = vmatpush1.msra.mxu0 0.0
    %597 = vmatprep.subr.mxu0 0.0
    %598 = vmatpush1.msra.mxu0 0.0
    %599 = vmatprep.subr.mxu0 0.0
    %600 = vmatpush1.msra.mxu0 0.0
    %601 = vmatprep.subr.mxu0 0.0
    %602 = vmatpush1.msra.mxu0 0.0
    %603 = vmatprep.subr.mxu0 0.0
    %604 = vmatpush1.msra.mxu0 0.0
    %605 = vmatprep.subr.mxu0 0.0
    %606 = vmatpush1.msra.mxu0 0.0
    %607 = vmatprep.subr.mxu0 0.0
    %608 = vmatpush1.msra.mxu0 0.0
    %609 = vmatprep.subr.mxu0 0.0
    %610 = vmatpush1.msra.mxu0 0.0
    %611 = vmatprep.subr.mxu0 0.0
    %612 = vmatpush1.msra.mxu0 0.0
    %613 = vmatprep.subr.mxu0 0.0
    %614 = vmatpush1.msra.mxu0 0.0
    %615 = vmatprep.subr.mxu0 0.0
    %616 = vmatpush1.msra.mxu0 0.0
    %617 = vmatprep.subr.mxu0 0.0
    %618 = vmatpush1.msra.mxu0 %v500
    %619 = vmatprep.subr.mxu0 0.0
    %620 = vmatpush1.msra.mxu0 %v497
    %621 = vmatprep.subr.mxu0 0.0
    %622 = vmatpush1.msra.mxu0 %v494
    %623 = vmatprep.subr.mxu0 0.0
    %624 = vmatpush1.msra.mxu0 %v491
    %625 = vmatprep.subr.mxu0 0.0
    %626 = vmatpush2.msra.mxu0 0.0
    %627 = vmatprep.subr.mxu0 0.0
    %628 = vmatpush2.msra.mxu0 0.0
    %629 = vmatprep.subr.mxu0 0.0
    %630 = vmatpush2.msra.mxu0 0.0
    %631 = vmatprep.subr.mxu0 0.0
    %632 = vmatpush2.msra.mxu0 0.0
    %633 = vmatprep.subr.mxu0 0.0
    %634 = vmatpush2.msra.mxu0 0.0
    %635 = vmatprep.subr.mxu0 0.0
    %636 = vmatpush2.msra.mxu0 0.0
    %637 = vmatprep.subr.mxu0 0.0
    %638 = vmatpush2.msra.mxu0 0.0
    %639 = vmatprep.subr.mxu0 0.0
    %640 = vmatpush2.msra.mxu0 0.0
    %641 = vmatprep.subr.mxu0 0.0
    %642 = vmatpush2.msra.mxu0 0.0
    %643 = vmatprep.subr.mxu0 0.0
    %644 = vmatpush2.msra.mxu0 0.0
    %645 = vmatprep.subr.mxu0 0.0
    %646 = vmatpush2.msra.mxu0 0.0
    %647 = vmatprep.subr.mxu0 0.0
    %648 = vmatpush2.msra.mxu0 0.0
    %649 = vmatprep.subr.mxu0 0.0
    %650 = vmatpush2.msra.mxu0 0.0
    %651 = vmatprep.subr.mxu0 0.0
    %652 = vmatpush2.msra.mxu0 0.0
    %653 = vmatprep.subr.mxu0 0.0
    %654 = vmatpush2.msra.mxu0 0.0
    %655 = vmatprep.subr.mxu0 0.0
    %656 = vmatpush2.msra.mxu0 0.0
    %657 = vmatprep.mubr.f32.mxu0 0.0
    %658 = vmatmul.mubr.f32.gmra.mxu0 %v502
    %v659 = vpop.f32.mrf.mxu0
    %v660 = vadd.f32 0.0, %v659
    %v661 = vpop.f32.mrf.mxu0
    %662 = vmatprep.mubr.f32.mxu0 0.0
    %663 = vmatmul.mubr.f32.gmra.mxu0 %v505
    %v664 = vpop.f32.mrf.mxu0
    %v665 = vadd.f32 0.0, %v664
    %v666 = vpop.f32.mrf.mxu0
    %667 = vmatprep.mubr.f32.mxu0 0.0
    %668 = vmatmul.mubr.f32.gmra.mxu0 %v508
    %v669 = vpop.f32.mrf.mxu0
    %v670 = vadd.f32 0.0, %v669
    %v671 = vpop.f32.mrf.mxu0
    %672 = vdwg.mxu0
    %v674 = vsel %vm298, %v375, 0
    %v677 = vsel %vm298, %v380, 0
    %v680 = vsel %vm298, %v385, 0
    %682 = vmatprep.subr.mxu0 0.0
    %683 = vmatpush1.msra.mxu0 0.0
    %684 = vmatprep.subr.mxu0 0.0
    %685 = vmatpush1.msra.mxu0 0.0
    %686 = vmatprep.subr.mxu0 0.0
    %687 = vmatpush1.msra.mxu0 0.0
    %688 = vmatprep.subr.mxu0 0.0
    %689 = vmatpush1.msra.mxu0 0.0
    %690 = vmatprep.subr.mxu0 0.0
    %691 = vmatpush1.msra.mxu0 0.0
    %692 = vmatprep.subr.mxu0 0.0
    %693 = vmatpush1.msra.mxu0 0.0
    %694 = vmatprep.subr.mxu0 0.0
    %695 = vmatpush1.msra.mxu0 0.0
    %696 = vmatprep.subr.mxu0 0.0
    %697 = vmatpush1.msra.mxu0 0.0
    %698 = vmatprep.subr.mxu0 0.0
    %699 = vmatpush1.msra.mxu0 0.0
    %700 = vmatprep.subr.mxu0 0.0
    %701 = vmatpush1.msra.mxu0 0.0
    %702 = vmatprep.subr.mxu0 0.0
    %703 = vmatpush1.msra.mxu0 0.0
    %704 = vmatprep.subr.mxu0 0.0
    %705 = vmatpush1.msra.mxu0 0.0
    %706 = vmatprep.subr.mxu0 %v487
    %707 = vmatpush1.msra.mxu0 %v486
    %708 = vmatprep.subr.mxu0 %v484
    %709 = vmatpush1.msra.mxu0 %v483
    %710 = vmatprep.subr.mxu0 %v481
    %711 = vmatpush1.msra.mxu0 %v480
    %712 = vmatprep.subr.mxu0 %v478
    %713 = vmatpush1.msra.mxu0 %v477
    %714 = vmatprep.subr.mxu0 0.0
    %715 = vmatpush2.msra.mxu0 0.0
    %716 = vmatprep.subr.mxu0 0.0
    %717 = vmatpush2.msra.mxu0 0.0
    %718 = vmatprep.subr.mxu0 0.0
    %719 = vmatpush2.msra.mxu0 0.0
    %720 = vmatprep.subr.mxu0 0.0
    %721 = vmatpush2.msra.mxu0 0.0
    %722 = vmatprep.subr.mxu0 0.0
    %723 = vmatpush2.msra.mxu0 0.0
    %724 = vmatprep.subr.mxu0 0.0
    %725 = vmatpush2.msra.mxu0 0.0
    %726 = vmatprep.subr.mxu0 0.0
    %727 = vmatpush2.msra.mxu0 0.0
    %728 = vmatprep.subr.mxu0 0.0
    %729 = vmatpush2.msra.mxu0 0.0
    %730 = vmatprep.subr.mxu0 0.0
    %731 = vmatpush2.msra.mxu0 0.0
    %732 = vmatprep.subr.mxu0 0.0
    %733 = vmatpush2.msra.mxu0 0.0
    %734 = vmatprep.subr.mxu0 0.0
    %735 = vmatpush2.msra.mxu0 0.0
    %736 = vmatprep.subr.mxu0 0.0
    %737 = vmatpush2.msra.mxu0 0.0
    %738 = vmatprep.subr.mxu0 0.0
    %739 = vmatpush2.msra.mxu0 0.0
    %740 = vmatprep.subr.mxu0 0.0
    %741 = vmatpush2.msra.mxu0 0.0
    %742 = vmatprep.subr.mxu0 0.0
    %743 = vmatpush2.msra.mxu0 0.0
    %744 = vmatprep.subr.mxu0 0.0
    %745 = vmatpush2.msra.mxu0 0.0
    %746 = vmatprep.mubr.f32.mxu0 0.0
    %747 = vmatmul.mubr.f32.gmra.mxu0 %v674
    %v748 = vpop.f32.mrf.mxu0
    %v749 = vadd.f32 %v577, %v748
    %v750 = vpop.f32.mrf.mxu0
    %v751 = vadd.f32 %v579, %v750
    %752 = vmatprep.mubr.f32.mxu0 0.0
    %753 = vmatmul.mubr.f32.gmra.mxu0 %v677
    %v754 = vpop.f32.mrf.mxu0
    %v755 = vadd.f32 %v583, %v754
    %v756 = vpop.f32.mrf.mxu0
    %v757 = vadd.f32 %v585, %v756
    %758 = vmatprep.mubr.f32.mxu0 0.0
    %759 = vmatmul.mubr.f32.gmra.mxu0 %v680
    %v760 = vpop.f32.mrf.mxu0
    %v761 = vadd.f32 %v589, %v760
    %v762 = vpop.f32.mrf.mxu0
    %v763 = vadd.f32 %v591, %v762
    %764 = vdwg.mxu0
    %765 = vmatprep.subr.mxu0 0.0
    %766 = vmatpush1.msra.mxu0 0.0
    %767 = vmatprep.subr.mxu0 0.0
    %768 = vmatpush1.msra.mxu0 0.0
    %769 = vmatprep.subr.mxu0 0.0
    %770 = vmatpush1.msra.mxu0 0.0
    %771 = vmatprep.subr.mxu0 0.0
    %772 = vmatpush1.msra.mxu0 0.0
    %773 = vmatprep.subr.mxu0 0.0
    %774 = vmatpush1.msra.mxu0 0.0
    %775 = vmatprep.subr.mxu0 0.0
    %776 = vmatpush1.msra.mxu0 0.0
    %777 = vmatprep.subr.mxu0 0.0
    %778 = vmatpush1.msra.mxu0 0.0
    %779 = vmatprep.subr.mxu0 0.0
    %780 = vmatpush1.msra.mxu0 0.0
    %781 = vmatprep.subr.mxu0 0.0
    %782 = vmatpush1.msra.mxu0 0.0
    %783 = vmatprep.subr.mxu0 0.0
    %784 = vmatpush1.msra.mxu0 0.0
    %785 = vmatprep.subr.mxu0 0.0
    %786 = vmatpush1.msra.mxu0 0.0
    %787 = vmatprep.subr.mxu0 0.0
    %788 = vmatpush1.msra.mxu0 0.0
    %789 = vmatprep.subr.mxu0 0.0
    %790 = vmatpush1.msra.mxu0 %v488
    %791 = vmatprep.subr.mxu0 0.0
    %792 = vmatpush1.msra.mxu0 %v485
    %793 = vmatprep.subr.mxu0 0.0
    %794 = vmatpush1.msra.mxu0 %v482
    %795 = vmatprep.subr.mxu0 0.0
    %796 = vmatpush1.msra.mxu0 %v479
    %797 = vmatprep.subr.mxu0 0.0
    %798 = vmatpush2.msra.mxu0 0.0
    %799 = vmatprep.subr.mxu0 0.0
    %800 = vmatpush2.msra.mxu0 0.0
    %801 = vmatprep.subr.mxu0 0.0
    %802 = vmatpush2.msra.mxu0 0.0
    %803 = vmatprep.subr.mxu0 0.0
    %804 = vmatpush2.msra.mxu0 0.0
    %805 = vmatprep.subr.mxu0 0.0
    %806 = vmatpush2.msra.mxu0 0.0
    %807 = vmatprep.subr.mxu0 0.0
    %808 = vmatpush2.msra.mxu0 0.0
    %809 = vmatprep.subr.mxu0 0.0
    %810 = vmatpush2.msra.mxu0 0.0
    %811 = vmatprep.subr.mxu0 0.0
    %812 = vmatpush2.msra.mxu0 0.0
    %813 = vmatprep.subr.mxu0 0.0
    %814 = vmatpush2.msra.mxu0 0.0
    %815 = vmatprep.subr.mxu0 0.0
    %816 = vmatpush2.msra.mxu0 0.0
    %817 = vmatprep.subr.mxu0 0.0
    %818 = vmatpush2.msra.mxu0 0.0
    %819 = vmatprep.subr.mxu0 0.0
    %820 = vmatpush2.msra.mxu0 0.0
    %821 = vmatprep.subr.mxu0 0.0
    %822 = vmatpush2.msra.mxu0 0.0
    %823 = vmatprep.subr.mxu0 0.0
    %824 = vmatpush2.msra.mxu0 0.0
    %825 = vmatprep.subr.mxu0 0.0
    %826 = vmatpush2.msra.mxu0 0.0
    %827 = vmatprep.subr.mxu0 0.0
    %828 = vmatpush2.msra.mxu0 0.0
    %829 = vmatprep.mubr.f32.mxu0 0.0
    %830 = vmatmul.mubr.f32.gmra.mxu0 %v674
    %v831 = vpop.f32.mrf.mxu0
    %v832 = vadd.f32 %v660, %v831
    %v833 = vpop.f32.mrf.mxu0
    %834 = vmatprep.mubr.f32.mxu0 0.0
    %835 = vmatmul.mubr.f32.gmra.mxu0 %v677
    %v836 = vpop.f32.mrf.mxu0
    %v837 = vadd.f32 %v665, %v836
    %v838 = vpop.f32.mrf.mxu0
    %839 = vmatprep.mubr.f32.mxu0 0.0
    %840 = vmatmul.mubr.f32.gmra.mxu0 %v680
    %v841 = vpop.f32.mrf.mxu0
    %v842 = vadd.f32 %v670, %v841
    %v843 = vpop.f32.mrf.mxu0
    %844 = vdwg.mxu0
    %v845 = vld [vmem:[#allocation13] sm:$0xff]
    %v846 = vld [vmem:[#allocation13 + $0x8] sm:$0xff]
    %v847 = vld [vmem:[#allocation13 + $0x10] sm:$0xff]
    %v848 = vld [vmem:[#allocation13 + $0x18] sm:$0xff]
    %v849 = vld [vmem:[#allocation13 + $0x20] sm:$0xff]
    %v850 = vld [vmem:[#allocation13 + $0x28] sm:$0xff]
    %v851 = vld [vmem:[#allocation13 + $0x30] sm:$0xff]
    %v852 = vld [vmem:[#allocation13 + $0x38] sm:$0xff]
    %v853 = vld [vmem:[#allocation13 + $0x40] sm:$0xff]
    %v854 = vld [vmem:[#allocation13 + $0x48] sm:$0xff]
    %v855 = vld [vmem:[#allocation13 + $0x50] sm:$0xff]
    %v856 = vld [vmem:[#allocation13 + $0x58] sm:$0xff]
    %v858 = vsel %vm298, %v274, 0
    %v861 = vsel %vm298, %v279, 0
    %v864 = vsel %vm298, %v284, 0
    %866 = vmatprep.subr.mxu0 0.0
    %867 = vmatpush1.msra.mxu0 0.0
    %868 = vmatprep.subr.mxu0 0.0
    %869 = vmatpush1.msra.mxu0 0.0
    %870 = vmatprep.subr.mxu0 0.0
    %871 = vmatpush1.msra.mxu0 0.0
    %872 = vmatprep.subr.mxu0 0.0
    %873 = vmatpush1.msra.mxu0 0.0
    %874 = vmatprep.subr.mxu0 0.0
    %875 = vmatpush1.msra.mxu0 0.0
    %876 = vmatprep.subr.mxu0 0.0
    %877 = vmatpush1.msra.mxu0 0.0
    %878 = vmatprep.subr.mxu0 0.0
    %879 = vmatpush1.msra.mxu0 0.0
    %880 = vmatprep.subr.mxu0 0.0
    %881 = vmatpush1.msra.mxu0 0.0
    %882 = vmatprep.subr.mxu0 0.0
    %883 = vmatpush1.msra.mxu0 0.0
    %884 = vmatprep.subr.mxu0 0.0
    %885 = vmatpush1.msra.mxu0 0.0
    %886 = vmatprep.subr.mxu0 0.0
    %887 = vmatpush1.msra.mxu0 0.0
    %888 = vmatprep.subr.mxu0 0.0
    %889 = vmatpush1.msra.mxu0 0.0
    %890 = vmatprep.subr.mxu0 %v855
    %891 = vmatpush1.msra.mxu0 %v854
    %892 = vmatprep.subr.mxu0 %v852
    %893 = vmatpush1.msra.mxu0 %v851
    %894 = vmatprep.subr.mxu0 %v849
    %895 = vmatpush1.msra.mxu0 %v848
    %896 = vmatprep.subr.mxu0 %v846
    %897 = vmatpush1.msra.mxu0 %v845
    %898 = vmatprep.subr.mxu0 0.0
    %899 = vmatpush2.msra.mxu0 0.0
    %900 = vmatprep.subr.mxu0 0.0
    %901 = vmatpush2.msra.mxu0 0.0
    %902 = vmatprep.subr.mxu0 0.0
    %903 = vmatpush2.msra.mxu0 0.0
    %904 = vmatprep.subr.mxu0 0.0
    %905 = vmatpush2.msra.mxu0 0.0
    %906 = vmatprep.subr.mxu0 0.0
    %907 = vmatpush2.msra.mxu0 0.0
    %908 = vmatprep.subr.mxu0 0.0
    %909 = vmatpush2.msra.mxu0 0.0
    %910 = vmatprep.subr.mxu0 0.0
    %911 = vmatpush2.msra.mxu0 0.0
    %912 = vmatprep.subr.mxu0 0.0
    %913 = vmatpush2.msra.mxu0 0.0
    %914 = vmatprep.subr.mxu0 0.0
    %915 = vmatpush2.msra.mxu0 0.0
    %916 = vmatprep.subr.mxu0 0.0
    %917 = vmatpush2.msra.mxu0 0.0
    %918 = vmatprep.subr.mxu0 0.0
    %919 = vmatpush2.msra.mxu0 0.0
    %920 = vmatprep.subr.mxu0 0.0
    %921 = vmatpush2.msra.mxu0 0.0
    %922 = vmatprep.subr.mxu0 0.0
    %923 = vmatpush2.msra.mxu0 0.0
    %924 = vmatprep.subr.mxu0 0.0
    %925 = vmatpush2.msra.mxu0 0.0
    %926 = vmatprep.subr.mxu0 0.0
    %927 = vmatpush2.msra.mxu0 0.0
    %928 = vmatprep.subr.mxu0 0.0
    %929 = vmatpush2.msra.mxu0 0.0
    %930 = vmatprep.mubr.f32.mxu0 0.0
    %931 = vmatmul.mubr.f32.gmra.mxu0 %v858
    %v932 = vpop.f32.mrf.mxu0
    %v933 = vadd.f32 0.0, %v932
    %v934 = vpop.f32.mrf.mxu0
    %v935 = vadd.f32 0.0, %v934
    %936 = vmatprep.mubr.f32.mxu0 0.0
    %937 = vmatmul.mubr.f32.gmra.mxu0 %v861
    %v938 = vpop.f32.mrf.mxu0
    %v939 = vadd.f32 0.0, %v938
    %v940 = vpop.f32.mrf.mxu0
    %v941 = vadd.f32 0.0, %v940
    %942 = vmatprep.mubr.f32.mxu0 0.0
    %943 = vmatmul.mubr.f32.gmra.mxu0 %v864
    %v944 = vpop.f32.mrf.mxu0
    %v945 = vadd.f32 0.0, %v944
    %v946 = vpop.f32.mrf.mxu0
    %v947 = vadd.f32 0.0, %v946
    %948 = vdwg.mxu0
    %949 = vmatprep.subr.mxu0 0.0
    %950 = vmatpush1.msra.mxu0 0.0
    %951 = vmatprep.subr.mxu0 0.0
    %952 = vmatpush1.msra.mxu0 0.0
    %953 = vmatprep.subr.mxu0 0.0
    %954 = vmatpush1.msra.mxu0 0.0
    %955 = vmatprep.subr.mxu0 0.0
    %956 = vmatpush1.msra.mxu0 0.0
    %957 = vmatprep.subr.mxu0 0.0
    %958 = vmatpush1.msra.mxu0 0.0
    %959 = vmatprep.subr.mxu0 0.0
    %960 = vmatpush1.msra.mxu0 0.0
    %961 = vmatprep.subr.mxu0 0.0
    %962 = vmatpush1.msra.mxu0 0.0
    %963 = vmatprep.subr.mxu0 0.0
    %964 = vmatpush1.msra.mxu0 0.0
    %965 = vmatprep.subr.mxu0 0.0
    %966 = vmatpush1.msra.mxu0 0.0
    %967 = vmatprep.subr.mxu0 0.0
    %968 = vmatpush1.msra.mxu0 0.0
    %969 = vmatprep.subr.mxu0 0.0
    %970 = vmatpush1.msra.mxu0 0.0
    %971 = vmatprep.subr.mxu0 0.0
    %972 = vmatpush1.msra.mxu0 0.0
    %973 = vmatprep.subr.mxu0 0.0
    %974 = vmatpush1.msra.mxu0 %v856
    %975 = vmatprep.subr.mxu0 0.0
    %976 = vmatpush1.msra.mxu0 %v853
    %977 = vmatprep.subr.mxu0 0.0
    %978 = vmatpush1.msra.mxu0 %v850
    %979 = vmatprep.subr.mxu0 0.0
    %980 = vmatpush1.msra.mxu0 %v847
    %981 = vmatprep.subr.mxu0 0.0
    %982 = vmatpush2.msra.mxu0 0.0
    %983 = vmatprep.subr.mxu0 0.0
    %984 = vmatpush2.msra.mxu0 0.0
    %985 = vmatprep.subr.mxu0 0.0
    %986 = vmatpush2.msra.mxu0 0.0
    %987 = vmatprep.subr.mxu0 0.0
    %988 = vmatpush2.msra.mxu0 0.0
    %989 = vmatprep.subr.mxu0 0.0
    %990 = vmatpush2.msra.mxu0 0.0
    %991 = vmatprep.subr.mxu0 0.0
    %992 = vmatpush2.msra.mxu0 0.0
    %993 = vmatprep.subr.mxu0 0.0
    %994 = vmatpush2.msra.mxu0 0.0
    %995 = vmatprep.subr.mxu0 0.0
    %996 = vmatpush2.msra.mxu0 0.0
    %997 = vmatprep.subr.mxu0 0.0
    %998 = vmatpush2.msra.mxu0 0.0
    %999 = vmatprep.subr.mxu0 0.0
    %1000 = vmatpush2.msra.mxu0 0.0
    %1001 = vmatprep.subr.mxu0 0.0
    %1002 = vmatpush2.msra.mxu0 0.0
    %1003 = vmatprep.subr.mxu0 0.0
    %1004 = vmatpush2.msra.mxu0 0.0
    %1005 = vmatprep.subr.mxu0 0.0
    %1006 = vmatpush2.msra.mxu0 0.0
    %1007 = vmatprep.subr.mxu0 0.0
    %1008 = vmatpush2.msra.mxu0 0.0
    %1009 = vmatprep.subr.mxu0 0.0
    %1010 = vmatpush2.msra.mxu0 0.0
    %1011 = vmatprep.subr.mxu0 0.0
    %1012 = vmatpush2.msra.mxu0 0.0
    %1013 = vmatprep.mubr.f32.mxu0 0.0
    %1014 = vmatmul.mubr.f32.gmra.mxu0 %v858
    %v1015 = vpop.f32.mrf.mxu0
    %v1016 = vadd.f32 0.0, %v1015
    %v1017 = vpop.f32.mrf.mxu0
    %1018 = vmatprep.mubr.f32.mxu0 0.0
    %1019 = vmatmul.mubr.f32.gmra.mxu0 %v861
    %v1020 = vpop.f32.mrf.mxu0
    %v1021 = vadd.f32 0.0, %v1020
    %v1022 = vpop.f32.mrf.mxu0
    %1023 = vmatprep.mubr.f32.mxu0 0.0
    %1024 = vmatmul.mubr.f32.gmra.mxu0 %v864
    %v1025 = vpop.f32.mrf.mxu0
    %v1026 = vadd.f32 0.0, %v1025
    %v1027 = vpop.f32.mrf.mxu0
    %1028 = vdwg.mxu0
    %v1029 = vadd.f32 %v749, %v933
    %v1030 = vadd.f32 %v751, %v935
    %v1031 = vadd.f32 %v832, %v1016
    %v1032 = vadd.f32 %v755, %v939
    %v1033 = vadd.f32 %v757, %v941
    %v1034 = vadd.f32 %v837, %v1021
    %v1035 = vadd.f32 %v761, %v945
    %v1036 = vadd.f32 %v763, %v947
    %v1037 = vadd.f32 %v842, %v1026
    %v1038 = vld [vmem:[%s9] sm:$0x7]
    %v1040 = vlaneseq
    %v1041 = vshrl.u32 %v1040, 7
    %v1042 = vsub.s32 0, %v1041
    %v1043 = vrot.slane %v1038, %v1042
    %v1044 = vlaneseq
    %v1045 = vshrl.u32 %v1044, 7
    %v1046 = vsub.s32 1, %v1045
    %v1047 = vrot.slane %v1038, %v1046
    %v1048 = vlaneseq
    %v1049 = vshrl.u32 %v1048, 7
    %v1050 = vsub.s32 2, %v1049
    %v1051 = vrot.slane %v1038, %v1050
    %v1055 = vadd.f32 %v1029, %v1043
    %v1056 = vadd.f32 %v1030, %v1047
    %v1057 = vadd.f32 %v1031, %v1051
    %v1058 = vadd.f32 %v1032, %v1043
    %v1059 = vadd.f32 %v1033, %v1047
    %v1060 = vadd.f32 %v1034, %v1051
    %v1061 = vadd.f32 %v1035, %v1043
    %v1062 = vadd.f32 %v1036, %v1047
    %v1063 = vadd.f32 %v1037, %v1051
    %v1064 = vtanh.pop %v1055
    %v1065 = vtanh.pop %v1056
    %v1066 = vtanh.pop %v1057
    %v1067 = vtanh.pop %v1058
    %v1068 = vtanh.pop %v1059
    %v1069 = vtanh.pop %v1060
    %v1070 = vtanh.pop %v1061
    %v1071 = vtanh.pop %v1062
    %v1072 = vtanh.pop %v1063
    %v1073 = vadd.f32 %v274, %v1064
    %v1074 = vadd.f32 %v279, %v1067
    %v1075 = vadd.f32 %v284, %v1070
    %v1076 = vadd.f32 %v163, %v1065
    %v1077 = vadd.f32 %v164, %v1068
    %v1078 = vadd.f32 %v165, %v1071
    %v1079 = vadd.f32 %v166, %v1066
    %v1080 = vadd.f32 %v167, %v1069
    %v1081 = vadd.f32 %v168, %v1072
    %v1082 = vld [vmem:[#allocation14] sm:$0xff]
    %v1083 = vld [vmem:[#allocation14 + $0x8] sm:$0xff]
    %v1084 = vld [vmem:[#allocation14 + $0x10] sm:$0xff]
    %v1085 = vld [vmem:[#allocation14 + $0x18] sm:$0xff]
    %v1086 = vld [vmem:[#allocation16] sm:$0xff]
    %v1087 = vld [vmem:[#allocation16 + $0x8] sm:$0xff]
    %v1088 = vld [vmem:[#allocation16 + $0x10] sm:$0xff]
    %v1089 = vld [vmem:[#allocation16 + $0x18] sm:$0xff]
    %v1091 = vsel %vm298, %v1079, 0
    %v1094 = vsel %vm298, %v1080, 0
    %v1097 = vsel %vm298, %v1081, 0
    %1099 = vmatprep.subr.mxu0 0.0
    %1100 = vmatpush1.msra.mxu0 0.0
    %1101 = vmatprep.subr.mxu0 0.0
    %1102 = vmatpush1.msra.mxu0 0.0
    %1103 = vmatprep.subr.mxu0 0.0
    %1104 = vmatpush1.msra.mxu0 0.0
    %1105 = vmatprep.subr.mxu0 0.0
    %1106 = vmatpush1.msra.mxu0 0.0
    %1107 = vmatprep.subr.mxu0 0.0
    %1108 = vmatpush1.msra.mxu0 0.0
    %1109 = vmatprep.subr.mxu0 0.0
    %1110 = vmatpush1.msra.mxu0 0.0
    %1111 = vmatprep.subr.mxu0 0.0
    %1112 = vmatpush1.msra.mxu0 0.0
    %1113 = vmatprep.subr.mxu0 0.0
    %1114 = vmatpush1.msra.mxu0 0.0
    %1115 = vmatprep.subr.mxu0 0.0
    %1116 = vmatpush1.msra.mxu0 0.0
    %1117 = vmatprep.subr.mxu0 0.0
    %1118 = vmatpush1.msra.mxu0 0.0
    %1119 = vmatprep.subr.mxu0 0.0
    %1120 = vmatpush1.msra.mxu0 0.0
    %1121 = vmatprep.subr.mxu0 0.0
    %1122 = vmatpush1.msra.mxu0 0.0
    %1123 = vmatprep.subr.mxu0 0.0
    %1124 = vmatpush1.msra.mxu0 %v1089
    %1125 = vmatprep.subr.mxu0 0.0
    %1126 = vmatpush1.msra.mxu0 %v1088
    %1127 = vmatprep.subr.mxu0 0.0
    %1128 = vmatpush1.msra.mxu0 %v1087
    %1129 = vmatprep.subr.mxu0 0.0
    %1130 = vmatpush1.msra.mxu0 %v1086
    %1131 = vmatprep.subr.mxu0 0.0
    %1132 = vmatpush2.msra.mxu0 0.0
    %1133 = vmatprep.subr.mxu0 0.0
    %1134 = vmatpush2.msra.mxu0 0.0
    %1135 = vmatprep.subr.mxu0 0.0
    %1136 = vmatpush2.msra.mxu0 0.0
    %1137 = vmatprep.subr.mxu0 0.0
    %1138 = vmatpush2.msra.mxu0 0.0
    %1139 = vmatprep.subr.mxu0 0.0
    %1140 = vmatpush2.msra.mxu0 0.0
    %1141 = vmatprep.subr.mxu0 0.0
    %1142 = vmatpush2.msra.mxu0 0.0
    %1143 = vmatprep.subr.mxu0 0.0
    %1144 = vmatpush2.msra.mxu0 0.0
    %1145 = vmatprep.subr.mxu0 0.0
    %1146 = vmatpush2.msra.mxu0 0.0
    %1147 = vmatprep.subr.mxu0 0.0
    %1148 = vmatpush2.msra.mxu0 0.0
    %1149 = vmatprep.subr.mxu0 0.0
    %1150 = vmatpush2.msra.mxu0 0.0
    %1151 = vmatprep.subr.mxu0 0.0
    %1152 = vmatpush2.msra.mxu0 0.0
    %1153 = vmatprep.subr.mxu0 0.0
    %1154 = vmatpush2.msra.mxu0 0.0
    %1155 = vmatprep.subr.mxu0 0.0
    %1156 = vmatpush2.msra.mxu0 0.0
    %1157 = vmatprep.subr.mxu0 0.0
    %1158 = vmatpush2.msra.mxu0 0.0
    %1159 = vmatprep.subr.mxu0 0.0
    %1160 = vmatpush2.msra.mxu0 0.0
    %1161 = vmatprep.subr.mxu0 0.0
    %1162 = vmatpush2.msra.mxu0 0.0
    %1163 = vmatprep.mubr.f32.mxu0 0.0
    %1164 = vmatmul.mubr.f32.gmra.mxu0 %v1091
    %v1165 = vpop.f32.mrf.mxu0
    %v1166 = vadd.f32 0.0, %v1165
    %v1167 = vpop.f32.mrf.mxu0
    %1168 = vmatprep.mubr.f32.mxu0 0.0
    %1169 = vmatmul.mubr.f32.gmra.mxu0 %v1094
    %v1170 = vpop.f32.mrf.mxu0
    %v1171 = vadd.f32 0.0, %v1170
    %v1172 = vpop.f32.mrf.mxu0
    %1173 = vmatprep.mubr.f32.mxu0 0.0
    %1174 = vmatmul.mubr.f32.gmra.mxu0 %v1097
    %v1175 = vpop.f32.mrf.mxu0
    %v1176 = vadd.f32 0.0, %v1175
    %v1177 = vpop.f32.mrf.mxu0
    %1178 = vdwg.mxu0
    %v1180 = vsel %vm298, %v1076, 0
    %v1183 = vsel %vm298, %v1077, 0
    %v1186 = vsel %vm298, %v1078, 0
    %1188 = vmatprep.subr.mxu0 0.0
    %1189 = vmatpush1.msra.mxu0 0.0
    %1190 = vmatprep.subr.mxu0 0.0
    %1191 = vmatpush1.msra.mxu0 0.0
    %1192 = vmatprep.subr.mxu0 0.0
    %1193 = vmatpush1.msra.mxu0 0.0
    %1194 = vmatprep.subr.mxu0 0.0
    %1195 = vmatpush1.msra.mxu0 0.0
    %1196 = vmatprep.subr.mxu0 0.0
    %1197 = vmatpush1.msra.mxu0 0.0
    %1198 = vmatprep.subr.mxu0 0.0
    %1199 = vmatpush1.msra.mxu0 0.0
    %1200 = vmatprep.subr.mxu0 0.0
    %1201 = vmatpush1.msra.mxu0 0.0
    %1202 = vmatprep.subr.mxu0 0.0
    %1203 = vmatpush1.msra.mxu0 0.0
    %1204 = vmatprep.subr.mxu0 0.0
    %1205 = vmatpush1.msra.mxu0 0.0
    %1206 = vmatprep.subr.mxu0 0.0
    %1207 = vmatpush1.msra.mxu0 0.0
    %1208 = vmatprep.subr.mxu0 0.0
    %1209 = vmatpush1.msra.mxu0 0.0
    %1210 = vmatprep.subr.mxu0 0.0
    %1211 = vmatpush1.msra.mxu0 0.0
    %1212 = vmatprep.subr.mxu0 0.0
    %1213 = vmatpush1.msra.mxu0 %v1085
    %1214 = vmatprep.subr.mxu0 0.0
    %1215 = vmatpush1.msra.mxu0 %v1084
    %1216 = vmatprep.subr.mxu0 0.0
    %1217 = vmatpush1.msra.mxu0 %v1083
    %1218 = vmatprep.subr.mxu0 0.0
    %1219 = vmatpush1.msra.mxu0 %v1082
    %1220 = vmatprep.subr.mxu0 0.0
    %1221 = vmatpush2.msra.mxu0 0.0
    %1222 = vmatprep.subr.mxu0 0.0
    %1223 = vmatpush2.msra.mxu0 0.0
    %1224 = vmatprep.subr.mxu0 0.0
    %1225 = vmatpush2.msra.mxu0 0.0
    %1226 = vmatprep.subr.mxu0 0.0
    %1227 = vmatpush2.msra.mxu0 0.0
    %1228 = vmatprep.subr.mxu0 0.0
    %1229 = vmatpush2.msra.mxu0 0.0
    %1230 = vmatprep.subr.mxu0 0.0
    %1231 = vmatpush2.msra.mxu0 0.0
    %1232 = vmatprep.subr.mxu0 0.0
    %1233 = vmatpush2.msra.mxu0 0.0
    %1234 = vmatprep.subr.mxu0 0.0
    %1235 = vmatpush2.msra.mxu0 0.0
    %1236 = vmatprep.subr.mxu0 0.0
    %1237 = vmatpush2.msra.mxu0 0.0
    %1238 = vmatprep.subr.mxu0 0.0
    %1239 = vmatpush2.msra.mxu0 0.0
    %1240 = vmatprep.subr.mxu0 0.0
    %1241 = vmatpush2.msra.mxu0 0.0
    %1242 = vmatprep.subr.mxu0 0.0
    %1243 = vmatpush2.msra.mxu0 0.0
    %1244 = vmatprep.subr.mxu0 0.0
    %1245 = vmatpush2.msra.mxu0 0.0
    %1246 = vmatprep.subr.mxu0 0.0
    %1247 = vmatpush2.msra.mxu0 0.0
    %1248 = vmatprep.subr.mxu0 0.0
    %1249 = vmatpush2.msra.mxu0 0.0
    %1250 = vmatprep.subr.mxu0 0.0
    %1251 = vmatpush2.msra.mxu0 0.0
    %1252 = vmatprep.mubr.f32.mxu0 0.0
    %1253 = vmatmul.mubr.f32.gmra.mxu0 %v1180
    %v1254 = vpop.f32.mrf.mxu0
    %v1255 = vadd.f32 %v1166, %v1254
    %v1256 = vpop.f32.mrf.mxu0
    %1257 = vmatprep.mubr.f32.mxu0 0.0
    %1258 = vmatmul.mubr.f32.gmra.mxu0 %v1183
    %v1259 = vpop.f32.mrf.mxu0
    %v1260 = vadd.f32 %v1171, %v1259
    %v1261 = vpop.f32.mrf.mxu0
    %1262 = vmatprep.mubr.f32.mxu0 0.0
    %1263 = vmatmul.mubr.f32.gmra.mxu0 %v1186
    %v1264 = vpop.f32.mrf.mxu0
    %v1265 = vadd.f32 %v1176, %v1264
    %v1266 = vpop.f32.mrf.mxu0
    %1267 = vdwg.mxu0
    %v1268 = vld [vmem:[%s12] sm:$0x1]
    %v1270 = vlaneseq
    %v1271 = vshrl.u32 %v1270, 7
    %v1272 = vsub.s32 0, %v1271
    %v1273 = vrot.slane %v1268, %v1272
    %v1275 = vadd.f32 %v1255, %v1273
    %v1276 = vadd.f32 %v1260, %v1273
    %v1277 = vadd.f32 %v1265, %v1273
    %v1278 = vtanh.pop %v1275
    %v1279 = vtanh.pop %v1276
    %v1280 = vtanh.pop %v1277
    %v1281 = vmul.f32 %v1073, %v1278
    %v1282 = vmul.f32 %v1074, %v1279
    %v1283 = vmul.f32 %v1075, %v1280
    %v1284 = vsel %vm298, %v1281, 0.0
    %1285 = vadd.xlane.f32.xlu0 %v1284
    %v1286 = vpop.xlane.xlu0 %1285
    %v1287 = vsel %vm298, %v1282, 0.0
    %1288 = vadd.xlane.f32.xlu0 %v1287
    %v1289 = vpop.xlane.xlu0 %1288
    %v1290 = vsel %vm298, %v1283, 0.0
    %1291 = vadd.xlane.f32.xlu0 %v1290
    %v1292 = vpop.xlane.xlu0 %1291
    %v1296 = vlaneseq
    %v1297 = vshrl.u32 %v1296, 7
    %v1298 = vsub.s32 %v173, %v1297
    %v1299 = vrot.slane %v1286, %v1298
    %v1300 = vadd.s32 %v173, 4294967288
    %v1301 = vlaneseq
    %v1302 = vshrl.u32 %v1301, 7
    %v1303 = vsub.s32 %v1300, %v1302
    %v1304 = vrot.slane %v1289, %v1303
    %vm1305 = vcmask 130112
    %v1306 = vsel %vm1305, %v1304, %v1299
    %v1307 = vadd.s32 %v173, 4294967280
    %v1308 = vlaneseq
    %v1309 = vshrl.u32 %v1308, 7
    %v1310 = vsub.s32 %v1307, %v1309
    %v1311 = vrot.slane %v1292, %v1310
    %vm1312 = vcmask 195712
    %v1313 = vsel %vm1312, %v1311, %v1306
    %vm1315 = vcmask 188416
    %1316 = vst.msk [vmem:[#allocation17] sm:$0x1] %vm1315, %v1313
    // Predicated region
    $region90: #{tpu_custom_call.1} parent=1 // pred_check
      _
    $region91: #{tpu_custom_call.1} parent=1 // pred_check_branch
      %1318 = sbr.rel (0) target = $region93
    $region92: #{tpu_custom_call.1} parent=1 // pred_region
      %s1320 = ssub.s32 16, 16
      %1321 = vsyncadd [#allocation4], %s1320
      %s1323 = sshll.u32 [#allocation17], 4
      %s1324 = int_to_ptr.vmem [resolvable:$true] %s1323
      %1326 = dma.vmem_to_hbm [thread:$0]  %s1324, 16, %s13, [#allocation4]
    $region93: #{tpu_custom_call.1} parent=1 // pred_fallthru
      _
    // Predicated region
    $region94: #{tpu_custom_call.1} parent=1 // pred_check
      _
    $region95: #{tpu_custom_call.1} parent=1 // pred_check_branch
      %1328 = sbr.rel (0) target = $region97
    $region96: #{tpu_custom_call.1} parent=1 // pred_region
      %1329 = dma.done [#allocation4], 16
    $region97: #{tpu_custom_call.1} parent=1 // pred_fallthru
      _
    %1330 = vsyncpa [#allocation3], 1
    %1331 = vsyncpa [#allocation6], 1
    %1332 = vsyncpa [#allocation9], 1
    %1333 = vsyncpa [#allocation12], 1
    %1334 = vsyncpa [#allocation15], 1
    %1335 = vsyncpa [#allocation4], 1

// kernel: tpu_custom_call.1
$region0: #{tpu_custom_call.1}
  #allocation0 [shape = 'u32[]', space=smem, size = 0x4, offset = 0x4, fixed_abs, tag = 'smem constant byte address 0x4 - core index']
  #allocation1 [shape = 'u32[144,128]{1,0:T(1,128)}', space=vmem, size = 0x12000, scoped, tag = 'internal scratch']
  %s0 = inlined_call_operand.vmem [shape: s32[20,1], index: 0, kind: input, shape index: {}]
  %s1 = inlined_call_operand.hbm [shape: f32[20,32], index: 1, kind: input, shape index: {}]
  %s2 = inlined_call_operand.hbm [shape: f32[20,32], index: 2, kind: input, shape index: {}]
  %s3 = inlined_call_operand.hbm [shape: f32[4,32], index: 3, kind: input, shape index: {}]
  %s4 = inlined_call_operand.vmem [shape: f32[32,32], index: 4, kind: input, shape index: {}]
  %s5 = inlined_call_operand.hbm [shape: f32[1,32], index: 5, kind: input, shape index: {}]
  %s6 = inlined_call_operand.hbm [shape: f32[32,384], index: 6, kind: input, shape index: {}]
  %s7 = inlined_call_operand.hbm [shape: f32[32,384], index: 7, kind: input, shape index: {}]
  %s8 = inlined_call_operand.hbm [shape: f32[32,384], index: 8, kind: input, shape index: {}]
  %s9 = inlined_call_operand.vmem [shape: f32[1,384], index: 9, kind: input, shape index: {}]
  %s10 = inlined_call_operand.hbm [shape: f32[32,32], index: 10, kind: input, shape index: {}]
  %s11 = inlined_call_operand.hbm [shape: f32[32,32], index: 11, kind: input, shape index: {}]
  %s12 = inlined_call_operand.vmem [shape: f32[1,32], index: 12, kind: input, shape index: {}]
  %s13 = inlined_call_operand.hbm [shape: f32[1,24], index: 13, kind: output, shape index: {}]
  %s14 = sld [smem:[#allocation0]]
  $region98: #{tpu_custom_call.1} parent=0
    _
  %s16 = ssub.s32 1, %s14
  %s17 = scalar_select 0, %s16, %s14
  $region1: #{tpu_custom_call.1} parent=0
    #allocation2 [shape = 'u8[12288]{0}', space=vmem, size = 0x3000, scoped, tag = 'input window, operand 1, single buffered']
    #allocation3 [shape = 's32[1]{0}', space=sflag, size = 0x4, scoped, tag = 'scoped memory for tpu_custom_call.1']
    #allocation4 [shape = 's32[1]{0}', space=sflag, size = 0x4, scoped, tag = 'scoped memory for tpu_custom_call.1']
    #allocation5 [shape = 'u8[12288]{0}', space=vmem, size = 0x3000, scoped, tag = 'input window, operand 2, single buffered']
    #allocation6 [shape = 's32[1]{0}', space=sflag, size = 0x4, scoped, tag = 'scoped memory for tpu_custom_call.1']
    #allocation7 [shape = 'u8[2048]{0}', space=vmem, size = 0x800, scoped, tag = 'input window, operand 3, single buffered']
    #allocation8 [shape = 'u8[512]{0}', space=vmem, size = 0x400, scoped, tag = 'input window, operand 5, single buffered']
    #allocation9 [shape = 's32[1]{0}', space=sflag, size = 0x4, scoped, tag = 'scoped memory for tpu_custom_call.1']
    #allocation10 [shape = 'u8[49152]{0}', space=vmem, size = 0xc000, scoped, tag = 'input window, operand 6, single buffered']
    #allocation11 [shape = 'u8[49152]{0}', space=vmem, size = 0xc000, scoped, tag = 'input window, operand 7, single buffered']
    #allocation12 [shape = 's32[1]{0}', space=sflag, size = 0x4, scoped, tag = 'scoped memory for tpu_custom_call.1']
    #allocation13 [shape = 'u8[49152]{0}', space=vmem, size = 0xc000, scoped, tag = 'input window, operand 8, single buffered']
    #allocation14 [shape = 'u8[16384]{0}', space=vmem, size = 0x4000, scoped, tag = 'input window, operand 10, single buffered']
    #allocation15 [shape = 's32[1]{0}', space=sflag, size = 0x4, scoped, tag = 'scoped memory for tpu_custom_call.1']
    #allocation16 [shape = 'u8[16384]{0}', space=vmem, size = 0x4000, scoped, tag = 'input window, operand 11, single buffered']
    #allocation17 [shape = 'u8[512]{0}', space=vmem, size = 0x400, scoped, tag = 'output window, operand 0, single buffered']
    %18 = vsyncpa [#allocation3], 0
    %19 = vsyncpa [#allocation6], 0
    %20 = vsyncpa [#allocation9], 0
    %21 = vsyncpa [#allocation12], 0
    %22 = vsyncpa [#allocation15], 0
    %23 = vsyncpa [#allocation4], 0
    // Predicated region
    $region2: #{tpu_custom_call.1} parent=1 // pred_check
      _
    $region3: #{tpu_custom_call.1} parent=1 // pred_check_branch
      %25 = sbr.rel (0) target = $region5
    $region4: #{tpu_custom_call.1} parent=1 // pred_region
      _
    $region5: #{tpu_custom_call.1} parent=1 // pred_fallthru
      _
    // Predicated region
    $region6: #{tpu_custom_call.1} parent=1 // pred_check
      _
    $region7: #{tpu_custom_call.1} parent=1 // pred_check_branch
      %27 = sbr.rel (0) target = $region9
    $region8: #{tpu_custom_call.1} parent=1 // pred_region
      %s29 = ssub.s32 384, 384
      %30 = vsyncadd [#allocation3], %s29
      %s31 = sshll.u32 [#allocation2], 4
      %s32 = int_to_ptr.vmem [resolvable:$true] %s31
      %37 = dma.hbm_to_vmem [thread:$0]  %s1, 384, %s32, [#allocation3], 128, 128, 8
    $region9: #{tpu_custom_call.1} parent=1 // pred_fallthru
      _
    // Predicated region
    $region10: #{tpu_custom_call.1} parent=1 // pred_check
      _
    $region11: #{tpu_custom_call.1} parent=1 // pred_check_branch
      %39 = sbr.rel (0) target = $region13
    $region12: #{tpu_custom_call.1} parent=1 // pred_region
      %s41 = ssub.s32 384, 384
      %42 = vsyncadd [#allocation6], %s41
      %s43 = sshll.u32 [#allocation5], 4
      %s44 = int_to_ptr.vmem [resolvable:$true] %s43
      %49 = dma.hbm_to_vmem [thread:$0]  %s2, 384, %s44, [#allocation6], 128, 128, 8
    $region13: #{tpu_custom_call.1} parent=1 // pred_fallthru
      _
    // Predicated region
    $region14: #{tpu_custom_call.1} parent=1 // pred_check
      _
    $region15: #{tpu_custom_call.1} parent=1 // pred_check_branch
      %51 = sbr.rel (0) target = $region17
    $region16: #{tpu_custom_call.1} parent=1 // pred_region
      %s53 = ssub.s32 64, 64
      %54 = vsyncadd [#allocation6], %s53
      %s56 = sshll.u32 [#allocation7], 4
      %s57 = int_to_ptr.vmem [resolvable:$true] %s56
      %59 = dma.hbm_to_vmem [thread:$0]  %s3, 64, %s57, [#allocation6]
    $region17: #{tpu_custom_call.1} parent=1 // pred_fallthru
      _
    // Predicated region
    $region18: #{tpu_custom_call.1} parent=1 // pred_check
      _
    $region19: #{tpu_custom_call.1} parent=1 // pred_check_branch
      %61 = sbr.rel (0) target = $region21
    $region20: #{tpu_custom_call.1} parent=1 // pred_region
      _
    $region21: #{tpu_custom_call.1} parent=1 // pred_fallthru
      _
    // Predicated region
    $region22: #{tpu_custom_call.1} parent=1 // pred_check
      _
    $region23: #{tpu_custom_call.1} parent=1 // pred_check_branch
      %63 = sbr.rel (0) target = $region25
    $region24: #{tpu_custom_call.1} parent=1 // pred_region
      %s65 = ssub.s32 16, 16
      %66 = vsyncadd [#allocation9], %s65
      %s68 = sshll.u32 [#allocation8], 4
      %s69 = int_to_ptr.vmem [resolvable:$true] %s68
      %71 = dma.hbm_to_vmem [thread:$0]  %s5, 16, %s69, [#allocation9]
    $region25: #{tpu_custom_call.1} parent=1 // pred_fallthru
      _
    // Predicated region
    $region26: #{tpu_custom_call.1} parent=1 // pred_check
      _
    $region27: #{tpu_custom_call.1} parent=1 // pred_check_branch
      %73 = sbr.rel (0) target = $region29
    $region28: #{tpu_custom_call.1} parent=1 // pred_region
      %s75 = ssub.s32 1536, 1536
      %76 = vsyncadd [#allocation9], %s75
      %s77 = sshll.u32 [#allocation10], 4
      %s78 = int_to_ptr.vmem [resolvable:$true] %s77
      %83 = dma.hbm_to_vmem [thread:$0]  %s6, 1536, %s78, [#allocation9], 384, 384, 24
    $region29: #{tpu_custom_call.1} parent=1 // pred_fallthru
      _
    // Predicated region
    $region30: #{tpu_custom_call.1} parent=1 // pred_check
      _
    $region31: #{tpu_custom_call.1} parent=1 // pred_check_branch
      %85 = sbr.rel (0) target = $region33
    $region32: #{tpu_custom_call.1} parent=1 // pred_region
      %s87 = ssub.s32 1536, 1536
      %88 = vsyncadd [#allocation12], %s87
      %s89 = sshll.u32 [#allocation11], 4
      %s90 = int_to_ptr.vmem [resolvable:$true] %s89
      %95 = dma.hbm_to_vmem [thread:$0]  %s7, 1536, %s90, [#allocation12], 384, 384, 24
    $region33: #{tpu_custom_call.1} parent=1 // pred_fallthru
      _
    // Predicated region
    $region34: #{tpu_custom_call.1} parent=1 // pred_check
      _
    $region35: #{tpu_custom_call.1} parent=1 // pred_check_branch
      %97 = sbr.rel (0) target = $region37
    $region36: #{tpu_custom_call.1} parent=1 // pred_region
      %s99 = ssub.s32 1536, 1536
      %100 = vsyncadd [#allocation12], %s99
      %s101 = sshll.u32 [#allocation13], 4
      %s102 = int_to_ptr.vmem [resolvable:$true] %s101
      %107 = dma.hbm_to_vmem [thread:$0]  %s8, 1536, %s102, [#allocation12], 384, 384, 24
    $region37: #{tpu_custom_call.1} parent=1 // pred_fallthru
      _
    // Predicated region
    $region38: #{tpu_custom_call.1} parent=1 // pred_check
      _
    $region39: #{tpu_custom_call.1} parent=1 // pred_check_branch
      %109 = sbr.rel (0) target = $region41
    $region40: #{tpu_custom_call.1} parent=1 // pred_region
      _
    $region41: #{tpu_custom_call.1} parent=1 // pred_fallthru
      _
    // Predicated region
    $region42: #{tpu_custom_call.1} parent=1 // pred_check
      _
    $region43: #{tpu_custom_call.1} parent=1 // pred_check_branch
      %111 = sbr.rel (0) target = $region45
    $region44: #{tpu_custom_call.1} parent=1 // pred_region
      %s113 = ssub.s32 512, 512
      %114 = vsyncadd [#allocation15], %s113
      %s115 = sshll.u32 [#allocation14], 4
      %s116 = int_to_ptr.vmem [resolvable:$true] %s115
      %121 = dma.hbm_to_vmem [thread:$0]  %s10, 512, %s116, [#allocation15], 128, 128, 8
    $region45: #{tpu_custom_call.1} parent=1 // pred_fallthru
      _
    // Predicated region
    $region46: #{tpu_custom_call.1} parent=1 // pred_check
      _
    $region47: #{tpu_custom_call.1} parent=1 // pred_check_branch
      %123 = sbr.rel (0) target = $region49
    $region48: #{tpu_custom_call.1} parent=1 // pred_region
      %s125 = ssub.s32 512, 512
      %126 = vsyncadd [#allocation15], %s125
      %s127 = sshll.u32 [#allocation16], 4
      %s128 = int_to_ptr.vmem [resolvable:$true] %s127
      %133 = dma.hbm_to_vmem [thread:$0]  %s11, 512, %s128, [#allocation15], 128, 128, 8
    $region49: #{tpu_custom_call.1} parent=1 // pred_fallthru
      _
    // Predicated region
    $region50: #{tpu_custom_call.1} parent=1 // pred_check
      _
    $region51: #{tpu_custom_call.1} parent=1 // pred_check_branch
      %135 = sbr.rel (0) target = $region53
    $region52: #{tpu_custom_call.1} parent=1 // pred_region
      _
    $region53: #{tpu_custom_call.1} parent=1 // pred_fallthru
      _
    // Predicated region
    $region54: #{tpu_custom_call.1} parent=1 // pred_check
      _
    $region55: #{tpu_custom_call.1} parent=1 // pred_check_branch
      %137 = sbr.rel (0) target = $region57
    $region56: #{tpu_custom_call.1} parent=1 // pred_region
      %138 = dma.done [#allocation3], 384
    $region57: #{tpu_custom_call.1} parent=1 // pred_fallthru
      _
    // Predicated region
    $region58: #{tpu_custom_call.1} parent=1 // pred_check
      _
    $region59: #{tpu_custom_call.1} parent=1 // pred_check_branch
      %140 = sbr.rel (0) target = $region61
    $region60: #{tpu_custom_call.1} parent=1 // pred_region
      %141 = dma.done [#allocation6], 384
    $region61: #{tpu_custom_call.1} parent=1 // pred_fallthru
      _
    // Predicated region
    $region62: #{tpu_custom_call.1} parent=1 // pred_check
      _
    $region63: #{tpu_custom_call.1} parent=1 // pred_check_branch
      %143 = sbr.rel (0) target = $region65
    $region64: #{tpu_custom_call.1} parent=1 // pred_region
      %144 = dma.done [#allocation6], 64
    $region65: #{tpu_custom_call.1} parent=1 // pred_fallthru
      _
    // Predicated region
    $region66: #{tpu_custom_call.1} parent=1 // pred_check
      _
    $region67: #{tpu_custom_call.1} parent=1 // pred_check_branch
      %146 = sbr.rel (0) target = $region69
    $region68: #{tpu_custom_call.1} parent=1 // pred_region
      %147 = dma.done [#allocation9], 16
    $region69: #{tpu_custom_call.1} parent=1 // pred_fallthru
      _
    // Predicated region
    $region70: #{tpu_custom_call.1} parent=1 // pred_check
      _
    $region71: #{tpu_custom_call.1} parent=1 // pred_check_branch
      %149 = sbr.rel (0) target = $region73
    $region72: #{tpu_custom_call.1} parent=1 // pred_region
      %150 = dma.done [#allocation9], 1536
    $region73: #{tpu_custom_call.1} parent=1 // pred_fallthru
      _
    // Predicated region
    $region74: #{tpu_custom_call.1} parent=1 // pred_check
      _
    $region75: #{tpu_custom_call.1} parent=1 // pred_check_branch
      %152 = sbr.rel (0) target = $region77
    $region76: #{tpu_custom_call.1} parent=1 // pred_region
      %153 = dma.done [#allocation12], 1536
    $region77: #{tpu_custom_call.1} parent=1 // pred_fallthru
      _
    // Predicated region
    $region78: #{tpu_custom_call.1} parent=1 // pred_check
      _
    $region79: #{tpu_custom_call.1} parent=1 // pred_check_branch
      %155 = sbr.rel (0) target = $region81
    $region80: #{tpu_custom_call.1} parent=1 // pred_region
      %156 = dma.done [#allocation12], 1536
    $region81: #{tpu_custom_call.1} parent=1 // pred_fallthru
      _
    // Predicated region
    $region82: #{tpu_custom_call.1} parent=1 // pred_check
      _
    $region83: #{tpu_custom_call.1} parent=1 // pred_check_branch
      %158 = sbr.rel (0) target = $region85
    $region84: #{tpu_custom_call.1} parent=1 // pred_region
      %159 = dma.done [#allocation15], 512
    $region85: #{tpu_custom_call.1} parent=1 // pred_fallthru
      _
    // Predicated region
    $region86: #{tpu_custom_call.1} parent=1 // pred_check
      _
    $region87: #{tpu_custom_call.1} parent=1 // pred_check_branch
      %161 = sbr.rel (0) target = $region89
    $region88: #{tpu_custom_call.1} parent=1 // pred_region
      %162 = dma.done [#allocation15], 512
    $region89: #{tpu_custom_call.1} parent=1 // pred_fallthru
      _
    %v163 = vld [vmem:[#allocation2] sm:$0xff]
    %v164 = vld [vmem:[#allocation2 + $0x8] sm:$0xff]
    %v165 = vld [vmem:[#allocation2 + $0x10] sm:$0xff]
    %v166 = vld [vmem:[#allocation5] sm:$0xff]
    %v167 = vld [vmem:[#allocation5 + $0x8] sm:$0xff]
    %v168 = vld [vmem:[#allocation5 + $0x10] sm:$0xff]
    %v169 = vld [vmem:[%s0] sm:$0xff]
    %v170 = vld [vmem:[%s0 + $0x8] sm:$0xff]
    %v171 = vld [vmem:[%s0 + $0x10] sm:$0xff]
    %v172 = vlaneseq
    %v173 = vand.u32 %v172, 127
    %174 = vset.pattern.permute.xlu0 0
    %175 = vperm.xlu0 %174, %v169
    %v176 = vpop.permute.xlu0 %175
    %177 = vset.pattern.permute.xlu0 0
    %178 = vperm.xlu0 %177, %v170
    %v179 = vpop.permute.xlu0 %178
    %180 = vset.pattern.permute.xlu0 0
    %181 = vperm.xlu0 %180, %v171
    %v182 = vpop.permute.xlu0 %181
    %vm183 = vcmp.eq.s32.totalorder %v173, %v176
    %vm184 = vcmp.eq.s32.totalorder %v173, %v179
    %vm185 = vcmp.eq.s32.totalorder %v173, %v182
    %v186 = vsel %vm183, 1, 0
    %v187 = vsel %vm184, 1, 0
    %v188 = vsel %vm185, 1, 0
    %v189 = vcvt.s32.f32 %v186
    %v190 = vcvt.s32.f32 %v187
    %v191 = vcvt.s32.f32 %v188
    %v192 = vld [vmem:[#allocation7] sm:$0xf]
    %vm193 = vcmask 31744
    %v195 = vsel %vm193, %v189, 0
    %v198 = vsel %vm193, %v190, 0
    %v201 = vsel %vm193, %v191, 0
    %vm203 = vcmask 1043456
    %v205 = vsel %vm203, %v192, 0
    %207 = vmatprep.subr.mxu0 0.0
    %208 = vmatpush1.msra.mxu0 0.0
    %209 = vmatprep.subr.mxu0 0.0
    %210 = vmatpush1.msra.mxu0 0.0
    %211 = vmatprep.subr.mxu0 0.0
    %212 = vmatpush1.msra.mxu0 0.0
    %213 = vmatprep.subr.mxu0 0.0
    %214 = vmatpush1.msra.mxu0 0.0
    %215 = vmatprep.subr.mxu0 0.0
    %216 = vmatpush1.msra.mxu0 0.0
    %217 = vmatprep.subr.mxu0 0.0
    %218 = vmatpush1.msra.mxu0 0.0
    %219 = vmatprep.subr.mxu0 0.0
    %220 = vmatpush1.msra.mxu0 0.0
    %221 = vmatprep.subr.mxu0 0.0
    %222 = vmatpush1.msra.mxu0 0.0
    %223 = vmatprep.subr.mxu0 0.0
    %224 = vmatpush1.msra.mxu0 0.0
    %225 = vmatprep.subr.mxu0 0.0
    %226 = vmatpush1.msra.mxu0 0.0
    %227 = vmatprep.subr.mxu0 0.0
    %228 = vmatpush1.msra.mxu0 0.0
    %229 = vmatprep.subr.mxu0 0.0
    %230 = vmatpush1.msra.mxu0 0.0
    %231 = vmatprep.subr.mxu0 0.0
    %232 = vmatpush1.msra.mxu0 0.0
    %233 = vmatprep.subr.mxu0 0.0
    %234 = vmatpush1.msra.mxu0 0.0
    %235 = vmatprep.subr.mxu0 0.0
    %236 = vmatpush1.msra.mxu0 0.0
    %237 = vmatprep.subr.mxu0 0.0
    %238 = vmatpush1.msra.mxu0 %v205
    %239 = vmatprep.subr.mxu0 0.0
    %240 = vmatpush2.msra.mxu0 0.0
    %241 = vmatprep.subr.mxu0 0.0
    %242 = vmatpush2.msra.mxu0 0.0
    %243 = vmatprep.subr.mxu0 0.0
    %244 = vmatpush2.msra.mxu0 0.0
    %245 = vmatprep.subr.mxu0 0.0
    %246 = vmatpush2.msra.mxu0 0.0
    %247 = vmatprep.subr.mxu0 0.0
    %248 = vmatpush2.msra.mxu0 0.0
    %249 = vmatprep.subr.mxu0 0.0
    %250 = vmatpush2.msra.mxu0 0.0
    %251 = vmatprep.subr.mxu0 0.0
    %252 = vmatpush2.msra.mxu0 0.0
    %253 = vmatprep.subr.mxu0 0.0
    %254 = vmatpush2.msra.mxu0 0.0
    %255 = vmatprep.subr.mxu0 0.0
    %256 = vmatpush2.msra.mxu0 0.0
    %257 = vmatprep.subr.mxu0 0.0
    %258 = vmatpush2.msra.mxu0 0.0
    %259 = vmatprep.subr.mxu0 0.0
    %260 = vmatpush2.msra.mxu0 0.0
    %261 = vmatprep.subr.mxu0 0.0
    %262 = vmatpush2.msra.mxu0 0.0
    %263 = vmatprep.subr.mxu0 0.0
    %264 = vmatpush2.msra.mxu0 0.0
    %265 = vmatprep.subr.mxu0 0.0
    %266 = vmatpush2.msra.mxu0 0.0
    %267 = vmatprep.subr.mxu0 0.0
    %268 = vmatpush2.msra.mxu0 0.0
    %269 = vmatprep.subr.mxu0 0.0
    %270 = vmatpush2.msra.mxu0 0.0
    %271 = vmatprep.mubr.f32.mxu0 0.0
    %272 = vmatmul.mubr.f32.gmra.mxu0 %v195
    %v273 = vpop.f32.mrf.mxu0
    %v274 = vadd.f32 0.0, %v273
    %v275 = vpop.f32.mrf.mxu0
    %276 = vmatprep.mubr.f32.mxu0 0.0
    %277 = vmatmul.mubr.f32.gmra.mxu0 %v198
    %v278 = vpop.f32.mrf.mxu0
    %v279 = vadd.f32 0.0, %v278
    %v280 = vpop.f32.mrf.mxu0
    %281 = vmatprep.mubr.f32.mxu0 0.0
    %282 = vmatmul.mubr.f32.gmra.mxu0 %v201
    %v283 = vpop.f32.mrf.mxu0
    %v284 = vadd.f32 0.0, %v283
    %v285 = vpop.f32.mrf.mxu0
    %286 = vdwg.mxu0
    %v287 = vld [vmem:[%s4] sm:$0xff]
    %v288 = vld [vmem:[%s4 + $0x8] sm:$0xff]
    %v289 = vld [vmem:[%s4 + $0x10] sm:$0xff]
    %v290 = vld [vmem:[%s4 + $0x18] sm:$0xff]
    %v291 = vld [vmem:[#allocation8] sm:$0x1]
    %v293 = vlaneseq
    %v294 = vshrl.u32 %v293, 7
    %v295 = vsub.s32 0, %v294
    %v296 = vrot.slane %v291, %v295
    %vm298 = vcmask 261120
    %v300 = vsel %vm298, %v163, 0
    %v303 = vsel %vm298, %v164, 0
    %v306 = vsel %vm298, %v165, 0
    %308 = vmatprep.subr.mxu0 0.0
    %309 = vmatpush1.msra.mxu0 0.0
    %310 = vmatprep.subr.mxu0 0.0
    %311 = vmatpush1.msra.mxu0 0.0
    %312 = vmatprep.subr.mxu0 0.0
    %313 = vmatpush1.msra.mxu0 0.0
    %314 = vmatprep.subr.mxu0 0.0
    %315 = vmatpush1.msra.mxu0 0.0
    %316 = vmatprep.subr.mxu0 0.0
    %317 = vmatpush1.msra.mxu0 0.0
    %318 = vmatprep.subr.mxu0 0.0
    %319 = vmatpush1.msra.mxu0 0.0
    %320 = vmatprep.subr.mxu0 0.0
    %321 = vmatpush1.msra.mxu0 0.0
    %322 = vmatprep.subr.mxu0 0.0
    %323 = vmatpush1.msra.mxu0 0.0
    %324 = vmatprep.subr.mxu0 0.0
    %325 = vmatpush1.msra.mxu0 0.0
    %326 = vmatprep.subr.mxu0 0.0
    %327 = vmatpush1.msra.mxu0 0.0
    %328 = vmatprep.subr.mxu0 0.0
    %329 = vmatpush1.msra.mxu0 0.0
    %330 = vmatprep.subr.mxu0 0.0
    %331 = vmatpush1.msra.mxu0 0.0
    %332 = vmatprep.subr.mxu0 0.0
    %333 = vmatpush1.msra.mxu0 %v290
    %334 = vmatprep.subr.mxu0 0.0
    %335 = vmatpush1.msra.mxu0 %v289
    %336 = vmatprep.subr.mxu0 0.0
    %337 = vmatpush1.msra.mxu0 %v288
    %338 = vmatprep.subr.mxu0 0.0
    %339 = vmatpush1.msra.mxu0 %v287
    %340 = vmatprep.subr.mxu0 0.0
    %341 = vmatpush2.msra.mxu0 0.0
    %342 = vmatprep.subr.mxu0 0.0
    %343 = vmatpush2.msra.mxu0 0.0
    %344 = vmatprep.subr.mxu0 0.0
    %345 = vmatpush2.msra.mxu0 0.0
    %346 = vmatprep.subr.mxu0 0.0
    %347 = vmatpush2.msra.mxu0 0.0
    %348 = vmatprep.subr.mxu0 0.0
    %349 = vmatpush2.msra.mxu0 0.0
    %350 = vmatprep.subr.mxu0 0.0
    %351 = vmatpush2.msra.mxu0 0.0
    %352 = vmatprep.subr.mxu0 0.0
    %353 = vmatpush2.msra.mxu0 0.0
    %354 = vmatprep.subr.mxu0 0.0
    %355 = vmatpush2.msra.mxu0 0.0
    %356 = vmatprep.subr.mxu0 0.0
    %357 = vmatpush2.msra.mxu0 0.0
    %358 = vmatprep.subr.mxu0 0.0
    %359 = vmatpush2.msra.mxu0 0.0
    %360 = vmatprep.subr.mxu0 0.0
    %361 = vmatpush2.msra.mxu0 0.0
    %362 = vmatprep.subr.mxu0 0.0
    %363 = vmatpush2.msra.mxu0 0.0
    %364 = vmatprep.subr.mxu0 0.0
    %365 = vmatpush2.msra.mxu0 0.0
    %366 = vmatprep.subr.mxu0 0.0
    %367 = vmatpush2.msra.mxu0 0.0
    %368 = vmatprep.subr.mxu0 0.0
    %369 = vmatpush2.msra.mxu0 0.0
    %370 = vmatprep.subr.mxu0 0.0
    %371 = vmatpush2.msra.mxu0 0.0
    %372 = vmatprep.mubr.f32.mxu0 0.0
    %373 = vmatmul.mubr.f32.gmra.mxu0 %v300
    %v374 = vpop.f32.mrf.mxu0
    %v375 = vadd.f32 %v296, %v374
    %v376 = vpop.f32.mrf.mxu0
    %377 = vmatprep.mubr.f32.mxu0 0.0
    %378 = vmatmul.mubr.f32.gmra.mxu0 %v303
    %v379 = vpop.f32.mrf.mxu0
    %v380 = vadd.f32 %v296, %v379
    %v381 = vpop.f32.mrf.mxu0
    %382 = vmatprep.mubr.f32.mxu0 0.0
    %383 = vmatmul.mubr.f32.gmra.mxu0 %v306
    %v384 = vpop.f32.mrf.mxu0
    %v385 = vadd.f32 %v296, %v384
    %v386 = vpop.f32.mrf.mxu0
    %387 = vdwg.mxu0
    %v389 = vsel %vm298, %v166, 0
    %v392 = vsel %vm298, %v167, 0
    %v395 = vsel %vm298, %v168, 0
    %397 = vmatprep.subr.mxu0 0.0
    %398 = vmatpush1.msra.mxu0 0.0
    %399 = vmatprep.subr.mxu0 0.0
    %400 = vmatpush1.msra.mxu0 0.0
    %401 = vmatprep.subr.mxu0 0.0
    %402 = vmatpush1.msra.mxu0 0.0
    %403 = vmatprep.subr.mxu0 0.0
    %404 = vmatpush1.msra.mxu0 0.0
    %405 = vmatprep.subr.mxu0 0.0
    %406 = vmatpush1.msra.mxu0 0.0
    %407 = vmatprep.subr.mxu0 0.0
    %408 = vmatpush1.msra.mxu0 0.0
    %409 = vmatprep.subr.mxu0 0.0
    %410 = vmatpush1.msra.mxu0 0.0
    %411 = vmatprep.subr.mxu0 0.0
    %412 = vmatpush1.msra.mxu0 0.0
    %413 = vmatprep.subr.mxu0 0.0
    %414 = vmatpush1.msra.mxu0 0.0
    %415 = vmatprep.subr.mxu0 0.0
    %416 = vmatpush1.msra.mxu0 0.0
    %417 = vmatprep.subr.mxu0 0.0
    %418 = vmatpush1.msra.mxu0 0.0
    %419 = vmatprep.subr.mxu0 0.0
    %420 = vmatpush1.msra.mxu0 0.0
    %421 = vmatprep.subr.mxu0 0.0
    %422 = vmatpush1.msra.mxu0 %v290
    %423 = vmatprep.subr.mxu0 0.0
    %424 = vmatpush1.msra.mxu0 %v289
    %425 = vmatprep.subr.mxu0 0.0
    %426 = vmatpush1.msra.mxu0 %v288
    %427 = vmatprep.subr.mxu0 0.0
    %428 = vmatpush1.msra.mxu0 %v287
    %429 = vmatprep.subr.mxu0 0.0
    %430 = vmatpush2.msra.mxu0 0.0
    %431 = vmatprep.subr.mxu0 0.0
    %432 = vmatpush2.msra.mxu0 0.0
    %433 = vmatprep.subr.mxu0 0.0
    %434 = vmatpush2.msra.mxu0 0.0
    %435 = vmatprep.subr.mxu0 0.0
    %436 = vmatpush2.msra.mxu0 0.0
    %437 = vmatprep.subr.mxu0 0.0
    %438 = vmatpush2.msra.mxu0 0.0
    %439 = vmatprep.subr.mxu0 0.0
    %440 = vmatpush2.msra.mxu0 0.0
    %441 = vmatprep.subr.mxu0 0.0
    %442 = vmatpush2.msra.mxu0 0.0
    %443 = vmatprep.subr.mxu0 0.0
    %444 = vmatpush2.msra.mxu0 0.0
    %445 = vmatprep.subr.mxu0 0.0
    %446 = vmatpush2.msra.mxu0 0.0
    %447 = vmatprep.subr.mxu0 0.0
    %448 = vmatpush2.msra.mxu0 0.0
    %449 = vmatprep.subr.mxu0 0.0
    %450 = vmatpush2.msra.mxu0 0.0
    %451 = vmatprep.subr.mxu0 0.0
    %452 = vmatpush2.msra.mxu0 0.0
    %453 = vmatprep.subr.mxu0 0.0
    %454 = vmatpush2.msra.mxu0 0.0
    %455 = vmatprep.subr.mxu0 0.0
    %456 = vmatpush2.msra.mxu0 0.0
    %457 = vmatprep.subr.mxu0 0.0
    %458 = vmatpush2.msra.mxu0 0.0
    %459 = vmatprep.subr.mxu0 0.0
    %460 = vmatpush2.msra.mxu0 0.0
    %461 = vmatprep.mubr.f32.mxu0 0.0
    %462 = vmatmul.mubr.f32.gmra.mxu0 %v389
    %v463 = vpop.f32.mrf.mxu0
    %v464 = vadd.f32 %v296, %v463
    %v465 = vpop.f32.mrf.mxu0
    %466 = vmatprep.mubr.f32.mxu0 0.0
    %467 = vmatmul.mubr.f32.gmra.mxu0 %v392
    %v468 = vpop.f32.mrf.mxu0
    %v469 = vadd.f32 %v296, %v468
    %v470 = vpop.f32.mrf.mxu0
    %471 = vmatprep.mubr.f32.mxu0 0.0
    %472 = vmatmul.mubr.f32.gmra.mxu0 %v395
    %v473 = vpop.f32.mrf.mxu0
    %v474 = vadd.f32 %v296, %v473
    %v475 = vpop.f32.mrf.mxu0
    %476 = vdwg.mxu0
    %v477 = vld [vmem:[#allocation10] sm:$0xff]
    %v478 = vld [vmem:[#allocation10 + $0x8] sm:$0xff]
    %v479 = vld [vmem:[#allocation10 + $0x10] sm:$0xff]
    %v480 = vld [vmem:[#allocation10 + $0x18] sm:$0xff]
    %v481 = vld [vmem:[#allocation10 + $0x20] sm:$0xff]
    %v482 = vld [vmem:[#allocation10 + $0x28] sm:$0xff]
    %v483 = vld [vmem:[#allocation10 + $0x30] sm:$0xff]
    %v484 = vld [vmem:[#allocation10 + $0x38] sm:$0xff]
    %v485 = vld [vmem:[#allocation10 + $0x40] sm:$0xff]
    %v486 = vld [vmem:[#allocation10 + $0x48] sm:$0xff]
    %v487 = vld [vmem:[#allocation10 + $0x50] sm:$0xff]
    %v488 = vld [vmem:[#allocation10 + $0x58] sm:$0xff]
    %v489 = vld [vmem:[#allocation11] sm:$0xff]
    %v490 = vld [vmem:[#allocation11 + $0x8] sm:$0xff]
    %v491 = vld [vmem:[#allocation11 + $0x10] sm:$0xff]
    %v492 = vld [vmem:[#allocation11 + $0x18] sm:$0xff]
    %v493 = vld [vmem:[#allocation11 + $0x20] sm:$0xff]
    %v494 = vld [vmem:[#allocation11 + $0x28] sm:$0xff]
    %v495 = vld [vmem:[#allocation11 + $0x30] sm:$0xff]
    %v496 = vld [vmem:[#allocation11 + $0x38] sm:$0xff]
    %v497 = vld [vmem:[#allocation11 + $0x40] sm:$0xff]
    %v498 = vld [vmem:[#allocation11 + $0x48] sm:$0xff]
    %v499 = vld [vmem:[#allocation11 + $0x50] sm:$0xff]
    %v500 = vld [vmem:[#allocation11 + $0x58] sm:$0xff]
    %v502 = vsel %vm298, %v464, 0
    %v505 = vsel %vm298, %v469, 0
    %v508 = vsel %vm298, %v474, 0
    %510 = vmatprep.subr.mxu0 0.0
    %511 = vmatpush1.msra.mxu0 0.0
    %512 = vmatprep.subr.mxu0 0.0
    %513 = vmatpush1.msra.mxu0 0.0
    %514 = vmatprep.subr.mxu0 0.0
    %515 = vmatpush1.msra.mxu0 0.0
    %516 = vmatprep.subr.mxu0 0.0
    %517 = vmatpush1.msra.mxu0 0.0
    %518 = vmatprep.subr.mxu0 0.0
    %519 = vmatpush1.msra.mxu0 0.0
    %520 = vmatprep.subr.mxu0 0.0
    %521 = vmatpush1.msra.mxu0 0.0
    %522 = vmatprep.subr.mxu0 0.0
    %523 = vmatpush1.msra.mxu0 0.0
    %524 = vmatprep.subr.mxu0 0.0
    %525 = vmatpush1.msra.mxu0 0.0
    %526 = vmatprep.subr.mxu0 0.0
    %527 = vmatpush1.msra.mxu0 0.0
    %528 = vmatprep.subr.mxu0 0.0
    %529 = vmatpush1.msra.mxu0 0.0
    %530 = vmatprep.subr.mxu0 0.0
    %531 = vmatpush1.msra.mxu0 0.0
    %532 = vmatprep.subr.mxu0 0.0
    %533 = vmatpush1.msra.mxu0 0.0
    %534 = vmatprep.subr.mxu0 %v499
    %535 = vmatpush1.msra.mxu0 %v498
    %536 = vmatprep.subr.mxu0 %v496
    %537 = vmatpush1.msra.mxu0 %v495
    %538 = vmatprep.subr.mxu0 %v493
    %539 = vmatpush1.msra.mxu0 %v492
    %540 = vmatprep.subr.mxu0 %v490
    %541 = vmatpush1.msra.mxu0 %v489
    %542 = vmatprep.subr.mxu0 0.0
    %543 = vmatpush2.msra.mxu0 0.0
    %544 = vmatprep.subr.mxu0 0.0
    %545 = vmatpush2.msra.mxu0 0.0
    %546 = vmatprep.subr.mxu0 0.0
    %547 = vmatpush2.msra.mxu0 0.0
    %548 = vmatprep.subr.mxu0 0.0
    %549 = vmatpush2.msra.mxu0 0.0
    %550 = vmatprep.subr.mxu0 0.0
    %551 = vmatpush2.msra.mxu0 0.0
    %552 = vmatprep.subr.mxu0 0.0
    %553 = vmatpush2.msra.mxu0 0.0
    %554 = vmatprep.subr.mxu0 0.0
    %555 = vmatpush2.msra.mxu0 0.0
    %556 = vmatprep.subr.mxu0 0.0
    %557 = vmatpush2.msra.mxu0 0.0
    %558 = vmatprep.subr.mxu0 0.0
    %559 = vmatpush2.msra.mxu0 0.0
    %560 = vmatprep.subr.mxu0 0.0
    %561 = vmatpush2.msra.mxu0 0.0
    %562 = vmatprep.subr.mxu0 0.0
    %563 = vmatpush2.msra.mxu0 0.0
    %564 = vmatprep.subr.mxu0 0.0
    %565 = vmatpush2.msra.mxu0 0.0
    %566 = vmatprep.subr.mxu0 0.0
    %567 = vmatpush2.msra.mxu0 0.0
    %568 = vmatprep.subr.mxu0 0.0
    %569 = vmatpush2.msra.mxu0 0.0
    %570 = vmatprep.subr.mxu0 0.0
    %571 = vmatpush2.msra.mxu0 0.0
    %572 = vmatprep.subr.mxu0 0.0
    %573 = vmatpush2.msra.mxu0 0.0
    %574 = vmatprep.mubr.f32.mxu0 0.0
    %575 = vmatmul.mubr.f32.gmra.mxu0 %v502
    %v576 = vpop.f32.mrf.mxu0
    %v577 = vadd.f32 0.0, %v576
    %v578 = vpop.f32.mrf.mxu0
    %v579 = vadd.f32 0.0, %v578
    %580 = vmatprep.mubr.f32.mxu0 0.0
    %581 = vmatmul.mubr.f32.gmra.mxu0 %v505
    %v582 = vpop.f32.mrf.mxu0
    %v583 = vadd.f32 0.0, %v582
    %v584 = vpop.f32.mrf.mxu0
    %v585 = vadd.f32 0.0, %v584
    %586 = vmatprep.mubr.f32.mxu0 0.0
    %587 = vmatmul.mubr.f32.gmra.mxu0 %v508
    %v588 = vpop.f32.mrf.mxu0
    %v589 = vadd.f32 0.0, %v588
    %v590 = vpop.f32.mrf.mxu0
    %v591 = vadd.f32 0.0, %v590
    %592 = vdwg.mxu0
    %593 = vmatprep.subr.mxu0 0.0
    %594 = vmatpush1.msra.mxu0 0.0
    %595 = vmatprep.subr.mxu0 0.0
    %596 = vmatpush1.msra.mxu0 0.0
    %597 = vmatprep.subr.mxu0 0.0
    %598 = vmatpush1.msra.mxu0 0.0
    %599 = vmatprep.subr.mxu0 0.0
    %600 = vmatpush1.msra.mxu0 0.0
    %601 = vmatprep.subr.mxu0 0.0
    %602 = vmatpush1.msra.mxu0 0.0
    %603 = vmatprep.subr.mxu0 0.0
    %604 = vmatpush1.msra.mxu0 0.0
    %605 = vmatprep.subr.mxu0 0.0
    %606 = vmatpush1.msra.mxu0 0.0
    %607 = vmatprep.subr.mxu0 0.0
    %608 = vmatpush1.msra.mxu0 0.0
    %609 = vmatprep.subr.mxu0 0.0
    %610 = vmatpush1.msra.mxu0 0.0
    %611 = vmatprep.subr.mxu0 0.0
    %612 = vmatpush1.msra.mxu0 0.0
    %613 = vmatprep.subr.mxu0 0.0
    %614 = vmatpush1.msra.mxu0 0.0
    %615 = vmatprep.subr.mxu0 0.0
    %616 = vmatpush1.msra.mxu0 0.0
    %617 = vmatprep.subr.mxu0 0.0
    %618 = vmatpush1.msra.mxu0 %v500
    %619 = vmatprep.subr.mxu0 0.0
    %620 = vmatpush1.msra.mxu0 %v497
    %621 = vmatprep.subr.mxu0 0.0
    %622 = vmatpush1.msra.mxu0 %v494
    %623 = vmatprep.subr.mxu0 0.0
    %624 = vmatpush1.msra.mxu0 %v491
    %625 = vmatprep.subr.mxu0 0.0
    %626 = vmatpush2.msra.mxu0 0.0
    %627 = vmatprep.subr.mxu0 0.0
    %628 = vmatpush2.msra.mxu0 0.0
    %629 = vmatprep.subr.mxu0 0.0
    %630 = vmatpush2.msra.mxu0 0.0
    %631 = vmatprep.subr.mxu0 0.0
    %632 = vmatpush2.msra.mxu0 0.0
    %633 = vmatprep.subr.mxu0 0.0
    %634 = vmatpush2.msra.mxu0 0.0
    %635 = vmatprep.subr.mxu0 0.0
    %636 = vmatpush2.msra.mxu0 0.0
    %637 = vmatprep.subr.mxu0 0.0
    %638 = vmatpush2.msra.mxu0 0.0
    %639 = vmatprep.subr.mxu0 0.0
    %640 = vmatpush2.msra.mxu0 0.0
    %641 = vmatprep.subr.mxu0 0.0
    %642 = vmatpush2.msra.mxu0 0.0
    %643 = vmatprep.subr.mxu0 0.0
    %644 = vmatpush2.msra.mxu0 0.0
    %645 = vmatprep.subr.mxu0 0.0
    %646 = vmatpush2.msra.mxu0 0.0
    %647 = vmatprep.subr.mxu0 0.0
    %648 = vmatpush2.msra.mxu0 0.0
    %649 = vmatprep.subr.mxu0 0.0
    %650 = vmatpush2.msra.mxu0 0.0
    %651 = vmatprep.subr.mxu0 0.0
    %652 = vmatpush2.msra.mxu0 0.0
    %653 = vmatprep.subr.mxu0 0.0
    %654 = vmatpush2.msra.mxu0 0.0
    %655 = vmatprep.subr.mxu0 0.0
    %656 = vmatpush2.msra.mxu0 0.0
    %657 = vmatprep.mubr.f32.mxu0 0.0
    %658 = vmatmul.mubr.f32.gmra.mxu0 %v502
    %v659 = vpop.f32.mrf.mxu0
    %v660 = vadd.f32 0.0, %v659
    %v661 = vpop.f32.mrf.mxu0
    %662 = vmatprep.mubr.f32.mxu0 0.0
    %663 = vmatmul.mubr.f32.gmra.mxu0 %v505
    %v664 = vpop.f32.mrf.mxu0
    %v665 = vadd.f32 0.0, %v664
    %v666 = vpop.f32.mrf.mxu0
    %667 = vmatprep.mubr.f32.mxu0 0.0
    %668 = vmatmul.mubr.f32.gmra.mxu0 %v508
    %v669 = vpop.f32.mrf.mxu0
    %v670 = vadd.f32 0.0, %v669
    %v671 = vpop.f32.mrf.mxu0
    %672 = vdwg.mxu0
    %v674 = vsel %vm298, %v375, 0
    %v677 = vsel %vm298, %v380, 0
    %v680 = vsel %vm298, %v385, 0
    %682 = vmatprep.subr.mxu0 0.0
    %683 = vmatpush1.msra.mxu0 0.0
    %684 = vmatprep.subr.mxu0 0.0
    %685 = vmatpush1.msra.mxu0 0.0
    %686 = vmatprep.subr.mxu0 0.0
    %687 = vmatpush1.msra.mxu0 0.0
    %688 = vmatprep.subr.mxu0 0.0
    %689 = vmatpush1.msra.mxu0 0.0
    %690 = vmatprep.subr.mxu0 0.0
    %691 = vmatpush1.msra.mxu0 0.0
    %692 = vmatprep.subr.mxu0 0.0
    %693 = vmatpush1.msra.mxu0 0.0
    %694 = vmatprep.subr.mxu0 0.0
    %695 = vmatpush1.msra.mxu0 0.0
    %696 = vmatprep.subr.mxu0 0.0
    %697 = vmatpush1.msra.mxu0 0.0
    %698 = vmatprep.subr.mxu0 0.0
    %699 = vmatpush1.msra.mxu0 0.0
    %700 = vmatprep.subr.mxu0 0.0
    %701 = vmatpush1.msra.mxu0 0.0
    %702 = vmatprep.subr.mxu0 0.0
    %703 = vmatpush1.msra.mxu0 0.0
    %704 = vmatprep.subr.mxu0 0.0
    %705 = vmatpush1.msra.mxu0 0.0
    %706 = vmatprep.subr.mxu0 %v487
    %707 = vmatpush1.msra.mxu0 %v486
    %708 = vmatprep.subr.mxu0 %v484
    %709 = vmatpush1.msra.mxu0 %v483
    %710 = vmatprep.subr.mxu0 %v481
    %711 = vmatpush1.msra.mxu0 %v480
    %712 = vmatprep.subr.mxu0 %v478
    %713 = vmatpush1.msra.mxu0 %v477
    %714 = vmatprep.subr.mxu0 0.0
    %715 = vmatpush2.msra.mxu0 0.0
    %716 = vmatprep.subr.mxu0 0.0
    %717 = vmatpush2.msra.mxu0 0.0
    %718 = vmatprep.subr.mxu0 0.0
    %719 = vmatpush2.msra.mxu0 0.0
    %720 = vmatprep.subr.mxu0 0.0
    %721 = vmatpush2.msra.mxu0 0.0
    %722 = vmatprep.subr.mxu0 0.0
    %723 = vmatpush2.msra.mxu0 0.0
    %724 = vmatprep.subr.mxu0 0.0
    %725 = vmatpush2.msra.mxu0 0.0
    %726 = vmatprep.subr.mxu0 0.0
    %727 = vmatpush2.msra.mxu0 0.0
    %728 = vmatprep.subr.mxu0 0.0
    %729 = vmatpush2.msra.mxu0 0.0
    %730 = vmatprep.subr.mxu0 0.0
    %731 = vmatpush2.msra.mxu0 0.0
    %732 = vmatprep.subr.mxu0 0.0
    %733 = vmatpush2.msra.mxu0 0.0
    %734 = vmatprep.subr.mxu0 0.0
    %735 = vmatpush2.msra.mxu0 0.0
    %736 = vmatprep.subr.mxu0 0.0
    %737 = vmatpush2.msra.mxu0 0.0
    %738 = vmatprep.subr.mxu0 0.0
    %739 = vmatpush2.msra.mxu0 0.0
    %740 = vmatprep.subr.mxu0 0.0
    %741 = vmatpush2.msra.mxu0 0.0
    %742 = vmatprep.subr.mxu0 0.0
    %743 = vmatpush2.msra.mxu0 0.0
    %744 = vmatprep.subr.mxu0 0.0
    %745 = vmatpush2.msra.mxu0 0.0
    %746 = vmatprep.mubr.f32.mxu0 0.0
    %747 = vmatmul.mubr.f32.gmra.mxu0 %v674
    %v748 = vpop.f32.mrf.mxu0
    %v749 = vadd.f32 %v577, %v748
    %v750 = vpop.f32.mrf.mxu0
    %v751 = vadd.f32 %v579, %v750
    %752 = vmatprep.mubr.f32.mxu0 0.0
    %753 = vmatmul.mubr.f32.gmra.mxu0 %v677
    %v754 = vpop.f32.mrf.mxu0
    %v755 = vadd.f32 %v583, %v754
    %v756 = vpop.f32.mrf.mxu0
    %v757 = vadd.f32 %v585, %v756
    %758 = vmatprep.mubr.f32.mxu0 0.0
    %759 = vmatmul.mubr.f32.gmra.mxu0 %v680
    %v760 = vpop.f32.mrf.mxu0
    %v761 = vadd.f32 %v589, %v760
    %v762 = vpop.f32.mrf.mxu0
    %v763 = vadd.f32 %v591, %v762
    %764 = vdwg.mxu0
    %765 = vmatprep.subr.mxu0 0.0
    %766 = vmatpush1.msra.mxu0 0.0
    %767 = vmatprep.subr.mxu0 0.0
    %768 = vmatpush1.msra.mxu0 0.0
    %769 = vmatprep.subr.mxu0 0.0
    %770 = vmatpush1.msra.mxu0 0.0
    %771 = vmatprep.subr.mxu0 0.0
    %772 = vmatpush1.msra.mxu0 0.0
    %773 = vmatprep.subr.mxu0 0.0
    %774 = vmatpush1.msra.mxu0 0.0
    %775 = vmatprep.subr.mxu0 0.0
    %776 = vmatpush1.msra.mxu0 0.0
    %777 = vmatprep.subr.mxu0 0.0
    %778 = vmatpush1.msra.mxu0 0.0
    %779 = vmatprep.subr.mxu0 0.0
    %780 = vmatpush1.msra.mxu0 0.0
    %781 = vmatprep.subr.mxu0 0.0
    %782 = vmatpush1.msra.mxu0 0.0
    %783 = vmatprep.subr.mxu0 0.0
    %784 = vmatpush1.msra.mxu0 0.0
    %785 = vmatprep.subr.mxu0 0.0
    %786 = vmatpush1.msra.mxu0 0.0
    %787 = vmatprep.subr.mxu0 0.0
    %788 = vmatpush1.msra.mxu0 0.0
    %789 = vmatprep.subr.mxu0 0.0
    %790 = vmatpush1.msra.mxu0 %v488
    %791 = vmatprep.subr.mxu0 0.0
    %792 = vmatpush1.msra.mxu0 %v485
    %793 = vmatprep.subr.mxu0 0.0
    %794 = vmatpush1.msra.mxu0 %v482
    %795 = vmatprep.subr.mxu0 0.0
    %796 = vmatpush1.msra.mxu0 %v479
    %797 = vmatprep.subr.mxu0 0.0
    %798 = vmatpush2.msra.mxu0 0.0
    %799 = vmatprep.subr.mxu0 0.0
    %800 = vmatpush2.msra.mxu0 0.0
    %801 = vmatprep.subr.mxu0 0.0
    %802 = vmatpush2.msra.mxu0 0.0
    %803 = vmatprep.subr.mxu0 0.0
    %804 = vmatpush2.msra.mxu0 0.0
    %805 = vmatprep.subr.mxu0 0.0
    %806 = vmatpush2.msra.mxu0 0.0
    %807 = vmatprep.subr.mxu0 0.0
    %808 = vmatpush2.msra.mxu0 0.0
    %809 = vmatprep.subr.mxu0 0.0
    %810 = vmatpush2.msra.mxu0 0.0
    %811 = vmatprep.subr.mxu0 0.0
    %812 = vmatpush2.msra.mxu0 0.0
    %813 = vmatprep.subr.mxu0 0.0
    %814 = vmatpush2.msra.mxu0 0.0
    %815 = vmatprep.subr.mxu0 0.0
    %816 = vmatpush2.msra.mxu0 0.0
    %817 = vmatprep.subr.mxu0 0.0
    %818 = vmatpush2.msra.mxu0 0.0
    %819 = vmatprep.subr.mxu0 0.0
    %820 = vmatpush2.msra.mxu0 0.0
    %821 = vmatprep.subr.mxu0 0.0
    %822 = vmatpush2.msra.mxu0 0.0
    %823 = vmatprep.subr.mxu0 0.0
    %824 = vmatpush2.msra.mxu0 0.0
    %825 = vmatprep.subr.mxu0 0.0
    %826 = vmatpush2.msra.mxu0 0.0
    %827 = vmatprep.subr.mxu0 0.0
    %828 = vmatpush2.msra.mxu0 0.0
    %829 = vmatprep.mubr.f32.mxu0 0.0
    %830 = vmatmul.mubr.f32.gmra.mxu0 %v674
    %v831 = vpop.f32.mrf.mxu0
    %v832 = vadd.f32 %v660, %v831
    %v833 = vpop.f32.mrf.mxu0
    %834 = vmatprep.mubr.f32.mxu0 0.0
    %835 = vmatmul.mubr.f32.gmra.mxu0 %v677
    %v836 = vpop.f32.mrf.mxu0
    %v837 = vadd.f32 %v665, %v836
    %v838 = vpop.f32.mrf.mxu0
    %839 = vmatprep.mubr.f32.mxu0 0.0
    %840 = vmatmul.mubr.f32.gmra.mxu0 %v680
    %v841 = vpop.f32.mrf.mxu0
    %v842 = vadd.f32 %v670, %v841
    %v843 = vpop.f32.mrf.mxu0
    %844 = vdwg.mxu0
    %v845 = vld [vmem:[#allocation13] sm:$0xff]
    %v846 = vld [vmem:[#allocation13 + $0x8] sm:$0xff]
    %v847 = vld [vmem:[#allocation13 + $0x10] sm:$0xff]
    %v848 = vld [vmem:[#allocation13 + $0x18] sm:$0xff]
    %v849 = vld [vmem:[#allocation13 + $0x20] sm:$0xff]
    %v850 = vld [vmem:[#allocation13 + $0x28] sm:$0xff]
    %v851 = vld [vmem:[#allocation13 + $0x30] sm:$0xff]
    %v852 = vld [vmem:[#allocation13 + $0x38] sm:$0xff]
    %v853 = vld [vmem:[#allocation13 + $0x40] sm:$0xff]
    %v854 = vld [vmem:[#allocation13 + $0x48] sm:$0xff]
    %v855 = vld [vmem:[#allocation13 + $0x50] sm:$0xff]
    %v856 = vld [vmem:[#allocation13 + $0x58] sm:$0xff]
    %v858 = vsel %vm298, %v274, 0
    %v861 = vsel %vm298, %v279, 0
    %v864 = vsel %vm298, %v284, 0
    %866 = vmatprep.subr.mxu0 0.0
    %867 = vmatpush1.msra.mxu0 0.0
    %868 = vmatprep.subr.mxu0 0.0
    %869 = vmatpush1.msra.mxu0 0.0
    %870 = vmatprep.subr.mxu0 0.0
    %871 = vmatpush1.msra.mxu0 0.0
    %872 = vmatprep.subr.mxu0 0.0
    %873 = vmatpush1.msra.mxu0 0.0
    %874 = vmatprep.subr.mxu0 0.0
    %875 = vmatpush1.msra.mxu0 0.0
    %876 = vmatprep.subr.mxu0 0.0
    %877 = vmatpush1.msra.mxu0 0.0
    %878 = vmatprep.subr.mxu0 0.0
    %879 = vmatpush1.msra.mxu0 0.0
    %880 = vmatprep.subr.mxu0 0.0
    %881 = vmatpush1.msra.mxu0 0.0
    %882 = vmatprep.subr.mxu0 0.0
    %883 = vmatpush1.msra.mxu0 0.0
    %884 = vmatprep.subr.mxu0 0.0
    %885 = vmatpush1.msra.mxu0 0.0
    %886 = vmatprep.subr.mxu0 0.0
    %887 = vmatpush1.msra.mxu0 0.0
    %888 = vmatprep.subr.mxu0 0.0
    %889 = vmatpush1.msra.mxu0 0.0
    %890 = vmatprep.subr.mxu0 %v855
    %891 = vmatpush1.msra.mxu0 %v854
    %892 = vmatprep.subr.mxu0 %v852
    %893 = vmatpush1.msra.mxu0 %v851
    %894 = vmatprep.subr.mxu0 %v849
    %895 = vmatpush1.msra.mxu0 %v848
    %896 = vmatprep.subr.mxu0 %v846
    %897 = vmatpush1.msra.mxu0 %v845
    %898 = vmatprep.subr.mxu0 0.0
    %899 = vmatpush2.msra.mxu0 0.0
    %900 = vmatprep.subr.mxu0 0.0
    %901 = vmatpush2.msra.mxu0 0.0
    %902 = vmatprep.subr.mxu0 0.0
    %903 = vmatpush2.msra.mxu0 0.0
    %904 = vmatprep.subr.mxu0 0.0
    %905 = vmatpush2.msra.mxu0 0.0
    %906 = vmatprep.subr.mxu0 0.0
    %907 = vmatpush2.msra.mxu0 0.0
    %908 = vmatprep.subr.mxu0 0.0
    %909 = vmatpush2.msra.mxu0 0.0
    %910 = vmatprep.subr.mxu0 0.0
    %911 = vmatpush2.msra.mxu0 0.0
    %912 = vmatprep.subr.mxu0 0.0
    %913 = vmatpush2.msra.mxu0 0.0
    %914 = vmatprep.subr.mxu0 0.0
    %915 = vmatpush2.msra.mxu0 0.0
    %916 = vmatprep.subr.mxu0 0.0
    %917 = vmatpush2.msra.mxu0 0.0
    %918 = vmatprep.subr.mxu0 0.0
    %919 = vmatpush2.msra.mxu0 0.0
    %920 = vmatprep.subr.mxu0 0.0
    %921 = vmatpush2.msra.mxu0 0.0
    %922 = vmatprep.subr.mxu0 0.0
    %923 = vmatpush2.msra.mxu0 0.0
    %924 = vmatprep.subr.mxu0 0.0
    %925 = vmatpush2.msra.mxu0 0.0
    %926 = vmatprep.subr.mxu0 0.0
    %927 = vmatpush2.msra.mxu0 0.0
    %928 = vmatprep.subr.mxu0 0.0
    %929 = vmatpush2.msra.mxu0 0.0
    %930 = vmatprep.mubr.f32.mxu0 0.0
    %931 = vmatmul.mubr.f32.gmra.mxu0 %v858
    %v932 = vpop.f32.mrf.mxu0
    %v933 = vadd.f32 0.0, %v932
    %v934 = vpop.f32.mrf.mxu0
    %v935 = vadd.f32 0.0, %v934
    %936 = vmatprep.mubr.f32.mxu0 0.0
    %937 = vmatmul.mubr.f32.gmra.mxu0 %v861
    %v938 = vpop.f32.mrf.mxu0
    %v939 = vadd.f32 0.0, %v938
    %v940 = vpop.f32.mrf.mxu0
    %v941 = vadd.f32 0.0, %v940
    %942 = vmatprep.mubr.f32.mxu0 0.0
    %943 = vmatmul.mubr.f32.gmra.mxu0 %v864
    %v944 = vpop.f32.mrf.mxu0
    %v945 = vadd.f32 0.0, %v944
    %v946 = vpop.f32.mrf.mxu0
    %v947 = vadd.f32 0.0, %v946
    %948 = vdwg.mxu0
    %949 = vmatprep.subr.mxu0 0.0
    %950 = vmatpush1.msra.mxu0 0.0
    %951 = vmatprep.subr.mxu0 0.0
    %952 = vmatpush1.msra.mxu0 0.0
    %953 = vmatprep.subr.mxu0 0.0
    %954 = vmatpush1.msra.mxu0 0.0
    %955 = vmatprep.subr.mxu0 0.0
    %956 = vmatpush1.msra.mxu0 0.0
    %957 = vmatprep.subr.mxu0 0.0
    %958 = vmatpush1.msra.mxu0 0.0
    %959 = vmatprep.subr.mxu0 0.0
    %960 = vmatpush1.msra.mxu0 0.0
    %961 = vmatprep.subr.mxu0 0.0
    %962 = vmatpush1.msra.mxu0 0.0
    %963 = vmatprep.subr.mxu0 0.0
    %964 = vmatpush1.msra.mxu0 0.0
    %965 = vmatprep.subr.mxu0 0.0
    %966 = vmatpush1.msra.mxu0 0.0
    %967 = vmatprep.subr.mxu0 0.0
    %968 = vmatpush1.msra.mxu0 0.0
    %969 = vmatprep.subr.mxu0 0.0
    %970 = vmatpush1.msra.mxu0 0.0
    %971 = vmatprep.subr.mxu0 0.0
    %972 = vmatpush1.msra.mxu0 0.0
    %973 = vmatprep.subr.mxu0 0.0
    %974 = vmatpush1.msra.mxu0 %v856
    %975 = vmatprep.subr.mxu0 0.0
    %976 = vmatpush1.msra.mxu0 %v853
    %977 = vmatprep.subr.mxu0 0.0
    %978 = vmatpush1.msra.mxu0 %v850
    %979 = vmatprep.subr.mxu0 0.0
    %980 = vmatpush1.msra.mxu0 %v847
    %981 = vmatprep.subr.mxu0 0.0
    %982 = vmatpush2.msra.mxu0 0.0
    %983 = vmatprep.subr.mxu0 0.0
    %984 = vmatpush2.msra.mxu0 0.0
    %985 = vmatprep.subr.mxu0 0.0
    %986 = vmatpush2.msra.mxu0 0.0
    %987 = vmatprep.subr.mxu0 0.0
    %988 = vmatpush2.msra.mxu0 0.0
    %989 = vmatprep.subr.mxu0 0.0
    %990 = vmatpush2.msra.mxu0 0.0
    %991 = vmatprep.subr.mxu0 0.0
    %992 = vmatpush2.msra.mxu0 0.0
    %993 = vmatprep.subr.mxu0 0.0
    %994 = vmatpush2.msra.mxu0 0.0
    %995 = vmatprep.subr.mxu0 0.0
    %996 = vmatpush2.msra.mxu0 0.0
    %997 = vmatprep.subr.mxu0 0.0
    %998 = vmatpush2.msra.mxu0 0.0
    %999 = vmatprep.subr.mxu0 0.0
    %1000 = vmatpush2.msra.mxu0 0.0
    %1001 = vmatprep.subr.mxu0 0.0
    %1002 = vmatpush2.msra.mxu0 0.0
    %1003 = vmatprep.subr.mxu0 0.0
    %1004 = vmatpush2.msra.mxu0 0.0
    %1005 = vmatprep.subr.mxu0 0.0
    %1006 = vmatpush2.msra.mxu0 0.0
    %1007 = vmatprep.subr.mxu0 0.0
    %1008 = vmatpush2.msra.mxu0 0.0
    %1009 = vmatprep.subr.mxu0 0.0
    %1010 = vmatpush2.msra.mxu0 0.0
    %1011 = vmatprep.subr.mxu0 0.0
    %1012 = vmatpush2.msra.mxu0 0.0
    %1013 = vmatprep.mubr.f32.mxu0 0.0
    %1014 = vmatmul.mubr.f32.gmra.mxu0 %v858
    %v1015 = vpop.f32.mrf.mxu0
    %v1016 = vadd.f32 0.0, %v1015
    %v1017 = vpop.f32.mrf.mxu0
    %1018 = vmatprep.mubr.f32.mxu0 0.0
    %1019 = vmatmul.mubr.f32.gmra.mxu0 %v861
    %v1020 = vpop.f32.mrf.mxu0
    %v1021 = vadd.f32 0.0, %v1020
    %v1022 = vpop.f32.mrf.mxu0
    %1023 = vmatprep.mubr.f32.mxu0 0.0
    %1024 = vmatmul.mubr.f32.gmra.mxu0 %v864
    %v1025 = vpop.f32.mrf.mxu0
    %v1026 = vadd.f32 0.0, %v1025
    %v1027 = vpop.f32.mrf.mxu0
    %1028 = vdwg.mxu0
    %v1029 = vadd.f32 %v749, %v933
    %v1030 = vadd.f32 %v751, %v935
    %v1031 = vadd.f32 %v832, %v1016
    %v1032 = vadd.f32 %v755, %v939
    %v1033 = vadd.f32 %v757, %v941
    %v1034 = vadd.f32 %v837, %v1021
    %v1035 = vadd.f32 %v761, %v945
    %v1036 = vadd.f32 %v763, %v947
    %v1037 = vadd.f32 %v842, %v1026
    %v1038 = vld [vmem:[%s9] sm:$0x7]
    %v1040 = vlaneseq
    %v1041 = vshrl.u32 %v1040, 7
    %v1042 = vsub.s32 0, %v1041
    %v1043 = vrot.slane %v1038, %v1042
    %v1044 = vlaneseq
    %v1045 = vshrl.u32 %v1044, 7
    %v1046 = vsub.s32 1, %v1045
    %v1047 = vrot.slane %v1038, %v1046
    %v1048 = vlaneseq
    %v1049 = vshrl.u32 %v1048, 7
    %v1050 = vsub.s32 2, %v1049
    %v1051 = vrot.slane %v1038, %v1050
    %v1055 = vadd.f32 %v1029, %v1043
    %v1056 = vadd.f32 %v1030, %v1047
    %v1057 = vadd.f32 %v1031, %v1051
    %v1058 = vadd.f32 %v1032, %v1043
    %v1059 = vadd.f32 %v1033, %v1047
    %v1060 = vadd.f32 %v1034, %v1051
    %v1061 = vadd.f32 %v1035, %v1043
    %v1062 = vadd.f32 %v1036, %v1047
    %v1063 = vadd.f32 %v1037, %v1051
    %v1064 = vtanh.pop %v1055
    %v1065 = vtanh.pop %v1056
    %v1066 = vtanh.pop %v1057
    %v1067 = vtanh.pop %v1058
    %v1068 = vtanh.pop %v1059
    %v1069 = vtanh.pop %v1060
    %v1070 = vtanh.pop %v1061
    %v1071 = vtanh.pop %v1062
    %v1072 = vtanh.pop %v1063
    %v1073 = vadd.f32 %v274, %v1064
    %v1074 = vadd.f32 %v279, %v1067
    %v1075 = vadd.f32 %v284, %v1070
    %v1076 = vadd.f32 %v163, %v1065
    %v1077 = vadd.f32 %v164, %v1068
    %v1078 = vadd.f32 %v165, %v1071
    %v1079 = vadd.f32 %v166, %v1066
    %v1080 = vadd.f32 %v167, %v1069
    %v1081 = vadd.f32 %v168, %v1072
    %v1082 = vld [vmem:[#allocation14] sm:$0xff]
    %v1083 = vld [vmem:[#allocation14 + $0x8] sm:$0xff]
    %v1084 = vld [vmem:[#allocation14 + $0x10] sm:$0xff]
    %v1085 = vld [vmem:[#allocation14 + $0x18] sm:$0xff]
    %v1086 = vld [vmem:[#allocation16] sm:$0xff]
    %v1087 = vld [vmem:[#allocation16 + $0x8] sm:$0xff]
    %v1088 = vld [vmem:[#allocation16 + $0x10] sm:$0xff]
    %v1089 = vld [vmem:[#allocation16 + $0x18] sm:$0xff]
    %v1091 = vsel %vm298, %v1079, 0
    %v1094 = vsel %vm298, %v1080, 0
    %v1097 = vsel %vm298, %v1081, 0
    %1099 = vmatprep.subr.mxu0 0.0
    %1100 = vmatpush1.msra.mxu0 0.0
    %1101 = vmatprep.subr.mxu0 0.0
    %1102 = vmatpush1.msra.mxu0 0.0
    %1103 = vmatprep.subr.mxu0 0.0
    %1104 = vmatpush1.msra.mxu0 0.0
    %1105 = vmatprep.subr.mxu0 0.0
    %1106 = vmatpush1.msra.mxu0 0.0
    %1107 = vmatprep.subr.mxu0 0.0
    %1108 = vmatpush1.msra.mxu0 0.0
    %1109 = vmatprep.subr.mxu0 0.0
    %1110 = vmatpush1.msra.mxu0 0.0
    %1111 = vmatprep.subr.mxu0 0.0
    %1112 = vmatpush1.msra.mxu0 0.0
    %1113 = vmatprep.subr.mxu0 0.0
    %1114 = vmatpush1.msra.mxu0 0.0
    %1115 = vmatprep.subr.mxu0 0.0
    %1116 = vmatpush1.msra.mxu0 0.0
    %1117 = vmatprep.subr.mxu0 0.0
    %1118 = vmatpush1.msra.mxu0 0.0
    %1119 = vmatprep.subr.mxu0 0.0
    %1120 = vmatpush1.msra.mxu0 0.0
    %1121 = vmatprep.subr.mxu0 0.0
    %1122 = vmatpush1.msra.mxu0 0.0
    %1123 = vmatprep.subr.mxu0 0.0
    %1124 = vmatpush1.msra.mxu0 %v1089
    %1125 = vmatprep.subr.mxu0 0.0
    %1126 = vmatpush1.msra.mxu0 %v1088
    %1127 = vmatprep.subr.mxu0 0.0
    %1128 = vmatpush1.msra.mxu0 %v1087
    %1129 = vmatprep.subr.mxu0 0.0
    %1130 = vmatpush1.msra.mxu0 %v1086
    %1131 = vmatprep.subr.mxu0 0.0
    %1132 = vmatpush2.msra.mxu0 0.0
    %1133 = vmatprep.subr.mxu0 0.0
    %1134 = vmatpush2.msra.mxu0 0.0
    %1135 = vmatprep.subr.mxu0 0.0
    %1136 = vmatpush2.msra.mxu0 0.0
    %1137 = vmatprep.subr.mxu0 0.0
    %1138 = vmatpush2.msra.mxu0 0.0
    %1139 = vmatprep.subr.mxu0 0.0
    %1140 = vmatpush2.msra.mxu0 0.0
    %1141 = vmatprep.subr.mxu0 0.0
    %1142 = vmatpush2.msra.mxu0 0.0
    %1143 = vmatprep.subr.mxu0 0.0
    %1144 = vmatpush2.msra.mxu0 0.0
    %1145 = vmatprep.subr.mxu0 0.0
    %1146 = vmatpush2.msra.mxu0 0.0
    %1147 = vmatprep.subr.mxu0 0.0
    %1148 = vmatpush2.msra.mxu0 0.0
    %1149 = vmatprep.subr.mxu0 0.0
    %1150 = vmatpush2.msra.mxu0 0.0
    %1151 = vmatprep.subr.mxu0 0.0
    %1152 = vmatpush2.msra.mxu0 0.0
    %1153 = vmatprep.subr.mxu0 0.0
    %1154 = vmatpush2.msra.mxu0 0.0
    %1155 = vmatprep.subr.mxu0 0.0
    %1156 = vmatpush2.msra.mxu0 0.0
    %1157 = vmatprep.subr.mxu0 0.0
    %1158 = vmatpush2.msra.mxu0 0.0
    %1159 = vmatprep.subr.mxu0 0.0
    %1160 = vmatpush2.msra.mxu0 0.0
    %1161 = vmatprep.subr.mxu0 0.0
    %1162 = vmatpush2.msra.mxu0 0.0
    %1163 = vmatprep.mubr.f32.mxu0 0.0
    %1164 = vmatmul.mubr.f32.gmra.mxu0 %v1091
    %v1165 = vpop.f32.mrf.mxu0
    %v1166 = vadd.f32 0.0, %v1165
    %v1167 = vpop.f32.mrf.mxu0
    %1168 = vmatprep.mubr.f32.mxu0 0.0
    %1169 = vmatmul.mubr.f32.gmra.mxu0 %v1094
    %v1170 = vpop.f32.mrf.mxu0
    %v1171 = vadd.f32 0.0, %v1170
    %v1172 = vpop.f32.mrf.mxu0
    %1173 = vmatprep.mubr.f32.mxu0 0.0
    %1174 = vmatmul.mubr.f32.gmra.mxu0 %v1097
    %v1175 = vpop.f32.mrf.mxu0
    %v1176 = vadd.f32 0.0, %v1175
    %v1177 = vpop.f32.mrf.mxu0
    %1178 = vdwg.mxu0
    %v1180 = vsel %vm298, %v1076, 0
    %v1183 = vsel %vm298, %v1077, 0
    %v1186 = vsel %vm298, %v1078, 0
    %1188 = vmatprep.subr.mxu0 0.0
    %1189 = vmatpush1.msra.mxu0 0.0
    %1190 = vmatprep.subr.mxu0 0.0
    %1191 = vmatpush1.msra.mxu0 0.0
    %1192 = vmatprep.subr.mxu0 0.0
    %1193 = vmatpush1.msra.mxu0 0.0
    %1194 = vmatprep.subr.mxu0 0.0
    %1195 = vmatpush1.msra.mxu0 0.0
    %1196 = vmatprep.subr.mxu0 0.0
    %1197 = vmatpush1.msra.mxu0 0.0
    %1198 = vmatprep.subr.mxu0 0.0
    %1199 = vmatpush1.msra.mxu0 0.0
    %1200 = vmatprep.subr.mxu0 0.0
    %1201 = vmatpush1.msra.mxu0 0.0
    %1202 = vmatprep.subr.mxu0 0.0
    %1203 = vmatpush1.msra.mxu0 0.0
    %1204 = vmatprep.subr.mxu0 0.0
    %1205 = vmatpush1.msra.mxu0 0.0
    %1206 = vmatprep.subr.mxu0 0.0
    %1207 = vmatpush1.msra.mxu0 0.0
    %1208 = vmatprep.subr.mxu0 0.0
    %1209 = vmatpush1.msra.mxu0 0.0
    %1210 = vmatprep.subr.mxu0 0.0
    %1211 = vmatpush1.msra.mxu0 0.0
    %1212 = vmatprep.subr.mxu0 0.0
    %1213 = vmatpush1.msra.mxu0 %v1085
    %1214 = vmatprep.subr.mxu0 0.0
    %1215 = vmatpush1.msra.mxu0 %v1084
    %1216 = vmatprep.subr.mxu0 0.0
    %1217 = vmatpush1.msra.mxu0 %v1083
    %1218 = vmatprep.subr.mxu0 0.0
    %1219 = vmatpush1.msra.mxu0 %v1082
    %1220 = vmatprep.subr.mxu0 0.0
    %1221 = vmatpush2.msra.mxu0 0.0
    %1222 = vmatprep.subr.mxu0 0.0
    %1223 = vmatpush2.msra.mxu0 0.0
    %1224 = vmatprep.subr.mxu0 0.0
    %1225 = vmatpush2.msra.mxu0 0.0
    %1226 = vmatprep.subr.mxu0 0.0
    %1227 = vmatpush2.msra.mxu0 0.0
    %1228 = vmatprep.subr.mxu0 0.0
    %1229 = vmatpush2.msra.mxu0 0.0
    %1230 = vmatprep.subr.mxu0 0.0
    %1231 = vmatpush2.msra.mxu0 0.0
    %1232 = vmatprep.subr.mxu0 0.0
    %1233 = vmatpush2.msra.mxu0 0.0
    %1234 = vmatprep.subr.mxu0 0.0
    %1235 = vmatpush2.msra.mxu0 0.0
    %1236 = vmatprep.subr.mxu0 0.0
    %1237 = vmatpush2.msra.mxu0 0.0
    %1238 = vmatprep.subr.mxu0 0.0
    %1239 = vmatpush2.msra.mxu0 0.0
    %1240 = vmatprep.subr.mxu0 0.0
    %1241 = vmatpush2.msra.mxu0 0.0
    %1242 = vmatprep.subr.mxu0 0.0
    %1243 = vmatpush2.msra.mxu0 0.0
    %1244 = vmatprep.subr.mxu0 0.0
    %1245 = vmatpush2.msra.mxu0 0.0
    %1246 = vmatprep.subr.mxu0 0.0
    %1247 = vmatpush2.msra.mxu0 0.0
    %1248 = vmatprep.subr.mxu0 0.0
    %1249 = vmatpush2.msra.mxu0 0.0
    %1250 = vmatprep.subr.mxu0 0.0
    %1251 = vmatpush2.msra.mxu0 0.0
    %1252 = vmatprep.mubr.f32.mxu0 0.0
    %1253 = vmatmul.mubr.f32.gmra.mxu0 %v1180
    %v1254 = vpop.f32.mrf.mxu0
    %v1255 = vadd.f32 %v1166, %v1254
    %v1256 = vpop.f32.mrf.mxu0
    %1257 = vmatprep.mubr.f32.mxu0 0.0
    %1258 = vmatmul.mubr.f32.gmra.mxu0 %v1183
    %v1259 = vpop.f32.mrf.mxu0
    %v1260 = vadd.f32 %v1171, %v1259
    %v1261 = vpop.f32.mrf.mxu0
    %1262 = vmatprep.mubr.f32.mxu0 0.0
    %1263 = vmatmul.mubr.f32.gmra.mxu0 %v1186
    %v1264 = vpop.f32.mrf.mxu0
    %v1265 = vadd.f32 %v1176, %v1264
    %v1266 = vpop.f32.mrf.mxu0
    %1267 = vdwg.mxu0
    %v1268 = vld [vmem:[%s12] sm:$0x1]
    %v1270 = vlaneseq
    %v1271 = vshrl.u32 %v1270, 7
    %v1272 = vsub.s32 0, %v1271
    %v1273 = vrot.slane %v1268, %v1272
    %v1275 = vadd.f32 %v1255, %v1273
    %v1276 = vadd.f32 %v1260, %v1273
    %v1277 = vadd.f32 %v1265, %v1273
    %v1278 = vtanh.pop %v1275
    %v1279 = vtanh.pop %v1276
    %v1280 = vtanh.pop %v1277
    %v1281 = vmul.f32 %v1073, %v1278
    %v1282 = vmul.f32 %v1074, %v1279
    %v1283 = vmul.f32 %v1075, %v1280
    %v1284 = vsel %vm298, %v1281, 0.0
    %1285 = vadd.xlane.f32.xlu0 %v1284
    %v1286 = vpop.xlane.xlu0 %1285
    %v1287 = vsel %vm298, %v1282, 0.0
    %1288 = vadd.xlane.f32.xlu0 %v1287
    %v1289 = vpop.xlane.xlu0 %1288
    %v1290 = vsel %vm298, %v1283, 0.0
    %1291 = vadd.xlane.f32.xlu0 %v1290
    %v1292 = vpop.xlane.xlu0 %1291
    %v1296 = vlaneseq
    %v1297 = vshrl.u32 %v1296, 7
    %v1298 = vsub.s32 %v173, %v1297
    %v1299 = vrot.slane %v1286, %v1298
    %v1300 = vadd.s32 %v173, 4294967288
    %v1301 = vlaneseq
    %v1302 = vshrl.u32 %v1301, 7
    %v1303 = vsub.s32 %v1300, %v1302
    %v1304 = vrot.slane %v1289, %v1303
    %vm1305 = vcmask 130112
    %v1306 = vsel %vm1305, %v1304, %v1299
    %v1307 = vadd.s32 %v173, 4294967280
    %v1308 = vlaneseq
    %v1309 = vshrl.u32 %v1308, 7
    %v1310 = vsub.s32 %v1307, %v1309
    %v1311 = vrot.slane %v1292, %v1310
    %vm1312 = vcmask 195712
    %v1313 = vsel %vm1312, %v1311, %v1306
    %vm1315 = vcmask 188416
    %1316 = vst.msk [vmem:[#allocation17] sm:$0x1] %vm1315, %v1313
    // Predicated region
    $region90: #{tpu_custom_call.1} parent=1 // pred_check
      _
    $region91: #{tpu_custom_call.1} parent=1 // pred_check_branch
      %1318 = sbr.rel (0) target = $region93
    $region92: #{tpu_custom_call.1} parent=1 // pred_region
      %s1320 = ssub.s32 16, 16
      %1321 = vsyncadd [#allocation4], %s1320
      %s1323 = sshll.u32 [#allocation17], 4
      %s1324 = int_to_ptr.vmem [resolvable:$true] %s1323
      %1326 = dma.vmem_to_hbm [thread:$0]  %s1324, 16, %s13, [#allocation4]
    $region93: #{tpu_custom_call.1} parent=1 // pred_fallthru
      _
    // Predicated region
    $region94: #{tpu_custom_call.1} parent=1 // pred_check
      _
    $region95: #{tpu_custom_call.1} parent=1 // pred_check_branch
      %1328 = sbr.rel (0) target = $region97
    $region96: #{tpu_custom_call.1} parent=1 // pred_region
      %1329 = dma.done [#allocation4], 16
    $region97: #{tpu_custom_call.1} parent=1 // pred_fallthru
      _
    %1330 = vsyncpa [#allocation3], 1
    %1331 = vsyncpa [#allocation6], 1
    %1332 = vsyncpa [#allocation9], 1
    %1333 = vsyncpa [#allocation12], 1
    %1334 = vsyncpa [#allocation15], 1
    %1335 = vsyncpa [#allocation4], 1

</llo_original>
